<compile_context>
chip_gen: v6e
topology: v6e:2x2x1
jax: 0.10.0
libtpu: 0.0.40
codegen_flags: <defaults>
</compile_context>

<pallas_src>
import jax
import jax.numpy as jnp
from jax.experimental import pallas as pl
from jax.experimental.pallas import tpu as pltpu

DIM_HEAD = 64
NUM_HEADS = 16
HIDDEN = 1024                      # = DIM_HEAD * NUM_HEADS, required by forward
DROPOUT_P = 0.1                    # module attribute; unused in forward
SCALE = DIM_HEAD ** (-0.5)


def _fused_attn_kernel(x_ref, bqk_ref, wqk_ref, v_ref, o_ref):
    """Single-step fused forward:
       s = x @ W_qk + b_qk  (already scaled);  p = softmax(s);  o = p @ value.
    All operands are VMEM-resident (grid=(1,))."""
    # Scaled logits (bf16 inputs, f32 MXU accumulation).
    s = jnp.dot(x_ref[...], wqk_ref[...],
                preferred_element_type=jnp.float32) + bqk_ref[...]

    # Plain (non-online) softmax over the full 1024-wide row.
    m = jnp.max(s, axis=-1, keepdims=True)
    p = jnp.exp(s - m)
    l = jnp.sum(p, axis=-1, keepdims=True)

    acc = jnp.dot(p.astype(v_ref.dtype), v_ref[...],
                  preferred_element_type=jnp.float32)
    o_ref[...] = (acc / l).astype(o_ref.dtype)


def model_forward(x1, w_qk_bf16, b_qk_f32, value_bf16):
    """x1: (B, 1024) f32; w_qk_bf16: (1024, 1024) bf16 fused+scaled weight;
    b_qk_f32: (1, 1024) f32 fused+scaled bias; value_bf16: (1024, 1024) bf16."""
    B, F = x1.shape
    H = w_qk_bf16.shape[1]
    V = value_bf16.shape[1]
    assert value_bf16.shape[0] == H and b_qk_f32.shape == (1, H)

    x_bf16 = x1.astype(jnp.bfloat16)

    cost = pl.CostEstimate(
        flops=2 * B * F * H + 2 * B * H * V,
        transcendentals=B * H,
        bytes_accessed=(x_bf16.size * 2 + w_qk_bf16.size * 2
                        + b_qk_f32.size * 4 + value_bf16.size * 2 + B * V * 4),
    )

    return pl.pallas_call(
        _fused_attn_kernel,
        out_shape=jax.ShapeDtypeStruct((B, V), jnp.float32),
        grid=(1,),
        in_specs=[
            pl.BlockSpec((B, F), lambda i: (0, 0)),   # x (whole array)
            pl.BlockSpec((1, H), lambda i: (0, 0)),   # fused bias (whole array)
            pl.BlockSpec((F, H), lambda i: (0, 0)),   # fused weight, contiguous slab
            pl.BlockSpec((H, V), lambda i: (0, 0)),   # value, contiguous slab
        ],
        out_specs=pl.BlockSpec((B, V), lambda i: (0, 0)),
        compiler_params=pltpu.CompilerParams(
            dimension_semantics=("arbitrary",),
            vmem_limit_bytes=16 << 20,   # ~8.5 MiB actually used; safe everywhere
        ),
        cost_estimate=cost,
    )(x_bf16, b_qk_f32, w_qk_bf16, value_bf16)


def _torch_linear_init(key, fan_in, fan_out):
    """Deterministic init mimicking torch.nn.Linear (uniform +-1/sqrt(fan_in))."""
    kw, kb = jax.random.split(key)
    bound = 1.0 / (fan_in ** 0.5)
    w = jax.random.uniform(kw, (fan_out, fan_in), jnp.float32, -bound, bound)
    b = jax.random.uniform(kb, (fan_out,), jnp.float32, -bound, bound)
    return w, b


if __name__ == "__main__":
    root = jax.random.PRNGKey(0)
    k_x, k_q, k_k, k_v = jax.random.split(root, 4)

    # module-level input and "value" tensor (deterministic)
    x1 = jax.random.normal(k_x, (1, HIDDEN), jnp.float32)
    value = jax.random.normal(k_v, (HIDDEN, HIDDEN), jnp.float32)

    # Linear(1024, dim_head * num_heads) parameters
    wq, bq = _torch_linear_init(k_q, HIDDEN, DIM_HEAD * NUM_HEADS)
    wk, bk = _torch_linear_init(k_k, HIDDEN, DIM_HEAD * NUM_HEADS)

    # One-time host-side fusion of the two chained Linears + softmax scale,
    # cast to bf16 for the bandwidth-bound kernel (f32 accumulation inside).
    w_qk = ((wq.T @ wk.T) * SCALE).astype(jnp.bfloat16)          # (1024, 1024)
    b_qk = (((bq @ wk.T) + bk) * SCALE).reshape(1, -1)           # (1, 1024) f32
    value_bf16 = value.astype(jnp.bfloat16)

    out = model_forward(x1, w_qk, b_qk, value_bf16)
    out = jax.block_until_ready(out)

    # full-precision reference of the original (unfused) forward
    q_ref = x1 @ wq.T + bq
    qk_ref = q_ref @ wk.T + bk
    p_ref = jax.nn.softmax(qk_ref * SCALE, axis=-1)
    ref = p_ref @ value

    assert out.shape == (1, HIDDEN)
    # Tolerance relaxed for bf16 weights/inputs (f32 accumulation); observed
    # error is well below these bounds relative to output magnitude ~0.03.
    assert jnp.allclose(out, ref, atol=3e-3, rtol=3e-2), (
        float(jnp.max(jnp.abs(out - ref))))

    print("KERNEL_OK")
</pallas_src>

<mosaic_0001>
module attributes {stable_mosaic.version = 11 : i64} {
  func.func @_fused_attn_kernel(%arg0: i32, %arg1: memref<1x1024xbf16, #tpu.memory_space<vmem>>, %arg2: memref<1x1024xf32, #tpu.memory_space<vmem>>, %arg3: memref<1024x1024xbf16, #tpu.memory_space<vmem>>, %arg4: memref<1024x1024xbf16, #tpu.memory_space<vmem>>, %arg5: memref<1x1024xf32, #tpu.memory_space<vmem>>) attributes {dimension_semantics = [#tpu.dimension_semantics<arbitrary>], iteration_bounds = array<i64: 1>, scalar_prefetch = 0 : i64, scratch_operands = 0 : i64, tpu.core_type = #tpu.core_type<tc>, window_params = [{pipeline_mode = #tpu.pipeline_mode<synchronous>, transform_indices = @transform_0, window_bounds = array<i64: 1, 1024>}, {pipeline_mode = #tpu.pipeline_mode<synchronous>, transform_indices = @transform_1, window_bounds = array<i64: 1, 1024>}, {pipeline_mode = #tpu.pipeline_mode<synchronous>, transform_indices = @transform_2, window_bounds = array<i64: 1024, 1024>}, {pipeline_mode = #tpu.pipeline_mode<synchronous>, transform_indices = @transform_3, window_bounds = array<i64: 1024, 1024>}, {pipeline_mode = #tpu.pipeline_mode<synchronous>, transform_indices = @transform_4, window_bounds = array<i64: 1, 1024>}]} {
    %c0 = arith.constant 0 : index
    %c0_0 = arith.constant 0 : index
    %0 = vector.load %arg1[%c0, %c0_0] : memref<1x1024xbf16, #tpu.memory_space<vmem>>, vector<1x1024xbf16>
    %c0_1 = arith.constant 0 : index
    %c0_2 = arith.constant 0 : index
    %1 = vector.load %arg3[%c0_1, %c0_2] : memref<1024x1024xbf16, #tpu.memory_space<vmem>>, vector<1024x1024xbf16>
    %cst = arith.constant dense<0.000000e+00> : vector<1x1024xf32>
    %2 = tpu.matmul %0, %1, %cst {dimension_numbers = #tpu.dot_dimension_numbers<[1], [0], [0], [1], [0, 0, 1, 1], [], []>} : vector<1x1024xbf16>, vector<1024x1024xbf16>, vector<1x1024xf32> -> vector<1x1024xf32>
    %c0_3 = arith.constant 0 : index
    %c0_4 = arith.constant 0 : index
    %3 = vector.load %arg2[%c0_3, %c0_4] : memref<1x1024xf32, #tpu.memory_space<vmem>>, vector<1x1024xf32>
    %4 = arith.addf %2, %3 : vector<1x1024xf32>
    %cst_5 = arith.constant dense<0xFF800000> : vector<1xf32>
    %5 = vector.multi_reduction <maximumf>, %4, %cst_5 [1] : vector<1x1024xf32> to vector<1xf32>
    %6 = vector.shape_cast %5 : vector<1xf32> to vector<1x1xf32>
    %7 = vector.broadcast %6 : vector<1x1xf32> to vector<1x1024xf32>
    %8 = arith.subf %4, %7 : vector<1x1024xf32>
    %9 = math.exp %8 : vector<1x1024xf32>
    %cst_6 = arith.constant dense<0.000000e+00> : vector<1xf32>
    %10 = vector.multi_reduction <add>, %9, %cst_6 [1] : vector<1x1024xf32> to vector<1xf32>
    %11 = vector.shape_cast %10 : vector<1xf32> to vector<1x1xf32>
    %12 = arith.truncf %9 : vector<1x1024xf32> to vector<1x1024xbf16>
    %c0_7 = arith.constant 0 : index
    %c0_8 = arith.constant 0 : index
    %13 = vector.load %arg4[%c0_7, %c0_8] : memref<1024x1024xbf16, #tpu.memory_space<vmem>>, vector<1024x1024xbf16>
    %cst_9 = arith.constant dense<0.000000e+00> : vector<1x1024xf32>
    %14 = tpu.matmul %12, %13, %cst_9 {dimension_numbers = #tpu.dot_dimension_numbers<[1], [0], [0], [1], [0, 0, 1, 1], [], []>} : vector<1x1024xbf16>, vector<1024x1024xbf16>, vector<1x1024xf32> -> vector<1x1024xf32>
    %15 = vector.broadcast %11 : vector<1x1xf32> to vector<1x1024xf32>
    %16 = arith.divf %14, %15 : vector<1x1024xf32>
    %c0_10 = arith.constant 0 : index
    %c0_11 = arith.constant 0 : index
    %17 = vector.load %arg5[%c0_10, %c0_11] : memref<1x1024xf32, #tpu.memory_space<vmem>>, vector<1x1024xf32>
    tpu.vector_store %arg5[%c0_10, %c0_11], %16 {strides = array<i32>} : memref<1x1024xf32, #tpu.memory_space<vmem>>, vector<1x1024xf32>,
    return
  }
  func.func @transform_0(%arg0: i32) -> (i32, i32) {
    %c0_i32 = arith.constant 0 : i32
    %c0_i32_0 = arith.constant 0 : i32
    %c0_i32_1 = arith.constant 0 : i32
    return %c0_i32, %c0_i32_0 : i32, i32
  }
  func.func @transform_1(%arg0: i32) -> (i32, i32) {
    %c0_i32 = arith.constant 0 : i32
    %c0_i32_0 = arith.constant 0 : i32
    %c0_i32_1 = arith.constant 0 : i32
    return %c0_i32, %c0_i32_0 : i32, i32
  }
  func.func @transform_2(%arg0: i32) -> (i32, i32) {
    %c0_i32 = arith.constant 0 : i32
    %c0_i32_0 = arith.constant 0 : i32
    %c0_i32_1 = arith.constant 0 : i32
    return %c0_i32, %c0_i32_0 : i32, i32
  }
  func.func @transform_3(%arg0: i32) -> (i32, i32) {
    %c0_i32 = arith.constant 0 : i32
    %c0_i32_0 = arith.constant 0 : i32
    %c0_i32_1 = arith.constant 0 : i32
    return %c0_i32, %c0_i32_0 : i32, i32
  }
  func.func @transform_4(%arg0: i32) -> (i32, i32) {
    %c0_i32 = arith.constant 0 : i32
    %c0_i32_0 = arith.constant 0 : i32
    %c0_i32_1 = arith.constant 0 : i32
    return %c0_i32, %c0_i32_0 : i32, i32
  }
}

</mosaic_0001>

<llo_original>
// kernel: tpu_custom_call.1
$region0: #{tpu_custom_call.1}
  #allocation0 [shape = 'u32[]', space=smem, size = 0x4, offset = 0x4, fixed_abs, tag = 'smem constant byte address 0x4 - core index']
  #allocation1 [shape = 'u32[144,128]{1,0:T(1,128)}', space=vmem, size = 0x12000, scoped, tag = 'internal scratch']
  %s0 = inlined_call_operand.hbm [shape: bf16[1,1024], index: 0, kind: input, shape index: {}]
  %s1 = inlined_call_operand.hbm [shape: f32[1,1024], index: 1, kind: input, shape index: {}]
  %s2 = inlined_call_operand.hbm [shape: bf16[1024,1024], index: 2, kind: input, shape index: {}]
  %s3 = inlined_call_operand.hbm [shape: bf16[1024,1024], index: 3, kind: input, shape index: {}]
  %s4 = inlined_call_operand.hbm [shape: f32[1,1024], index: 4, kind: output, shape index: {}]
  %s5 = sld [smem:[#allocation0]]
  $region42: #{tpu_custom_call.1} parent=0
    _
  %s7 = ssub.s32 1, %s5
  %s8 = scalar_select 0, %s7, %s5
  $region1: #{tpu_custom_call.1} parent=0
    #allocation2 [shape = 'u8[4096]{0}', space=vmem, size = 0x1000, scoped, tag = 'input window, operand 0, single buffered']
    #allocation3 [shape = 's32[1]{0}', space=sflag, size = 0x4, scoped, tag = 'scoped memory for tpu_custom_call.1']
    #allocation4 [shape = 's32[1]{0}', space=sflag, size = 0x4, scoped, tag = 'scoped memory for tpu_custom_call.1']
    #allocation5 [shape = 'u8[4096]{0}', space=vmem, size = 0x1000, scoped, tag = 'input window, operand 1, single buffered']
    #allocation6 [shape = 's32[1]{0}', space=sflag, size = 0x4, scoped, tag = 'scoped memory for tpu_custom_call.1']
    #allocation7 [shape = 'u8[2097152]{0}', space=vmem, size = 0x200000, scoped, tag = 'input window, operand 2, single buffered']
    #allocation8 [shape = 'u8[2097152]{0}', space=vmem, size = 0x200000, scoped, tag = 'input window, operand 3, single buffered']
    #allocation9 [shape = 's32[1]{0}', space=sflag, size = 0x4, scoped, tag = 'scoped memory for tpu_custom_call.1']
    #allocation10 [shape = 'u8[4096]{0}', space=vmem, size = 0x1000, scoped, tag = 'output window, operand 0, single buffered']
    %9 = vsyncpa [#allocation3], 0
    %10 = vsyncpa [#allocation6], 0
    %11 = vsyncpa [#allocation9], 0
    %12 = vsyncpa [#allocation4], 0
    // Predicated region
    $region2: #{tpu_custom_call.1} parent=1 // pred_check
      _
    $region3: #{tpu_custom_call.1} parent=1 // pred_check_branch
      %14 = sbr.rel (0) target = $region5
    $region4: #{tpu_custom_call.1} parent=1 // pred_region
      %s16 = ssub.s32 128, 128
      %17 = vsyncadd [#allocation3], %s16
      %s19 = sshll.u32 [#allocation2], 4
      %s20 = int_to_ptr.vmem [resolvable:$true] %s19
      %22 = dma.hbm_to_vmem [thread:$0]  %s0, 128, %s20, [#allocation3]
    $region5: #{tpu_custom_call.1} parent=1 // pred_fallthru
      _
    // Predicated region
    $region6: #{tpu_custom_call.1} parent=1 // pred_check
      _
    $region7: #{tpu_custom_call.1} parent=1 // pred_check_branch
      %24 = sbr.rel (0) target = $region9
    $region8: #{tpu_custom_call.1} parent=1 // pred_region
      %s26 = ssub.s32 128, 128
      %27 = vsyncadd [#allocation6], %s26
      %s29 = sshll.u32 [#allocation5], 4
      %s30 = int_to_ptr.vmem [resolvable:$true] %s29
      %32 = dma.hbm_to_vmem [thread:$0]  %s1, 128, %s30, [#allocation6]
    $region9: #{tpu_custom_call.1} parent=1 // pred_fallthru
      _
    // Predicated region
    $region10: #{tpu_custom_call.1} parent=1 // pred_check
      _
    $region11: #{tpu_custom_call.1} parent=1 // pred_check_branch
      %34 = sbr.rel (0) target = $region13
    $region12: #{tpu_custom_call.1} parent=1 // pred_region
      %s36 = ssub.s32 65536, 65536
      %37 = vsyncadd [#allocation6], %s36
      %s38 = sshll.u32 [#allocation7], 4
      %s39 = int_to_ptr.vmem [resolvable:$true] %s38
      %44 = dma.hbm_to_vmem [thread:$0]  %s2, 65536, %s39, [#allocation6], 512, 512, 32
    $region13: #{tpu_custom_call.1} parent=1 // pred_fallthru
      _
    // Predicated region
    $region14: #{tpu_custom_call.1} parent=1 // pred_check
      _
    $region15: #{tpu_custom_call.1} parent=1 // pred_check_branch
      %46 = sbr.rel (0) target = $region17
    $region16: #{tpu_custom_call.1} parent=1 // pred_region
      %s48 = ssub.s32 65536, 65536
      %49 = vsyncadd [#allocation9], %s48
      %s50 = sshll.u32 [#allocation8], 4
      %s51 = int_to_ptr.vmem [resolvable:$true] %s50
      %56 = dma.hbm_to_vmem [thread:$0]  %s3, 65536, %s51, [#allocation9], 512, 512, 32
    $region17: #{tpu_custom_call.1} parent=1 // pred_fallthru
      _
    // Predicated region
    $region18: #{tpu_custom_call.1} parent=1 // pred_check
      _
    $region19: #{tpu_custom_call.1} parent=1 // pred_check_branch
      %58 = sbr.rel (0) target = $region21
    $region20: #{tpu_custom_call.1} parent=1 // pred_region
      %59 = dma.done [#allocation3], 128
    $region21: #{tpu_custom_call.1} parent=1 // pred_fallthru
      _
    // Predicated region
    $region22: #{tpu_custom_call.1} parent=1 // pred_check
      _
    $region23: #{tpu_custom_call.1} parent=1 // pred_check_branch
      %61 = sbr.rel (0) target = $region25
    $region24: #{tpu_custom_call.1} parent=1 // pred_region
      %62 = dma.done [#allocation6], 128
    $region25: #{tpu_custom_call.1} parent=1 // pred_fallthru
      _
    // Predicated region
    $region26: #{tpu_custom_call.1} parent=1 // pred_check
      _
    $region27: #{tpu_custom_call.1} parent=1 // pred_check_branch
      %64 = sbr.rel (0) target = $region29
    $region28: #{tpu_custom_call.1} parent=1 // pred_region
      %65 = dma.done [#allocation6], 65536
    $region29: #{tpu_custom_call.1} parent=1 // pred_fallthru
      _
    // Predicated region
    $region30: #{tpu_custom_call.1} parent=1 // pred_check
      _
    $region31: #{tpu_custom_call.1} parent=1 // pred_check_branch
      %67 = sbr.rel (0) target = $region33
    $region32: #{tpu_custom_call.1} parent=1 // pred_region
      %68 = dma.done [#allocation9], 65536
    $region33: #{tpu_custom_call.1} parent=1 // pred_fallthru
      _
    %v69 = vld [vmem:[#allocation2] sm:$0xff]
    %v70 = vld [vmem:[#allocation7] sm:$0xff]
    %v71 = vld [vmem:[#allocation7 + $0x8] sm:$0xff]
    %v72 = vld [vmem:[#allocation7 + $0x10] sm:$0xff]
    %v73 = vld [vmem:[#allocation7 + $0x18] sm:$0xff]
    %v74 = vld [vmem:[#allocation7 + $0x20] sm:$0xff]
    %v75 = vld [vmem:[#allocation7 + $0x28] sm:$0xff]
    %v76 = vld [vmem:[#allocation7 + $0x30] sm:$0xff]
    %v77 = vld [vmem:[#allocation7 + $0x38] sm:$0xff]
    %v78 = vld [vmem:[#allocation7 + $0x40] sm:$0xff]
    %v79 = vld [vmem:[#allocation7 + $0x48] sm:$0xff]
    %v80 = vld [vmem:[#allocation7 + $0x50] sm:$0xff]
    %v81 = vld [vmem:[#allocation7 + $0x58] sm:$0xff]
    %v82 = vld [vmem:[#allocation7 + $0x60] sm:$0xff]
    %v83 = vld [vmem:[#allocation7 + $0x68] sm:$0xff]
    %v84 = vld [vmem:[#allocation7 + $0x70] sm:$0xff]
    %v85 = vld [vmem:[#allocation7 + $0x78] sm:$0xff]
    %v86 = vld [vmem:[#allocation7 + $0x80] sm:$0xff]
    %v87 = vld [vmem:[#allocation7 + $0x88] sm:$0xff]
    %v88 = vld [vmem:[#allocation7 + $0x90] sm:$0xff]
    %v89 = vld [vmem:[#allocation7 + $0x98] sm:$0xff]
    %v90 = vld [vmem:[#allocation7 + $0xa0] sm:$0xff]
    %v91 = vld [vmem:[#allocation7 + $0xa8] sm:$0xff]
    %v92 = vld [vmem:[#allocation7 + $0xb0] sm:$0xff]
    %v93 = vld [vmem:[#allocation7 + $0xb8] sm:$0xff]
    %v94 = vld [vmem:[#allocation7 + $0xc0] sm:$0xff]
    %v95 = vld [vmem:[#allocation7 + $0xc8] sm:$0xff]
    %v96 = vld [vmem:[#allocation7 + $0xd0] sm:$0xff]
    %v97 = vld [vmem:[#allocation7 + $0xd8] sm:$0xff]
    %v98 = vld [vmem:[#allocation7 + $0xe0] sm:$0xff]
    %v99 = vld [vmem:[#allocation7 + $0xe8] sm:$0xff]
    %v100 = vld [vmem:[#allocation7 + $0xf0] sm:$0xff]
    %v101 = vld [vmem:[#allocation7 + $0xf8] sm:$0xff]
    %v102 = vld [vmem:[#allocation7 + $0x100] sm:$0xff]
    %v103 = vld [vmem:[#allocation7 + $0x108] sm:$0xff]
    %v104 = vld [vmem:[#allocation7 + $0x110] sm:$0xff]
    %v105 = vld [vmem:[#allocation7 + $0x118] sm:$0xff]
    %v106 = vld [vmem:[#allocation7 + $0x120] sm:$0xff]
    %v107 = vld [vmem:[#allocation7 + $0x128] sm:$0xff]
    %v108 = vld [vmem:[#allocation7 + $0x130] sm:$0xff]
    %v109 = vld [vmem:[#allocation7 + $0x138] sm:$0xff]
    %v110 = vld [vmem:[#allocation7 + $0x140] sm:$0xff]
    %v111 = vld [vmem:[#allocation7 + $0x148] sm:$0xff]
    %v112 = vld [vmem:[#allocation7 + $0x150] sm:$0xff]
    %v113 = vld [vmem:[#allocation7 + $0x158] sm:$0xff]
    %v114 = vld [vmem:[#allocation7 + $0x160] sm:$0xff]
    %v115 = vld [vmem:[#allocation7 + $0x168] sm:$0xff]
    %v116 = vld [vmem:[#allocation7 + $0x170] sm:$0xff]
    %v117 = vld [vmem:[#allocation7 + $0x178] sm:$0xff]
    %v118 = vld [vmem:[#allocation7 + $0x180] sm:$0xff]
    %v119 = vld [vmem:[#allocation7 + $0x188] sm:$0xff]
    %v120 = vld [vmem:[#allocation7 + $0x190] sm:$0xff]
    %v121 = vld [vmem:[#allocation7 + $0x198] sm:$0xff]
    %v122 = vld [vmem:[#allocation7 + $0x1a0] sm:$0xff]
    %v123 = vld [vmem:[#allocation7 + $0x1a8] sm:$0xff]
    %v124 = vld [vmem:[#allocation7 + $0x1b0] sm:$0xff]
    %v125 = vld [vmem:[#allocation7 + $0x1b8] sm:$0xff]
    %v126 = vld [vmem:[#allocation7 + $0x1c0] sm:$0xff]
    %v127 = vld [vmem:[#allocation7 + $0x1c8] sm:$0xff]
    %v128 = vld [vmem:[#allocation7 + $0x1d0] sm:$0xff]
    %v129 = vld [vmem:[#allocation7 + $0x1d8] sm:$0xff]
    %v130 = vld [vmem:[#allocation7 + $0x1e0] sm:$0xff]
    %v131 = vld [vmem:[#allocation7 + $0x1e8] sm:$0xff]
    %v132 = vld [vmem:[#allocation7 + $0x1f0] sm:$0xff]
    %v133 = vld [vmem:[#allocation7 + $0x1f8] sm:$0xff]
    %v134 = vld [vmem:[#allocation7 + $0x200] sm:$0xff]
    %v135 = vld [vmem:[#allocation7 + $0x208] sm:$0xff]
    %v136 = vld [vmem:[#allocation7 + $0x210] sm:$0xff]
    %v137 = vld [vmem:[#allocation7 + $0x218] sm:$0xff]
    %v138 = vld [vmem:[#allocation7 + $0x220] sm:$0xff]
    %v139 = vld [vmem:[#allocation7 + $0x228] sm:$0xff]
    %v140 = vld [vmem:[#allocation7 + $0x230] sm:$0xff]
    %v141 = vld [vmem:[#allocation7 + $0x238] sm:$0xff]
    %v142 = vld [vmem:[#allocation7 + $0x240] sm:$0xff]
    %v143 = vld [vmem:[#allocation7 + $0x248] sm:$0xff]
    %v144 = vld [vmem:[#allocation7 + $0x250] sm:$0xff]
    %v145 = vld [vmem:[#allocation7 + $0x258] sm:$0xff]
    %v146 = vld [vmem:[#allocation7 + $0x260] sm:$0xff]
    %v147 = vld [vmem:[#allocation7 + $0x268] sm:$0xff]
    %v148 = vld [vmem:[#allocation7 + $0x270] sm:$0xff]
    %v149 = vld [vmem:[#allocation7 + $0x278] sm:$0xff]
    %v150 = vld [vmem:[#allocation7 + $0x280] sm:$0xff]
    %v151 = vld [vmem:[#allocation7 + $0x288] sm:$0xff]
    %v152 = vld [vmem:[#allocation7 + $0x290] sm:$0xff]
    %v153 = vld [vmem:[#allocation7 + $0x298] sm:$0xff]
    %v154 = vld [vmem:[#allocation7 + $0x2a0] sm:$0xff]
    %v155 = vld [vmem:[#allocation7 + $0x2a8] sm:$0xff]
    %v156 = vld [vmem:[#allocation7 + $0x2b0] sm:$0xff]
    %v157 = vld [vmem:[#allocation7 + $0x2b8] sm:$0xff]
    %v158 = vld [vmem:[#allocation7 + $0x2c0] sm:$0xff]
    %v159 = vld [vmem:[#allocation7 + $0x2c8] sm:$0xff]
    %v160 = vld [vmem:[#allocation7 + $0x2d0] sm:$0xff]
    %v161 = vld [vmem:[#allocation7 + $0x2d8] sm:$0xff]
    %v162 = vld [vmem:[#allocation7 + $0x2e0] sm:$0xff]
    %v163 = vld [vmem:[#allocation7 + $0x2e8] sm:$0xff]
    %v164 = vld [vmem:[#allocation7 + $0x2f0] sm:$0xff]
    %v165 = vld [vmem:[#allocation7 + $0x2f8] sm:$0xff]
    %v166 = vld [vmem:[#allocation7 + $0x300] sm:$0xff]
    %v167 = vld [vmem:[#allocation7 + $0x308] sm:$0xff]
    %v168 = vld [vmem:[#allocation7 + $0x310] sm:$0xff]
    %v169 = vld [vmem:[#allocation7 + $0x318] sm:$0xff]
    %v170 = vld [vmem:[#allocation7 + $0x320] sm:$0xff]
    %v171 = vld [vmem:[#allocation7 + $0x328] sm:$0xff]
    %v172 = vld [vmem:[#allocation7 + $0x330] sm:$0xff]
    %v173 = vld [vmem:[#allocation7 + $0x338] sm:$0xff]
    %v174 = vld [vmem:[#allocation7 + $0x340] sm:$0xff]
    %v175 = vld [vmem:[#allocation7 + $0x348] sm:$0xff]
    %v176 = vld [vmem:[#allocation7 + $0x350] sm:$0xff]
    %v177 = vld [vmem:[#allocation7 + $0x358] sm:$0xff]
    %v178 = vld [vmem:[#allocation7 + $0x360] sm:$0xff]
    %v179 = vld [vmem:[#allocation7 + $0x368] sm:$0xff]
    %v180 = vld [vmem:[#allocation7 + $0x370] sm:$0xff]
    %v181 = vld [vmem:[#allocation7 + $0x378] sm:$0xff]
    %v182 = vld [vmem:[#allocation7 + $0x380] sm:$0xff]
    %v183 = vld [vmem:[#allocation7 + $0x388] sm:$0xff]
    %v184 = vld [vmem:[#allocation7 + $0x390] sm:$0xff]
    %v185 = vld [vmem:[#allocation7 + $0x398] sm:$0xff]
    %v186 = vld [vmem:[#allocation7 + $0x3a0] sm:$0xff]
    %v187 = vld [vmem:[#allocation7 + $0x3a8] sm:$0xff]
    %v188 = vld [vmem:[#allocation7 + $0x3b0] sm:$0xff]
    %v189 = vld [vmem:[#allocation7 + $0x3b8] sm:$0xff]
    %v190 = vld [vmem:[#allocation7 + $0x3c0] sm:$0xff]
    %v191 = vld [vmem:[#allocation7 + $0x3c8] sm:$0xff]
    %v192 = vld [vmem:[#allocation7 + $0x3d0] sm:$0xff]
    %v193 = vld [vmem:[#allocation7 + $0x3d8] sm:$0xff]
    %v194 = vld [vmem:[#allocation7 + $0x3e0] sm:$0xff]
    %v195 = vld [vmem:[#allocation7 + $0x3e8] sm:$0xff]
    %v196 = vld [vmem:[#allocation7 + $0x3f0] sm:$0xff]
    %v197 = vld [vmem:[#allocation7 + $0x3f8] sm:$0xff]
    %v198 = vld [vmem:[#allocation7 + $0x400] sm:$0xff]
    %v199 = vld [vmem:[#allocation7 + $0x408] sm:$0xff]
    %v200 = vld [vmem:[#allocation7 + $0x410] sm:$0xff]
    %v201 = vld [vmem:[#allocation7 + $0x418] sm:$0xff]
    %v202 = vld [vmem:[#allocation7 + $0x420] sm:$0xff]
    %v203 = vld [vmem:[#allocation7 + $0x428] sm:$0xff]
    %v204 = vld [vmem:[#allocation7 + $0x430] sm:$0xff]
    %v205 = vld [vmem:[#allocation7 + $0x438] sm:$0xff]
    %v206 = vld [vmem:[#allocation7 + $0x440] sm:$0xff]
    %v207 = vld [vmem:[#allocation7 + $0x448] sm:$0xff]
    %v208 = vld [vmem:[#allocation7 + $0x450] sm:$0xff]
    %v209 = vld [vmem:[#allocation7 + $0x458] sm:$0xff]
    %v210 = vld [vmem:[#allocation7 + $0x460] sm:$0xff]
    %v211 = vld [vmem:[#allocation7 + $0x468] sm:$0xff]
    %v212 = vld [vmem:[#allocation7 + $0x470] sm:$0xff]
    %v213 = vld [vmem:[#allocation7 + $0x478] sm:$0xff]
    %v214 = vld [vmem:[#allocation7 + $0x480] sm:$0xff]
    %v215 = vld [vmem:[#allocation7 + $0x488] sm:$0xff]
    %v216 = vld [vmem:[#allocation7 + $0x490] sm:$0xff]
    %v217 = vld [vmem:[#allocation7 + $0x498] sm:$0xff]
    %v218 = vld [vmem:[#allocation7 + $0x4a0] sm:$0xff]
    %v219 = vld [vmem:[#allocation7 + $0x4a8] sm:$0xff]
    %v220 = vld [vmem:[#allocation7 + $0x4b0] sm:$0xff]
    %v221 = vld [vmem:[#allocation7 + $0x4b8] sm:$0xff]
    %v222 = vld [vmem:[#allocation7 + $0x4c0] sm:$0xff]
    %v223 = vld [vmem:[#allocation7 + $0x4c8] sm:$0xff]
    %v224 = vld [vmem:[#allocation7 + $0x4d0] sm:$0xff]
    %v225 = vld [vmem:[#allocation7 + $0x4d8] sm:$0xff]
    %v226 = vld [vmem:[#allocation7 + $0x4e0] sm:$0xff]
    %v227 = vld [vmem:[#allocation7 + $0x4e8] sm:$0xff]
    %v228 = vld [vmem:[#allocation7 + $0x4f0] sm:$0xff]
    %v229 = vld [vmem:[#allocation7 + $0x4f8] sm:$0xff]
    %v230 = vld [vmem:[#allocation7 + $0x500] sm:$0xff]
    %v231 = vld [vmem:[#allocation7 + $0x508] sm:$0xff]
    %v232 = vld [vmem:[#allocation7 + $0x510] sm:$0xff]
    %v233 = vld [vmem:[#allocation7 + $0x518] sm:$0xff]
    %v234 = vld [vmem:[#allocation7 + $0x520] sm:$0xff]
    %v235 = vld [vmem:[#allocation7 + $0x528] sm:$0xff]
    %v236 = vld [vmem:[#allocation7 + $0x530] sm:$0xff]
    %v237 = vld [vmem:[#allocation7 + $0x538] sm:$0xff]
    %v238 = vld [vmem:[#allocation7 + $0x540] sm:$0xff]
    %v239 = vld [vmem:[#allocation7 + $0x548] sm:$0xff]
    %v240 = vld [vmem:[#allocation7 + $0x550] sm:$0xff]
    %v241 = vld [vmem:[#allocation7 + $0x558] sm:$0xff]
    %v242 = vld [vmem:[#allocation7 + $0x560] sm:$0xff]
    %v243 = vld [vmem:[#allocation7 + $0x568] sm:$0xff]
    %v244 = vld [vmem:[#allocation7 + $0x570] sm:$0xff]
    %v245 = vld [vmem:[#allocation7 + $0x578] sm:$0xff]
    %v246 = vld [vmem:[#allocation7 + $0x580] sm:$0xff]
    %v247 = vld [vmem:[#allocation7 + $0x588] sm:$0xff]
    %v248 = vld [vmem:[#allocation7 + $0x590] sm:$0xff]
    %v249 = vld [vmem:[#allocation7 + $0x598] sm:$0xff]
    %v250 = vld [vmem:[#allocation7 + $0x5a0] sm:$0xff]
    %v251 = vld [vmem:[#allocation7 + $0x5a8] sm:$0xff]
    %v252 = vld [vmem:[#allocation7 + $0x5b0] sm:$0xff]
    %v253 = vld [vmem:[#allocation7 + $0x5b8] sm:$0xff]
    %v254 = vld [vmem:[#allocation7 + $0x5c0] sm:$0xff]
    %v255 = vld [vmem:[#allocation7 + $0x5c8] sm:$0xff]
    %v256 = vld [vmem:[#allocation7 + $0x5d0] sm:$0xff]
    %v257 = vld [vmem:[#allocation7 + $0x5d8] sm:$0xff]
    %v258 = vld [vmem:[#allocation7 + $0x5e0] sm:$0xff]
    %v259 = vld [vmem:[#allocation7 + $0x5e8] sm:$0xff]
    %v260 = vld [vmem:[#allocation7 + $0x5f0] sm:$0xff]
    %v261 = vld [vmem:[#allocation7 + $0x5f8] sm:$0xff]
    %v262 = vld [vmem:[#allocation7 + $0x600] sm:$0xff]
    %v263 = vld [vmem:[#allocation7 + $0x608] sm:$0xff]
    %v264 = vld [vmem:[#allocation7 + $0x610] sm:$0xff]
    %v265 = vld [vmem:[#allocation7 + $0x618] sm:$0xff]
    %v266 = vld [vmem:[#allocation7 + $0x620] sm:$0xff]
    %v267 = vld [vmem:[#allocation7 + $0x628] sm:$0xff]
    %v268 = vld [vmem:[#allocation7 + $0x630] sm:$0xff]
    %v269 = vld [vmem:[#allocation7 + $0x638] sm:$0xff]
    %v270 = vld [vmem:[#allocation7 + $0x640] sm:$0xff]
    %v271 = vld [vmem:[#allocation7 + $0x648] sm:$0xff]
    %v272 = vld [vmem:[#allocation7 + $0x650] sm:$0xff]
    %v273 = vld [vmem:[#allocation7 + $0x658] sm:$0xff]
    %v274 = vld [vmem:[#allocation7 + $0x660] sm:$0xff]
    %v275 = vld [vmem:[#allocation7 + $0x668] sm:$0xff]
    %v276 = vld [vmem:[#allocation7 + $0x670] sm:$0xff]
    %v277 = vld [vmem:[#allocation7 + $0x678] sm:$0xff]
    %v278 = vld [vmem:[#allocation7 + $0x680] sm:$0xff]
    %v279 = vld [vmem:[#allocation7 + $0x688] sm:$0xff]
    %v280 = vld [vmem:[#allocation7 + $0x690] sm:$0xff]
    %v281 = vld [vmem:[#allocation7 + $0x698] sm:$0xff]
    %v282 = vld [vmem:[#allocation7 + $0x6a0] sm:$0xff]
    %v283 = vld [vmem:[#allocation7 + $0x6a8] sm:$0xff]
    %v284 = vld [vmem:[#allocation7 + $0x6b0] sm:$0xff]
    %v285 = vld [vmem:[#allocation7 + $0x6b8] sm:$0xff]
    %v286 = vld [vmem:[#allocation7 + $0x6c0] sm:$0xff]
    %v287 = vld [vmem:[#allocation7 + $0x6c8] sm:$0xff]
    %v288 = vld [vmem:[#allocation7 + $0x6d0] sm:$0xff]
    %v289 = vld [vmem:[#allocation7 + $0x6d8] sm:$0xff]
    %v290 = vld [vmem:[#allocation7 + $0x6e0] sm:$0xff]
    %v291 = vld [vmem:[#allocation7 + $0x6e8] sm:$0xff]
    %v292 = vld [vmem:[#allocation7 + $0x6f0] sm:$0xff]
    %v293 = vld [vmem:[#allocation7 + $0x6f8] sm:$0xff]
    %v294 = vld [vmem:[#allocation7 + $0x700] sm:$0xff]
    %v295 = vld [vmem:[#allocation7 + $0x708] sm:$0xff]
    %v296 = vld [vmem:[#allocation7 + $0x710] sm:$0xff]
    %v297 = vld [vmem:[#allocation7 + $0x718] sm:$0xff]
    %v298 = vld [vmem:[#allocation7 + $0x720] sm:$0xff]
    %v299 = vld [vmem:[#allocation7 + $0x728] sm:$0xff]
    %v300 = vld [vmem:[#allocation7 + $0x730] sm:$0xff]
    %v301 = vld [vmem:[#allocation7 + $0x738] sm:$0xff]
    %v302 = vld [vmem:[#allocation7 + $0x740] sm:$0xff]
    %v303 = vld [vmem:[#allocation7 + $0x748] sm:$0xff]
    %v304 = vld [vmem:[#allocation7 + $0x750] sm:$0xff]
    %v305 = vld [vmem:[#allocation7 + $0x758] sm:$0xff]
    %v306 = vld [vmem:[#allocation7 + $0x760] sm:$0xff]
    %v307 = vld [vmem:[#allocation7 + $0x768] sm:$0xff]
    %v308 = vld [vmem:[#allocation7 + $0x770] sm:$0xff]
    %v309 = vld [vmem:[#allocation7 + $0x778] sm:$0xff]
    %v310 = vld [vmem:[#allocation7 + $0x780] sm:$0xff]
    %v311 = vld [vmem:[#allocation7 + $0x788] sm:$0xff]
    %v312 = vld [vmem:[#allocation7 + $0x790] sm:$0xff]
    %v313 = vld [vmem:[#allocation7 + $0x798] sm:$0xff]
    %v314 = vld [vmem:[#allocation7 + $0x7a0] sm:$0xff]
    %v315 = vld [vmem:[#allocation7 + $0x7a8] sm:$0xff]
    %v316 = vld [vmem:[#allocation7 + $0x7b0] sm:$0xff]
    %v317 = vld [vmem:[#allocation7 + $0x7b8] sm:$0xff]
    %v318 = vld [vmem:[#allocation7 + $0x7c0] sm:$0xff]
    %v319 = vld [vmem:[#allocation7 + $0x7c8] sm:$0xff]
    %v320 = vld [vmem:[#allocation7 + $0x7d0] sm:$0xff]
    %v321 = vld [vmem:[#allocation7 + $0x7d8] sm:$0xff]
    %v322 = vld [vmem:[#allocation7 + $0x7e0] sm:$0xff]
    %v323 = vld [vmem:[#allocation7 + $0x7e8] sm:$0xff]
    %v324 = vld [vmem:[#allocation7 + $0x7f0] sm:$0xff]
    %v325 = vld [vmem:[#allocation7 + $0x7f8] sm:$0xff]
    %v326 = vld [vmem:[#allocation7 + $0x800] sm:$0xff]
    %v327 = vld [vmem:[#allocation7 + $0x808] sm:$0xff]
    %v328 = vld [vmem:[#allocation7 + $0x810] sm:$0xff]
    %v329 = vld [vmem:[#allocation7 + $0x818] sm:$0xff]
    %v330 = vld [vmem:[#allocation7 + $0x820] sm:$0xff]
    %v331 = vld [vmem:[#allocation7 + $0x828] sm:$0xff]
    %v332 = vld [vmem:[#allocation7 + $0x830] sm:$0xff]
    %v333 = vld [vmem:[#allocation7 + $0x838] sm:$0xff]
    %v334 = vld [vmem:[#allocation7 + $0x840] sm:$0xff]
    %v335 = vld [vmem:[#allocation7 + $0x848] sm:$0xff]
    %v336 = vld [vmem:[#allocation7 + $0x850] sm:$0xff]
    %v337 = vld [vmem:[#allocation7 + $0x858] sm:$0xff]
    %v338 = vld [vmem:[#allocation7 + $0x860] sm:$0xff]
    %v339 = vld [vmem:[#allocation7 + $0x868] sm:$0xff]
    %v340 = vld [vmem:[#allocation7 + $0x870] sm:$0xff]
    %v341 = vld [vmem:[#allocation7 + $0x878] sm:$0xff]
    %v342 = vld [vmem:[#allocation7 + $0x880] sm:$0xff]
    %v343 = vld [vmem:[#allocation7 + $0x888] sm:$0xff]
    %v344 = vld [vmem:[#allocation7 + $0x890] sm:$0xff]
    %v345 = vld [vmem:[#allocation7 + $0x898] sm:$0xff]
    %v346 = vld [vmem:[#allocation7 + $0x8a0] sm:$0xff]
    %v347 = vld [vmem:[#allocation7 + $0x8a8] sm:$0xff]
    %v348 = vld [vmem:[#allocation7 + $0x8b0] sm:$0xff]
    %v349 = vld [vmem:[#allocation7 + $0x8b8] sm:$0xff]
    %v350 = vld [vmem:[#allocation7 + $0x8c0] sm:$0xff]
    %v351 = vld [vmem:[#allocation7 + $0x8c8] sm:$0xff]
    %v352 = vld [vmem:[#allocation7 + $0x8d0] sm:$0xff]
    %v353 = vld [vmem:[#allocation7 + $0x8d8] sm:$0xff]
    %v354 = vld [vmem:[#allocation7 + $0x8e0] sm:$0xff]
    %v355 = vld [vmem:[#allocation7 + $0x8e8] sm:$0xff]
    %v356 = vld [vmem:[#allocation7 + $0x8f0] sm:$0xff]
    %v357 = vld [vmem:[#allocation7 + $0x8f8] sm:$0xff]
    %v358 = vld [vmem:[#allocation7 + $0x900] sm:$0xff]
    %v359 = vld [vmem:[#allocation7 + $0x908] sm:$0xff]
    %v360 = vld [vmem:[#allocation7 + $0x910] sm:$0xff]
    %v361 = vld [vmem:[#allocation7 + $0x918] sm:$0xff]
    %v362 = vld [vmem:[#allocation7 + $0x920] sm:$0xff]
    %v363 = vld [vmem:[#allocation7 + $0x928] sm:$0xff]
    %v364 = vld [vmem:[#allocation7 + $0x930] sm:$0xff]
    %v365 = vld [vmem:[#allocation7 + $0x938] sm:$0xff]
    %v366 = vld [vmem:[#allocation7 + $0x940] sm:$0xff]
    %v367 = vld [vmem:[#allocation7 + $0x948] sm:$0xff]
    %v368 = vld [vmem:[#allocation7 + $0x950] sm:$0xff]
    %v369 = vld [vmem:[#allocation7 + $0x958] sm:$0xff]
    %v370 = vld [vmem:[#allocation7 + $0x960] sm:$0xff]
    %v371 = vld [vmem:[#allocation7 + $0x968] sm:$0xff]
    %v372 = vld [vmem:[#allocation7 + $0x970] sm:$0xff]
    %v373 = vld [vmem:[#allocation7 + $0x978] sm:$0xff]
    %v374 = vld [vmem:[#allocation7 + $0x980] sm:$0xff]
    %v375 = vld [vmem:[#allocation7 + $0x988] sm:$0xff]
    %v376 = vld [vmem:[#allocation7 + $0x990] sm:$0xff]
    %v377 = vld [vmem:[#allocation7 + $0x998] sm:$0xff]
    %v378 = vld [vmem:[#allocation7 + $0x9a0] sm:$0xff]
    %v379 = vld [vmem:[#allocation7 + $0x9a8] sm:$0xff]
    %v380 = vld [vmem:[#allocation7 + $0x9b0] sm:$0xff]
    %v381 = vld [vmem:[#allocation7 + $0x9b8] sm:$0xff]
    %v382 = vld [vmem:[#allocation7 + $0x9c0] sm:$0xff]
    %v383 = vld [vmem:[#allocation7 + $0x9c8] sm:$0xff]
    %v384 = vld [vmem:[#allocation7 + $0x9d0] sm:$0xff]
    %v385 = vld [vmem:[#allocation7 + $0x9d8] sm:$0xff]
    %v386 = vld [vmem:[#allocation7 + $0x9e0] sm:$0xff]
    %v387 = vld [vmem:[#allocation7 + $0x9e8] sm:$0xff]
    %v388 = vld [vmem:[#allocation7 + $0x9f0] sm:$0xff]
    %v389 = vld [vmem:[#allocation7 + $0x9f8] sm:$0xff]
    %v390 = vld [vmem:[#allocation7 + $0xa00] sm:$0xff]
    %v391 = vld [vmem:[#allocation7 + $0xa08] sm:$0xff]
    %v392 = vld [vmem:[#allocation7 + $0xa10] sm:$0xff]
    %v393 = vld [vmem:[#allocation7 + $0xa18] sm:$0xff]
    %v394 = vld [vmem:[#allocation7 + $0xa20] sm:$0xff]
    %v395 = vld [vmem:[#allocation7 + $0xa28] sm:$0xff]
    %v396 = vld [vmem:[#allocation7 + $0xa30] sm:$0xff]
    %v397 = vld [vmem:[#allocation7 + $0xa38] sm:$0xff]
    %v398 = vld [vmem:[#allocation7 + $0xa40] sm:$0xff]
    %v399 = vld [vmem:[#allocation7 + $0xa48] sm:$0xff]
    %v400 = vld [vmem:[#allocation7 + $0xa50] sm:$0xff]
    %v401 = vld [vmem:[#allocation7 + $0xa58] sm:$0xff]
    %v402 = vld [vmem:[#allocation7 + $0xa60] sm:$0xff]
    %v403 = vld [vmem:[#allocation7 + $0xa68] sm:$0xff]
    %v404 = vld [vmem:[#allocation7 + $0xa70] sm:$0xff]
    %v405 = vld [vmem:[#allocation7 + $0xa78] sm:$0xff]
    %v406 = vld [vmem:[#allocation7 + $0xa80] sm:$0xff]
    %v407 = vld [vmem:[#allocation7 + $0xa88] sm:$0xff]
    %v408 = vld [vmem:[#allocation7 + $0xa90] sm:$0xff]
    %v409 = vld [vmem:[#allocation7 + $0xa98] sm:$0xff]
    %v410 = vld [vmem:[#allocation7 + $0xaa0] sm:$0xff]
    %v411 = vld [vmem:[#allocation7 + $0xaa8] sm:$0xff]
    %v412 = vld [vmem:[#allocation7 + $0xab0] sm:$0xff]
    %v413 = vld [vmem:[#allocation7 + $0xab8] sm:$0xff]
    %v414 = vld [vmem:[#allocation7 + $0xac0] sm:$0xff]
    %v415 = vld [vmem:[#allocation7 + $0xac8] sm:$0xff]
    %v416 = vld [vmem:[#allocation7 + $0xad0] sm:$0xff]
    %v417 = vld [vmem:[#allocation7 + $0xad8] sm:$0xff]
    %v418 = vld [vmem:[#allocation7 + $0xae0] sm:$0xff]
    %v419 = vld [vmem:[#allocation7 + $0xae8] sm:$0xff]
    %v420 = vld [vmem:[#allocation7 + $0xaf0] sm:$0xff]
    %v421 = vld [vmem:[#allocation7 + $0xaf8] sm:$0xff]
    %v422 = vld [vmem:[#allocation7 + $0xb00] sm:$0xff]
    %v423 = vld [vmem:[#allocation7 + $0xb08] sm:$0xff]
    %v424 = vld [vmem:[#allocation7 + $0xb10] sm:$0xff]
    %v425 = vld [vmem:[#allocation7 + $0xb18] sm:$0xff]
    %v426 = vld [vmem:[#allocation7 + $0xb20] sm:$0xff]
    %v427 = vld [vmem:[#allocation7 + $0xb28] sm:$0xff]
    %v428 = vld [vmem:[#allocation7 + $0xb30] sm:$0xff]
    %v429 = vld [vmem:[#allocation7 + $0xb38] sm:$0xff]
    %v430 = vld [vmem:[#allocation7 + $0xb40] sm:$0xff]
    %v431 = vld [vmem:[#allocation7 + $0xb48] sm:$0xff]
    %v432 = vld [vmem:[#allocation7 + $0xb50] sm:$0xff]
    %v433 = vld [vmem:[#allocation7 + $0xb58] sm:$0xff]
    %v434 = vld [vmem:[#allocation7 + $0xb60] sm:$0xff]
    %v435 = vld [vmem:[#allocation7 + $0xb68] sm:$0xff]
    %v436 = vld [vmem:[#allocation7 + $0xb70] sm:$0xff]
    %v437 = vld [vmem:[#allocation7 + $0xb78] sm:$0xff]
    %v438 = vld [vmem:[#allocation7 + $0xb80] sm:$0xff]
    %v439 = vld [vmem:[#allocation7 + $0xb88] sm:$0xff]
    %v440 = vld [vmem:[#allocation7 + $0xb90] sm:$0xff]
    %v441 = vld [vmem:[#allocation7 + $0xb98] sm:$0xff]
    %v442 = vld [vmem:[#allocation7 + $0xba0] sm:$0xff]
    %v443 = vld [vmem:[#allocation7 + $0xba8] sm:$0xff]
    %v444 = vld [vmem:[#allocation7 + $0xbb0] sm:$0xff]
    %v445 = vld [vmem:[#allocation7 + $0xbb8] sm:$0xff]
    %v446 = vld [vmem:[#allocation7 + $0xbc0] sm:$0xff]
    %v447 = vld [vmem:[#allocation7 + $0xbc8] sm:$0xff]
    %v448 = vld [vmem:[#allocation7 + $0xbd0] sm:$0xff]
    %v449 = vld [vmem:[#allocation7 + $0xbd8] sm:$0xff]
    %v450 = vld [vmem:[#allocation7 + $0xbe0] sm:$0xff]
    %v451 = vld [vmem:[#allocation7 + $0xbe8] sm:$0xff]
    %v452 = vld [vmem:[#allocation7 + $0xbf0] sm:$0xff]
    %v453 = vld [vmem:[#allocation7 + $0xbf8] sm:$0xff]
    %v454 = vld [vmem:[#allocation7 + $0xc00] sm:$0xff]
    %v455 = vld [vmem:[#allocation7 + $0xc08] sm:$0xff]
    %v456 = vld [vmem:[#allocation7 + $0xc10] sm:$0xff]
    %v457 = vld [vmem:[#allocation7 + $0xc18] sm:$0xff]
    %v458 = vld [vmem:[#allocation7 + $0xc20] sm:$0xff]
    %v459 = vld [vmem:[#allocation7 + $0xc28] sm:$0xff]
    %v460 = vld [vmem:[#allocation7 + $0xc30] sm:$0xff]
    %v461 = vld [vmem:[#allocation7 + $0xc38] sm:$0xff]
    %v462 = vld [vmem:[#allocation7 + $0xc40] sm:$0xff]
    %v463 = vld [vmem:[#allocation7 + $0xc48] sm:$0xff]
    %v464 = vld [vmem:[#allocation7 + $0xc50] sm:$0xff]
    %v465 = vld [vmem:[#allocation7 + $0xc58] sm:$0xff]
    %v466 = vld [vmem:[#allocation7 + $0xc60] sm:$0xff]
    %v467 = vld [vmem:[#allocation7 + $0xc68] sm:$0xff]
    %v468 = vld [vmem:[#allocation7 + $0xc70] sm:$0xff]
    %v469 = vld [vmem:[#allocation7 + $0xc78] sm:$0xff]
    %v470 = vld [vmem:[#allocation7 + $0xc80] sm:$0xff]
    %v471 = vld [vmem:[#allocation7 + $0xc88] sm:$0xff]
    %v472 = vld [vmem:[#allocation7 + $0xc90] sm:$0xff]
    %v473 = vld [vmem:[#allocation7 + $0xc98] sm:$0xff]
    %v474 = vld [vmem:[#allocation7 + $0xca0] sm:$0xff]
    %v475 = vld [vmem:[#allocation7 + $0xca8] sm:$0xff]
    %v476 = vld [vmem:[#allocation7 + $0xcb0] sm:$0xff]
    %v477 = vld [vmem:[#allocation7 + $0xcb8] sm:$0xff]
    %v478 = vld [vmem:[#allocation7 + $0xcc0] sm:$0xff]
    %v479 = vld [vmem:[#allocation7 + $0xcc8] sm:$0xff]
    %v480 = vld [vmem:[#allocation7 + $0xcd0] sm:$0xff]
    %v481 = vld [vmem:[#allocation7 + $0xcd8] sm:$0xff]
    %v482 = vld [vmem:[#allocation7 + $0xce0] sm:$0xff]
    %v483 = vld [vmem:[#allocation7 + $0xce8] sm:$0xff]
    %v484 = vld [vmem:[#allocation7 + $0xcf0] sm:$0xff]
    %v485 = vld [vmem:[#allocation7 + $0xcf8] sm:$0xff]
    %v486 = vld [vmem:[#allocation7 + $0xd00] sm:$0xff]
    %v487 = vld [vmem:[#allocation7 + $0xd08] sm:$0xff]
    %v488 = vld [vmem:[#allocation7 + $0xd10] sm:$0xff]
    %v489 = vld [vmem:[#allocation7 + $0xd18] sm:$0xff]
    %v490 = vld [vmem:[#allocation7 + $0xd20] sm:$0xff]
    %v491 = vld [vmem:[#allocation7 + $0xd28] sm:$0xff]
    %v492 = vld [vmem:[#allocation7 + $0xd30] sm:$0xff]
    %v493 = vld [vmem:[#allocation7 + $0xd38] sm:$0xff]
    %v494 = vld [vmem:[#allocation7 + $0xd40] sm:$0xff]
    %v495 = vld [vmem:[#allocation7 + $0xd48] sm:$0xff]
    %v496 = vld [vmem:[#allocation7 + $0xd50] sm:$0xff]
    %v497 = vld [vmem:[#allocation7 + $0xd58] sm:$0xff]
    %v498 = vld [vmem:[#allocation7 + $0xd60] sm:$0xff]
    %v499 = vld [vmem:[#allocation7 + $0xd68] sm:$0xff]
    %v500 = vld [vmem:[#allocation7 + $0xd70] sm:$0xff]
    %v501 = vld [vmem:[#allocation7 + $0xd78] sm:$0xff]
    %v502 = vld [vmem:[#allocation7 + $0xd80] sm:$0xff]
    %v503 = vld [vmem:[#allocation7 + $0xd88] sm:$0xff]
    %v504 = vld [vmem:[#allocation7 + $0xd90] sm:$0xff]
    %v505 = vld [vmem:[#allocation7 + $0xd98] sm:$0xff]
    %v506 = vld [vmem:[#allocation7 + $0xda0] sm:$0xff]
    %v507 = vld [vmem:[#allocation7 + $0xda8] sm:$0xff]
    %v508 = vld [vmem:[#allocation7 + $0xdb0] sm:$0xff]
    %v509 = vld [vmem:[#allocation7 + $0xdb8] sm:$0xff]
    %v510 = vld [vmem:[#allocation7 + $0xdc0] sm:$0xff]
    %v511 = vld [vmem:[#allocation7 + $0xdc8] sm:$0xff]
    %v512 = vld [vmem:[#allocation7 + $0xdd0] sm:$0xff]
    %v513 = vld [vmem:[#allocation7 + $0xdd8] sm:$0xff]
    %v514 = vld [vmem:[#allocation7 + $0xde0] sm:$0xff]
    %v515 = vld [vmem:[#allocation7 + $0xde8] sm:$0xff]
    %v516 = vld [vmem:[#allocation7 + $0xdf0] sm:$0xff]
    %v517 = vld [vmem:[#allocation7 + $0xdf8] sm:$0xff]
    %v518 = vld [vmem:[#allocation7 + $0xe00] sm:$0xff]
    %v519 = vld [vmem:[#allocation7 + $0xe08] sm:$0xff]
    %v520 = vld [vmem:[#allocation7 + $0xe10] sm:$0xff]
    %v521 = vld [vmem:[#allocation7 + $0xe18] sm:$0xff]
    %v522 = vld [vmem:[#allocation7 + $0xe20] sm:$0xff]
    %v523 = vld [vmem:[#allocation7 + $0xe28] sm:$0xff]
    %v524 = vld [vmem:[#allocation7 + $0xe30] sm:$0xff]
    %v525 = vld [vmem:[#allocation7 + $0xe38] sm:$0xff]
    %v526 = vld [vmem:[#allocation7 + $0xe40] sm:$0xff]
    %v527 = vld [vmem:[#allocation7 + $0xe48] sm:$0xff]
    %v528 = vld [vmem:[#allocation7 + $0xe50] sm:$0xff]
    %v529 = vld [vmem:[#allocation7 + $0xe58] sm:$0xff]
    %v530 = vld [vmem:[#allocation7 + $0xe60] sm:$0xff]
    %v531 = vld [vmem:[#allocation7 + $0xe68] sm:$0xff]
    %v532 = vld [vmem:[#allocation7 + $0xe70] sm:$0xff]
    %v533 = vld [vmem:[#allocation7 + $0xe78] sm:$0xff]
    %v534 = vld [vmem:[#allocation7 + $0xe80] sm:$0xff]
    %v535 = vld [vmem:[#allocation7 + $0xe88] sm:$0xff]
    %v536 = vld [vmem:[#allocation7 + $0xe90] sm:$0xff]
    %v537 = vld [vmem:[#allocation7 + $0xe98] sm:$0xff]
    %v538 = vld [vmem:[#allocation7 + $0xea0] sm:$0xff]
    %v539 = vld [vmem:[#allocation7 + $0xea8] sm:$0xff]
    %v540 = vld [vmem:[#allocation7 + $0xeb0] sm:$0xff]
    %v541 = vld [vmem:[#allocation7 + $0xeb8] sm:$0xff]
    %v542 = vld [vmem:[#allocation7 + $0xec0] sm:$0xff]
    %v543 = vld [vmem:[#allocation7 + $0xec8] sm:$0xff]
    %v544 = vld [vmem:[#allocation7 + $0xed0] sm:$0xff]
    %v545 = vld [vmem:[#allocation7 + $0xed8] sm:$0xff]
    %v546 = vld [vmem:[#allocation7 + $0xee0] sm:$0xff]
    %v547 = vld [vmem:[#allocation7 + $0xee8] sm:$0xff]
    %v548 = vld [vmem:[#allocation7 + $0xef0] sm:$0xff]
    %v549 = vld [vmem:[#allocation7 + $0xef8] sm:$0xff]
    %v550 = vld [vmem:[#allocation7 + $0xf00] sm:$0xff]
    %v551 = vld [vmem:[#allocation7 + $0xf08] sm:$0xff]
    %v552 = vld [vmem:[#allocation7 + $0xf10] sm:$0xff]
    %v553 = vld [vmem:[#allocation7 + $0xf18] sm:$0xff]
    %v554 = vld [vmem:[#allocation7 + $0xf20] sm:$0xff]
    %v555 = vld [vmem:[#allocation7 + $0xf28] sm:$0xff]
    %v556 = vld [vmem:[#allocation7 + $0xf30] sm:$0xff]
    %v557 = vld [vmem:[#allocation7 + $0xf38] sm:$0xff]
    %v558 = vld [vmem:[#allocation7 + $0xf40] sm:$0xff]
    %v559 = vld [vmem:[#allocation7 + $0xf48] sm:$0xff]
    %v560 = vld [vmem:[#allocation7 + $0xf50] sm:$0xff]
    %v561 = vld [vmem:[#allocation7 + $0xf58] sm:$0xff]
    %v562 = vld [vmem:[#allocation7 + $0xf60] sm:$0xff]
    %v563 = vld [vmem:[#allocation7 + $0xf68] sm:$0xff]
    %v564 = vld [vmem:[#allocation7 + $0xf70] sm:$0xff]
    %v565 = vld [vmem:[#allocation7 + $0xf78] sm:$0xff]
    %v566 = vld [vmem:[#allocation7 + $0xf80] sm:$0xff]
    %v567 = vld [vmem:[#allocation7 + $0xf88] sm:$0xff]
    %v568 = vld [vmem:[#allocation7 + $0xf90] sm:$0xff]
    %v569 = vld [vmem:[#allocation7 + $0xf98] sm:$0xff]
    %v570 = vld [vmem:[#allocation7 + $0xfa0] sm:$0xff]
    %v571 = vld [vmem:[#allocation7 + $0xfa8] sm:$0xff]
    %v572 = vld [vmem:[#allocation7 + $0xfb0] sm:$0xff]
    %v573 = vld [vmem:[#allocation7 + $0xfb8] sm:$0xff]
    %v574 = vld [vmem:[#allocation7 + $0xfc0] sm:$0xff]
    %v575 = vld [vmem:[#allocation7 + $0xfc8] sm:$0xff]
    %v576 = vld [vmem:[#allocation7 + $0xfd0] sm:$0xff]
    %v577 = vld [vmem:[#allocation7 + $0xfd8] sm:$0xff]
    %v578 = vld [vmem:[#allocation7 + $0xfe0] sm:$0xff]
    %v579 = vld [vmem:[#allocation7 + $0xfe8] sm:$0xff]
    %v580 = vld [vmem:[#allocation7 + $0xff0] sm:$0xff]
    %v581 = vld [vmem:[#allocation7 + $0xff8] sm:$0xff]
    %v582 = vld [vmem:[#allocation5] sm:$0xff]
    %v584 = vcombine.high %v69, %v69
    %v586 = vunpack.c.l.s4 1966171168
    %v587 = vunpack.c.0.s8 %v586
    %v588 = vlaneseq
    %v589 = vshrl.u32 %v588, 7
    %v590 = vsub.s32 %v587, %v589
    %v591 = vrot.slane %v69, %v590
    %v593 = vunpack.c.l.s4 1966171168
    %v594 = vunpack.c.0.s8 %v593
    %v595 = vlaneseq
    %v596 = vshrl.u32 %v595, 7
    %v597 = vsub.s32 %v594, %v596
    %v598 = vrot.slane %v584, %v597
    %v599 = vcombine.high %v591, %v591
    %v600 = vcombine.high %v598, %v598
    %v602 = vunpack.c.l.s4 1966171168
    %v603 = vunpack.c.0.s8 %v602
    %v604 = vlaneseq
    %v605 = vshrl.u32 %v604, 7
    %v606 = vsub.s32 %v603, %v605
    %v607 = vrot.slane %v591, %v606
    %v609 = vunpack.c.l.s4 1966171168
    %v610 = vunpack.c.0.s8 %v609
    %v611 = vlaneseq
    %v612 = vshrl.u32 %v611, 7
    %v613 = vsub.s32 %v610, %v612
    %v614 = vrot.slane %v598, %v613
    %v616 = vunpack.c.l.s4 1966171168
    %v617 = vunpack.c.0.s8 %v616
    %v618 = vlaneseq
    %v619 = vshrl.u32 %v618, 7
    %v620 = vsub.s32 %v617, %v619
    %v621 = vrot.slane %v599, %v620
    %v623 = vunpack.c.l.s4 1966171168
    %v624 = vunpack.c.0.s8 %v623
    %v625 = vlaneseq
    %v626 = vshrl.u32 %v625, 7
    %v627 = vsub.s32 %v624, %v626
    %v628 = vrot.slane %v600, %v627
    %v629 = vcombine.high %v607, %v607
    %v630 = vcombine.high %v614, %v614
    %v631 = vcombine.high %v621, %v621
    %v632 = vcombine.high %v628, %v628
    %v1153 = vunpack.c.l.b16 %v70
    %v1154 = vunpack.c.h.b16 %v70
    %v1155 = vunpack.c.l.b16 %v71
    %v1156 = vunpack.c.h.b16 %v71
    %v1157 = vunpack.c.l.b16 %v72
    %v1158 = vunpack.c.h.b16 %v72
    %v1159 = vunpack.c.l.b16 %v73
    %v1160 = vunpack.c.h.b16 %v73
    %v1161 = vunpack.c.l.b16 %v74
    %v1162 = vunpack.c.h.b16 %v74
    %v1163 = vunpack.c.l.b16 %v75
    %v1164 = vunpack.c.h.b16 %v75
    %v1165 = vunpack.c.l.b16 %v76
    %v1166 = vunpack.c.h.b16 %v76
    %v1167 = vunpack.c.l.b16 %v77
    %v1168 = vunpack.c.h.b16 %v77
    %v1169 = vunpack.c.l.b16 %v78
    %v1170 = vunpack.c.h.b16 %v78
    %v1171 = vunpack.c.l.b16 %v79
    %v1172 = vunpack.c.h.b16 %v79
    %v1173 = vunpack.c.l.b16 %v80
    %v1174 = vunpack.c.h.b16 %v80
    %v1175 = vunpack.c.l.b16 %v81
    %v1176 = vunpack.c.h.b16 %v81
    %v1177 = vunpack.c.l.b16 %v82
    %v1178 = vunpack.c.h.b16 %v82
    %v1179 = vunpack.c.l.b16 %v83
    %v1180 = vunpack.c.h.b16 %v83
    %v1181 = vunpack.c.l.b16 %v84
    %v1182 = vunpack.c.h.b16 %v84
    %v1183 = vunpack.c.l.b16 %v85
    %v1184 = vunpack.c.h.b16 %v85
    %v1185 = vunpack.c.l.b16 %v86
    %v1186 = vunpack.c.h.b16 %v86
    %v1187 = vunpack.c.l.b16 %v87
    %v1188 = vunpack.c.h.b16 %v87
    %v1189 = vunpack.c.l.b16 %v88
    %v1190 = vunpack.c.h.b16 %v88
    %v1191 = vunpack.c.l.b16 %v89
    %v1192 = vunpack.c.h.b16 %v89
    %v1193 = vunpack.c.l.b16 %v90
    %v1194 = vunpack.c.h.b16 %v90
    %v1195 = vunpack.c.l.b16 %v91
    %v1196 = vunpack.c.h.b16 %v91
    %v1197 = vunpack.c.l.b16 %v92
    %v1198 = vunpack.c.h.b16 %v92
    %v1199 = vunpack.c.l.b16 %v93
    %v1200 = vunpack.c.h.b16 %v93
    %v1201 = vunpack.c.l.b16 %v94
    %v1202 = vunpack.c.h.b16 %v94
    %v1203 = vunpack.c.l.b16 %v95
    %v1204 = vunpack.c.h.b16 %v95
    %v1205 = vunpack.c.l.b16 %v96
    %v1206 = vunpack.c.h.b16 %v96
    %v1207 = vunpack.c.l.b16 %v97
    %v1208 = vunpack.c.h.b16 %v97
    %v1209 = vunpack.c.l.b16 %v98
    %v1210 = vunpack.c.h.b16 %v98
    %v1211 = vunpack.c.l.b16 %v99
    %v1212 = vunpack.c.h.b16 %v99
    %v1213 = vunpack.c.l.b16 %v100
    %v1214 = vunpack.c.h.b16 %v100
    %v1215 = vunpack.c.l.b16 %v101
    %v1216 = vunpack.c.h.b16 %v101
    %v1217 = vunpack.c.l.b16 %v102
    %v1218 = vunpack.c.h.b16 %v102
    %v1219 = vunpack.c.l.b16 %v103
    %v1220 = vunpack.c.h.b16 %v103
    %v1221 = vunpack.c.l.b16 %v104
    %v1222 = vunpack.c.h.b16 %v104
    %v1223 = vunpack.c.l.b16 %v105
    %v1224 = vunpack.c.h.b16 %v105
    %v1225 = vunpack.c.l.b16 %v106
    %v1226 = vunpack.c.h.b16 %v106
    %v1227 = vunpack.c.l.b16 %v107
    %v1228 = vunpack.c.h.b16 %v107
    %v1229 = vunpack.c.l.b16 %v108
    %v1230 = vunpack.c.h.b16 %v108
    %v1231 = vunpack.c.l.b16 %v109
    %v1232 = vunpack.c.h.b16 %v109
    %v1233 = vunpack.c.l.b16 %v110
    %v1234 = vunpack.c.h.b16 %v110
    %v1235 = vunpack.c.l.b16 %v111
    %v1236 = vunpack.c.h.b16 %v111
    %v1237 = vunpack.c.l.b16 %v112
    %v1238 = vunpack.c.h.b16 %v112
    %v1239 = vunpack.c.l.b16 %v113
    %v1240 = vunpack.c.h.b16 %v113
    %v1241 = vunpack.c.l.b16 %v114
    %v1242 = vunpack.c.h.b16 %v114
    %v1243 = vunpack.c.l.b16 %v115
    %v1244 = vunpack.c.h.b16 %v115
    %v1245 = vunpack.c.l.b16 %v116
    %v1246 = vunpack.c.h.b16 %v116
    %v1247 = vunpack.c.l.b16 %v117
    %v1248 = vunpack.c.h.b16 %v117
    %v1249 = vunpack.c.l.b16 %v118
    %v1250 = vunpack.c.h.b16 %v118
    %v1251 = vunpack.c.l.b16 %v119
    %v1252 = vunpack.c.h.b16 %v119
    %v1253 = vunpack.c.l.b16 %v120
    %v1254 = vunpack.c.h.b16 %v120
    %v1255 = vunpack.c.l.b16 %v121
    %v1256 = vunpack.c.h.b16 %v121
    %v1257 = vunpack.c.l.b16 %v122
    %v1258 = vunpack.c.h.b16 %v122
    %v1259 = vunpack.c.l.b16 %v123
    %v1260 = vunpack.c.h.b16 %v123
    %v1261 = vunpack.c.l.b16 %v124
    %v1262 = vunpack.c.h.b16 %v124
    %v1263 = vunpack.c.l.b16 %v125
    %v1264 = vunpack.c.h.b16 %v125
    %v1265 = vunpack.c.l.b16 %v126
    %v1266 = vunpack.c.h.b16 %v126
    %v1267 = vunpack.c.l.b16 %v127
    %v1268 = vunpack.c.h.b16 %v127
    %v1269 = vunpack.c.l.b16 %v128
    %v1270 = vunpack.c.h.b16 %v128
    %v1271 = vunpack.c.l.b16 %v129
    %v1272 = vunpack.c.h.b16 %v129
    %v1273 = vunpack.c.l.b16 %v130
    %v1274 = vunpack.c.h.b16 %v130
    %v1275 = vunpack.c.l.b16 %v131
    %v1276 = vunpack.c.h.b16 %v131
    %v1277 = vunpack.c.l.b16 %v132
    %v1278 = vunpack.c.h.b16 %v132
    %v1279 = vunpack.c.l.b16 %v133
    %v1280 = vunpack.c.h.b16 %v133
    %v1281 = vunpack.c.l.b16 %v134
    %v1282 = vunpack.c.h.b16 %v134
    %v1283 = vunpack.c.l.b16 %v135
    %v1284 = vunpack.c.h.b16 %v135
    %v1285 = vunpack.c.l.b16 %v136
    %v1286 = vunpack.c.h.b16 %v136
    %v1287 = vunpack.c.l.b16 %v137
    %v1288 = vunpack.c.h.b16 %v137
    %v1289 = vunpack.c.l.b16 %v138
    %v1290 = vunpack.c.h.b16 %v138
    %v1291 = vunpack.c.l.b16 %v139
    %v1292 = vunpack.c.h.b16 %v139
    %v1293 = vunpack.c.l.b16 %v140
    %v1294 = vunpack.c.h.b16 %v140
    %v1295 = vunpack.c.l.b16 %v141
    %v1296 = vunpack.c.h.b16 %v141
    %v1297 = vunpack.c.l.b16 %v142
    %v1298 = vunpack.c.h.b16 %v142
    %v1299 = vunpack.c.l.b16 %v143
    %v1300 = vunpack.c.h.b16 %v143
    %v1301 = vunpack.c.l.b16 %v144
    %v1302 = vunpack.c.h.b16 %v144
    %v1303 = vunpack.c.l.b16 %v145
    %v1304 = vunpack.c.h.b16 %v145
    %v1305 = vunpack.c.l.b16 %v146
    %v1306 = vunpack.c.h.b16 %v146
    %v1307 = vunpack.c.l.b16 %v147
    %v1308 = vunpack.c.h.b16 %v147
    %v1309 = vunpack.c.l.b16 %v148
    %v1310 = vunpack.c.h.b16 %v148
    %v1311 = vunpack.c.l.b16 %v149
    %v1312 = vunpack.c.h.b16 %v149
    %v1313 = vunpack.c.l.b16 %v150
    %v1314 = vunpack.c.h.b16 %v150
    %v1315 = vunpack.c.l.b16 %v151
    %v1316 = vunpack.c.h.b16 %v151
    %v1317 = vunpack.c.l.b16 %v152
    %v1318 = vunpack.c.h.b16 %v152
    %v1319 = vunpack.c.l.b16 %v153
    %v1320 = vunpack.c.h.b16 %v153
    %v1321 = vunpack.c.l.b16 %v154
    %v1322 = vunpack.c.h.b16 %v154
    %v1323 = vunpack.c.l.b16 %v155
    %v1324 = vunpack.c.h.b16 %v155
    %v1325 = vunpack.c.l.b16 %v156
    %v1326 = vunpack.c.h.b16 %v156
    %v1327 = vunpack.c.l.b16 %v157
    %v1328 = vunpack.c.h.b16 %v157
    %v1329 = vunpack.c.l.b16 %v158
    %v1330 = vunpack.c.h.b16 %v158
    %v1331 = vunpack.c.l.b16 %v159
    %v1332 = vunpack.c.h.b16 %v159
    %v1333 = vunpack.c.l.b16 %v160
    %v1334 = vunpack.c.h.b16 %v160
    %v1335 = vunpack.c.l.b16 %v161
    %v1336 = vunpack.c.h.b16 %v161
    %v1337 = vunpack.c.l.b16 %v162
    %v1338 = vunpack.c.h.b16 %v162
    %v1339 = vunpack.c.l.b16 %v163
    %v1340 = vunpack.c.h.b16 %v163
    %v1341 = vunpack.c.l.b16 %v164
    %v1342 = vunpack.c.h.b16 %v164
    %v1343 = vunpack.c.l.b16 %v165
    %v1344 = vunpack.c.h.b16 %v165
    %v1345 = vunpack.c.l.b16 %v166
    %v1346 = vunpack.c.h.b16 %v166
    %v1347 = vunpack.c.l.b16 %v167
    %v1348 = vunpack.c.h.b16 %v167
    %v1349 = vunpack.c.l.b16 %v168
    %v1350 = vunpack.c.h.b16 %v168
    %v1351 = vunpack.c.l.b16 %v169
    %v1352 = vunpack.c.h.b16 %v169
    %v1353 = vunpack.c.l.b16 %v170
    %v1354 = vunpack.c.h.b16 %v170
    %v1355 = vunpack.c.l.b16 %v171
    %v1356 = vunpack.c.h.b16 %v171
    %v1357 = vunpack.c.l.b16 %v172
    %v1358 = vunpack.c.h.b16 %v172
    %v1359 = vunpack.c.l.b16 %v173
    %v1360 = vunpack.c.h.b16 %v173
    %v1361 = vunpack.c.l.b16 %v174
    %v1362 = vunpack.c.h.b16 %v174
    %v1363 = vunpack.c.l.b16 %v175
    %v1364 = vunpack.c.h.b16 %v175
    %v1365 = vunpack.c.l.b16 %v176
    %v1366 = vunpack.c.h.b16 %v176
    %v1367 = vunpack.c.l.b16 %v177
    %v1368 = vunpack.c.h.b16 %v177
    %v1369 = vunpack.c.l.b16 %v178
    %v1370 = vunpack.c.h.b16 %v178
    %v1371 = vunpack.c.l.b16 %v179
    %v1372 = vunpack.c.h.b16 %v179
    %v1373 = vunpack.c.l.b16 %v180
    %v1374 = vunpack.c.h.b16 %v180
    %v1375 = vunpack.c.l.b16 %v181
    %v1376 = vunpack.c.h.b16 %v181
    %v1377 = vunpack.c.l.b16 %v182
    %v1378 = vunpack.c.h.b16 %v182
    %v1379 = vunpack.c.l.b16 %v183
    %v1380 = vunpack.c.h.b16 %v183
    %v1381 = vunpack.c.l.b16 %v184
    %v1382 = vunpack.c.h.b16 %v184
    %v1383 = vunpack.c.l.b16 %v185
    %v1384 = vunpack.c.h.b16 %v185
    %v1385 = vunpack.c.l.b16 %v186
    %v1386 = vunpack.c.h.b16 %v186
    %v1387 = vunpack.c.l.b16 %v187
    %v1388 = vunpack.c.h.b16 %v187
    %v1389 = vunpack.c.l.b16 %v188
    %v1390 = vunpack.c.h.b16 %v188
    %v1391 = vunpack.c.l.b16 %v189
    %v1392 = vunpack.c.h.b16 %v189
    %v1393 = vunpack.c.l.b16 %v190
    %v1394 = vunpack.c.h.b16 %v190
    %v1395 = vunpack.c.l.b16 %v191
    %v1396 = vunpack.c.h.b16 %v191
    %v1397 = vunpack.c.l.b16 %v192
    %v1398 = vunpack.c.h.b16 %v192
    %v1399 = vunpack.c.l.b16 %v193
    %v1400 = vunpack.c.h.b16 %v193
    %v1401 = vunpack.c.l.b16 %v194
    %v1402 = vunpack.c.h.b16 %v194
    %v1403 = vunpack.c.l.b16 %v195
    %v1404 = vunpack.c.h.b16 %v195
    %v1405 = vunpack.c.l.b16 %v196
    %v1406 = vunpack.c.h.b16 %v196
    %v1407 = vunpack.c.l.b16 %v197
    %v1408 = vunpack.c.h.b16 %v197
    %v1409 = vunpack.c.l.b16 %v198
    %v1410 = vunpack.c.h.b16 %v198
    %v1411 = vunpack.c.l.b16 %v199
    %v1412 = vunpack.c.h.b16 %v199
    %v1413 = vunpack.c.l.b16 %v200
    %v1414 = vunpack.c.h.b16 %v200
    %v1415 = vunpack.c.l.b16 %v201
    %v1416 = vunpack.c.h.b16 %v201
    %v1417 = vunpack.c.l.b16 %v202
    %v1418 = vunpack.c.h.b16 %v202
    %v1419 = vunpack.c.l.b16 %v203
    %v1420 = vunpack.c.h.b16 %v203
    %v1421 = vunpack.c.l.b16 %v204
    %v1422 = vunpack.c.h.b16 %v204
    %v1423 = vunpack.c.l.b16 %v205
    %v1424 = vunpack.c.h.b16 %v205
    %v1425 = vunpack.c.l.b16 %v206
    %v1426 = vunpack.c.h.b16 %v206
    %v1427 = vunpack.c.l.b16 %v207
    %v1428 = vunpack.c.h.b16 %v207
    %v1429 = vunpack.c.l.b16 %v208
    %v1430 = vunpack.c.h.b16 %v208
    %v1431 = vunpack.c.l.b16 %v209
    %v1432 = vunpack.c.h.b16 %v209
    %v1433 = vunpack.c.l.b16 %v210
    %v1434 = vunpack.c.h.b16 %v210
    %v1435 = vunpack.c.l.b16 %v211
    %v1436 = vunpack.c.h.b16 %v211
    %v1437 = vunpack.c.l.b16 %v212
    %v1438 = vunpack.c.h.b16 %v212
    %v1439 = vunpack.c.l.b16 %v213
    %v1440 = vunpack.c.h.b16 %v213
    %v1441 = vunpack.c.l.b16 %v214
    %v1442 = vunpack.c.h.b16 %v214
    %v1443 = vunpack.c.l.b16 %v215
    %v1444 = vunpack.c.h.b16 %v215
    %v1445 = vunpack.c.l.b16 %v216
    %v1446 = vunpack.c.h.b16 %v216
    %v1447 = vunpack.c.l.b16 %v217
    %v1448 = vunpack.c.h.b16 %v217
    %v1449 = vunpack.c.l.b16 %v218
    %v1450 = vunpack.c.h.b16 %v218
    %v1451 = vunpack.c.l.b16 %v219
    %v1452 = vunpack.c.h.b16 %v219
    %v1453 = vunpack.c.l.b16 %v220
    %v1454 = vunpack.c.h.b16 %v220
    %v1455 = vunpack.c.l.b16 %v221
    %v1456 = vunpack.c.h.b16 %v221
    %v1457 = vunpack.c.l.b16 %v222
    %v1458 = vunpack.c.h.b16 %v222
    %v1459 = vunpack.c.l.b16 %v223
    %v1460 = vunpack.c.h.b16 %v223
    %v1461 = vunpack.c.l.b16 %v224
    %v1462 = vunpack.c.h.b16 %v224
    %v1463 = vunpack.c.l.b16 %v225
    %v1464 = vunpack.c.h.b16 %v225
    %v1465 = vunpack.c.l.b16 %v226
    %v1466 = vunpack.c.h.b16 %v226
    %v1467 = vunpack.c.l.b16 %v227
    %v1468 = vunpack.c.h.b16 %v227
    %v1469 = vunpack.c.l.b16 %v228
    %v1470 = vunpack.c.h.b16 %v228
    %v1471 = vunpack.c.l.b16 %v229
    %v1472 = vunpack.c.h.b16 %v229
    %v1473 = vunpack.c.l.b16 %v230
    %v1474 = vunpack.c.h.b16 %v230
    %v1475 = vunpack.c.l.b16 %v231
    %v1476 = vunpack.c.h.b16 %v231
    %v1477 = vunpack.c.l.b16 %v232
    %v1478 = vunpack.c.h.b16 %v232
    %v1479 = vunpack.c.l.b16 %v233
    %v1480 = vunpack.c.h.b16 %v233
    %v1481 = vunpack.c.l.b16 %v234
    %v1482 = vunpack.c.h.b16 %v234
    %v1483 = vunpack.c.l.b16 %v235
    %v1484 = vunpack.c.h.b16 %v235
    %v1485 = vunpack.c.l.b16 %v236
    %v1486 = vunpack.c.h.b16 %v236
    %v1487 = vunpack.c.l.b16 %v237
    %v1488 = vunpack.c.h.b16 %v237
    %v1489 = vunpack.c.l.b16 %v238
    %v1490 = vunpack.c.h.b16 %v238
    %v1491 = vunpack.c.l.b16 %v239
    %v1492 = vunpack.c.h.b16 %v239
    %v1493 = vunpack.c.l.b16 %v240
    %v1494 = vunpack.c.h.b16 %v240
    %v1495 = vunpack.c.l.b16 %v241
    %v1496 = vunpack.c.h.b16 %v241
    %v1497 = vunpack.c.l.b16 %v242
    %v1498 = vunpack.c.h.b16 %v242
    %v1499 = vunpack.c.l.b16 %v243
    %v1500 = vunpack.c.h.b16 %v243
    %v1501 = vunpack.c.l.b16 %v244
    %v1502 = vunpack.c.h.b16 %v244
    %v1503 = vunpack.c.l.b16 %v245
    %v1504 = vunpack.c.h.b16 %v245
    %v1505 = vunpack.c.l.b16 %v246
    %v1506 = vunpack.c.h.b16 %v246
    %v1507 = vunpack.c.l.b16 %v247
    %v1508 = vunpack.c.h.b16 %v247
    %v1509 = vunpack.c.l.b16 %v248
    %v1510 = vunpack.c.h.b16 %v248
    %v1511 = vunpack.c.l.b16 %v249
    %v1512 = vunpack.c.h.b16 %v249
    %v1513 = vunpack.c.l.b16 %v250
    %v1514 = vunpack.c.h.b16 %v250
    %v1515 = vunpack.c.l.b16 %v251
    %v1516 = vunpack.c.h.b16 %v251
    %v1517 = vunpack.c.l.b16 %v252
    %v1518 = vunpack.c.h.b16 %v252
    %v1519 = vunpack.c.l.b16 %v253
    %v1520 = vunpack.c.h.b16 %v253
    %v1521 = vunpack.c.l.b16 %v254
    %v1522 = vunpack.c.h.b16 %v254
    %v1523 = vunpack.c.l.b16 %v255
    %v1524 = vunpack.c.h.b16 %v255
    %v1525 = vunpack.c.l.b16 %v256
    %v1526 = vunpack.c.h.b16 %v256
    %v1527 = vunpack.c.l.b16 %v257
    %v1528 = vunpack.c.h.b16 %v257
    %v1529 = vunpack.c.l.b16 %v258
    %v1530 = vunpack.c.h.b16 %v258
    %v1531 = vunpack.c.l.b16 %v259
    %v1532 = vunpack.c.h.b16 %v259
    %v1533 = vunpack.c.l.b16 %v260
    %v1534 = vunpack.c.h.b16 %v260
    %v1535 = vunpack.c.l.b16 %v261
    %v1536 = vunpack.c.h.b16 %v261
    %v1537 = vunpack.c.l.b16 %v262
    %v1538 = vunpack.c.h.b16 %v262
    %v1539 = vunpack.c.l.b16 %v263
    %v1540 = vunpack.c.h.b16 %v263
    %v1541 = vunpack.c.l.b16 %v264
    %v1542 = vunpack.c.h.b16 %v264
    %v1543 = vunpack.c.l.b16 %v265
    %v1544 = vunpack.c.h.b16 %v265
    %v1545 = vunpack.c.l.b16 %v266
    %v1546 = vunpack.c.h.b16 %v266
    %v1547 = vunpack.c.l.b16 %v267
    %v1548 = vunpack.c.h.b16 %v267
    %v1549 = vunpack.c.l.b16 %v268
    %v1550 = vunpack.c.h.b16 %v268
    %v1551 = vunpack.c.l.b16 %v269
    %v1552 = vunpack.c.h.b16 %v269
    %v1553 = vunpack.c.l.b16 %v270
    %v1554 = vunpack.c.h.b16 %v270
    %v1555 = vunpack.c.l.b16 %v271
    %v1556 = vunpack.c.h.b16 %v271
    %v1557 = vunpack.c.l.b16 %v272
    %v1558 = vunpack.c.h.b16 %v272
    %v1559 = vunpack.c.l.b16 %v273
    %v1560 = vunpack.c.h.b16 %v273
    %v1561 = vunpack.c.l.b16 %v274
    %v1562 = vunpack.c.h.b16 %v274
    %v1563 = vunpack.c.l.b16 %v275
    %v1564 = vunpack.c.h.b16 %v275
    %v1565 = vunpack.c.l.b16 %v276
    %v1566 = vunpack.c.h.b16 %v276
    %v1567 = vunpack.c.l.b16 %v277
    %v1568 = vunpack.c.h.b16 %v277
    %v1569 = vunpack.c.l.b16 %v278
    %v1570 = vunpack.c.h.b16 %v278
    %v1571 = vunpack.c.l.b16 %v279
    %v1572 = vunpack.c.h.b16 %v279
    %v1573 = vunpack.c.l.b16 %v280
    %v1574 = vunpack.c.h.b16 %v280
    %v1575 = vunpack.c.l.b16 %v281
    %v1576 = vunpack.c.h.b16 %v281
    %v1577 = vunpack.c.l.b16 %v282
    %v1578 = vunpack.c.h.b16 %v282
    %v1579 = vunpack.c.l.b16 %v283
    %v1580 = vunpack.c.h.b16 %v283
    %v1581 = vunpack.c.l.b16 %v284
    %v1582 = vunpack.c.h.b16 %v284
    %v1583 = vunpack.c.l.b16 %v285
    %v1584 = vunpack.c.h.b16 %v285
    %v1585 = vunpack.c.l.b16 %v286
    %v1586 = vunpack.c.h.b16 %v286
    %v1587 = vunpack.c.l.b16 %v287
    %v1588 = vunpack.c.h.b16 %v287
    %v1589 = vunpack.c.l.b16 %v288
    %v1590 = vunpack.c.h.b16 %v288
    %v1591 = vunpack.c.l.b16 %v289
    %v1592 = vunpack.c.h.b16 %v289
    %v1593 = vunpack.c.l.b16 %v290
    %v1594 = vunpack.c.h.b16 %v290
    %v1595 = vunpack.c.l.b16 %v291
    %v1596 = vunpack.c.h.b16 %v291
    %v1597 = vunpack.c.l.b16 %v292
    %v1598 = vunpack.c.h.b16 %v292
    %v1599 = vunpack.c.l.b16 %v293
    %v1600 = vunpack.c.h.b16 %v293
    %v1601 = vunpack.c.l.b16 %v294
    %v1602 = vunpack.c.h.b16 %v294
    %v1603 = vunpack.c.l.b16 %v295
    %v1604 = vunpack.c.h.b16 %v295
    %v1605 = vunpack.c.l.b16 %v296
    %v1606 = vunpack.c.h.b16 %v296
    %v1607 = vunpack.c.l.b16 %v297
    %v1608 = vunpack.c.h.b16 %v297
    %v1609 = vunpack.c.l.b16 %v298
    %v1610 = vunpack.c.h.b16 %v298
    %v1611 = vunpack.c.l.b16 %v299
    %v1612 = vunpack.c.h.b16 %v299
    %v1613 = vunpack.c.l.b16 %v300
    %v1614 = vunpack.c.h.b16 %v300
    %v1615 = vunpack.c.l.b16 %v301
    %v1616 = vunpack.c.h.b16 %v301
    %v1617 = vunpack.c.l.b16 %v302
    %v1618 = vunpack.c.h.b16 %v302
    %v1619 = vunpack.c.l.b16 %v303
    %v1620 = vunpack.c.h.b16 %v303
    %v1621 = vunpack.c.l.b16 %v304
    %v1622 = vunpack.c.h.b16 %v304
    %v1623 = vunpack.c.l.b16 %v305
    %v1624 = vunpack.c.h.b16 %v305
    %v1625 = vunpack.c.l.b16 %v306
    %v1626 = vunpack.c.h.b16 %v306
    %v1627 = vunpack.c.l.b16 %v307
    %v1628 = vunpack.c.h.b16 %v307
    %v1629 = vunpack.c.l.b16 %v308
    %v1630 = vunpack.c.h.b16 %v308
    %v1631 = vunpack.c.l.b16 %v309
    %v1632 = vunpack.c.h.b16 %v309
    %v1633 = vunpack.c.l.b16 %v310
    %v1634 = vunpack.c.h.b16 %v310
    %v1635 = vunpack.c.l.b16 %v311
    %v1636 = vunpack.c.h.b16 %v311
    %v1637 = vunpack.c.l.b16 %v312
    %v1638 = vunpack.c.h.b16 %v312
    %v1639 = vunpack.c.l.b16 %v313
    %v1640 = vunpack.c.h.b16 %v313
    %v1641 = vunpack.c.l.b16 %v314
    %v1642 = vunpack.c.h.b16 %v314
    %v1643 = vunpack.c.l.b16 %v315
    %v1644 = vunpack.c.h.b16 %v315
    %v1645 = vunpack.c.l.b16 %v316
    %v1646 = vunpack.c.h.b16 %v316
    %v1647 = vunpack.c.l.b16 %v317
    %v1648 = vunpack.c.h.b16 %v317
    %v1649 = vunpack.c.l.b16 %v318
    %v1650 = vunpack.c.h.b16 %v318
    %v1651 = vunpack.c.l.b16 %v319
    %v1652 = vunpack.c.h.b16 %v319
    %v1653 = vunpack.c.l.b16 %v320
    %v1654 = vunpack.c.h.b16 %v320
    %v1655 = vunpack.c.l.b16 %v321
    %v1656 = vunpack.c.h.b16 %v321
    %v1657 = vunpack.c.l.b16 %v322
    %v1658 = vunpack.c.h.b16 %v322
    %v1659 = vunpack.c.l.b16 %v323
    %v1660 = vunpack.c.h.b16 %v323
    %v1661 = vunpack.c.l.b16 %v324
    %v1662 = vunpack.c.h.b16 %v324
    %v1663 = vunpack.c.l.b16 %v325
    %v1664 = vunpack.c.h.b16 %v325
    %v1665 = vunpack.c.l.b16 %v326
    %v1666 = vunpack.c.h.b16 %v326
    %v1667 = vunpack.c.l.b16 %v327
    %v1668 = vunpack.c.h.b16 %v327
    %v1669 = vunpack.c.l.b16 %v328
    %v1670 = vunpack.c.h.b16 %v328
    %v1671 = vunpack.c.l.b16 %v329
    %v1672 = vunpack.c.h.b16 %v329
    %v1673 = vunpack.c.l.b16 %v330
    %v1674 = vunpack.c.h.b16 %v330
    %v1675 = vunpack.c.l.b16 %v331
    %v1676 = vunpack.c.h.b16 %v331
    %v1677 = vunpack.c.l.b16 %v332
    %v1678 = vunpack.c.h.b16 %v332
    %v1679 = vunpack.c.l.b16 %v333
    %v1680 = vunpack.c.h.b16 %v333
    %v1681 = vunpack.c.l.b16 %v334
    %v1682 = vunpack.c.h.b16 %v334
    %v1683 = vunpack.c.l.b16 %v335
    %v1684 = vunpack.c.h.b16 %v335
    %v1685 = vunpack.c.l.b16 %v336
    %v1686 = vunpack.c.h.b16 %v336
    %v1687 = vunpack.c.l.b16 %v337
    %v1688 = vunpack.c.h.b16 %v337
    %v1689 = vunpack.c.l.b16 %v338
    %v1690 = vunpack.c.h.b16 %v338
    %v1691 = vunpack.c.l.b16 %v339
    %v1692 = vunpack.c.h.b16 %v339
    %v1693 = vunpack.c.l.b16 %v340
    %v1694 = vunpack.c.h.b16 %v340
    %v1695 = vunpack.c.l.b16 %v341
    %v1696 = vunpack.c.h.b16 %v341
    %v1697 = vunpack.c.l.b16 %v342
    %v1698 = vunpack.c.h.b16 %v342
    %v1699 = vunpack.c.l.b16 %v343
    %v1700 = vunpack.c.h.b16 %v343
    %v1701 = vunpack.c.l.b16 %v344
    %v1702 = vunpack.c.h.b16 %v344
    %v1703 = vunpack.c.l.b16 %v345
    %v1704 = vunpack.c.h.b16 %v345
    %v1705 = vunpack.c.l.b16 %v346
    %v1706 = vunpack.c.h.b16 %v346
    %v1707 = vunpack.c.l.b16 %v347
    %v1708 = vunpack.c.h.b16 %v347
    %v1709 = vunpack.c.l.b16 %v348
    %v1710 = vunpack.c.h.b16 %v348
    %v1711 = vunpack.c.l.b16 %v349
    %v1712 = vunpack.c.h.b16 %v349
    %v1713 = vunpack.c.l.b16 %v350
    %v1714 = vunpack.c.h.b16 %v350
    %v1715 = vunpack.c.l.b16 %v351
    %v1716 = vunpack.c.h.b16 %v351
    %v1717 = vunpack.c.l.b16 %v352
    %v1718 = vunpack.c.h.b16 %v352
    %v1719 = vunpack.c.l.b16 %v353
    %v1720 = vunpack.c.h.b16 %v353
    %v1721 = vunpack.c.l.b16 %v354
    %v1722 = vunpack.c.h.b16 %v354
    %v1723 = vunpack.c.l.b16 %v355
    %v1724 = vunpack.c.h.b16 %v355
    %v1725 = vunpack.c.l.b16 %v356
    %v1726 = vunpack.c.h.b16 %v356
    %v1727 = vunpack.c.l.b16 %v357
    %v1728 = vunpack.c.h.b16 %v357
    %v1729 = vunpack.c.l.b16 %v358
    %v1730 = vunpack.c.h.b16 %v358
    %v1731 = vunpack.c.l.b16 %v359
    %v1732 = vunpack.c.h.b16 %v359
    %v1733 = vunpack.c.l.b16 %v360
    %v1734 = vunpack.c.h.b16 %v360
    %v1735 = vunpack.c.l.b16 %v361
    %v1736 = vunpack.c.h.b16 %v361
    %v1737 = vunpack.c.l.b16 %v362
    %v1738 = vunpack.c.h.b16 %v362
    %v1739 = vunpack.c.l.b16 %v363
    %v1740 = vunpack.c.h.b16 %v363
    %v1741 = vunpack.c.l.b16 %v364
    %v1742 = vunpack.c.h.b16 %v364
    %v1743 = vunpack.c.l.b16 %v365
    %v1744 = vunpack.c.h.b16 %v365
    %v1745 = vunpack.c.l.b16 %v366
    %v1746 = vunpack.c.h.b16 %v366
    %v1747 = vunpack.c.l.b16 %v367
    %v1748 = vunpack.c.h.b16 %v367
    %v1749 = vunpack.c.l.b16 %v368
    %v1750 = vunpack.c.h.b16 %v368
    %v1751 = vunpack.c.l.b16 %v369
    %v1752 = vunpack.c.h.b16 %v369
    %v1753 = vunpack.c.l.b16 %v370
    %v1754 = vunpack.c.h.b16 %v370
    %v1755 = vunpack.c.l.b16 %v371
    %v1756 = vunpack.c.h.b16 %v371
    %v1757 = vunpack.c.l.b16 %v372
    %v1758 = vunpack.c.h.b16 %v372
    %v1759 = vunpack.c.l.b16 %v373
    %v1760 = vunpack.c.h.b16 %v373
    %v1761 = vunpack.c.l.b16 %v374
    %v1762 = vunpack.c.h.b16 %v374
    %v1763 = vunpack.c.l.b16 %v375
    %v1764 = vunpack.c.h.b16 %v375
    %v1765 = vunpack.c.l.b16 %v376
    %v1766 = vunpack.c.h.b16 %v376
    %v1767 = vunpack.c.l.b16 %v377
    %v1768 = vunpack.c.h.b16 %v377
    %v1769 = vunpack.c.l.b16 %v378
    %v1770 = vunpack.c.h.b16 %v378
    %v1771 = vunpack.c.l.b16 %v379
    %v1772 = vunpack.c.h.b16 %v379
    %v1773 = vunpack.c.l.b16 %v380
    %v1774 = vunpack.c.h.b16 %v380
    %v1775 = vunpack.c.l.b16 %v381
    %v1776 = vunpack.c.h.b16 %v381
    %v1777 = vunpack.c.l.b16 %v382
    %v1778 = vunpack.c.h.b16 %v382
    %v1779 = vunpack.c.l.b16 %v383
    %v1780 = vunpack.c.h.b16 %v383
    %v1781 = vunpack.c.l.b16 %v384
    %v1782 = vunpack.c.h.b16 %v384
    %v1783 = vunpack.c.l.b16 %v385
    %v1784 = vunpack.c.h.b16 %v385
    %v1785 = vunpack.c.l.b16 %v386
    %v1786 = vunpack.c.h.b16 %v386
    %v1787 = vunpack.c.l.b16 %v387
    %v1788 = vunpack.c.h.b16 %v387
    %v1789 = vunpack.c.l.b16 %v388
    %v1790 = vunpack.c.h.b16 %v388
    %v1791 = vunpack.c.l.b16 %v389
    %v1792 = vunpack.c.h.b16 %v389
    %v1793 = vunpack.c.l.b16 %v390
    %v1794 = vunpack.c.h.b16 %v390
    %v1795 = vunpack.c.l.b16 %v391
    %v1796 = vunpack.c.h.b16 %v391
    %v1797 = vunpack.c.l.b16 %v392
    %v1798 = vunpack.c.h.b16 %v392
    %v1799 = vunpack.c.l.b16 %v393
    %v1800 = vunpack.c.h.b16 %v393
    %v1801 = vunpack.c.l.b16 %v394
    %v1802 = vunpack.c.h.b16 %v394
    %v1803 = vunpack.c.l.b16 %v395
    %v1804 = vunpack.c.h.b16 %v395
    %v1805 = vunpack.c.l.b16 %v396
    %v1806 = vunpack.c.h.b16 %v396
    %v1807 = vunpack.c.l.b16 %v397
    %v1808 = vunpack.c.h.b16 %v397
    %v1809 = vunpack.c.l.b16 %v398
    %v1810 = vunpack.c.h.b16 %v398
    %v1811 = vunpack.c.l.b16 %v399
    %v1812 = vunpack.c.h.b16 %v399
    %v1813 = vunpack.c.l.b16 %v400
    %v1814 = vunpack.c.h.b16 %v400
    %v1815 = vunpack.c.l.b16 %v401
    %v1816 = vunpack.c.h.b16 %v401
    %v1817 = vunpack.c.l.b16 %v402
    %v1818 = vunpack.c.h.b16 %v402
    %v1819 = vunpack.c.l.b16 %v403
    %v1820 = vunpack.c.h.b16 %v403
    %v1821 = vunpack.c.l.b16 %v404
    %v1822 = vunpack.c.h.b16 %v404
    %v1823 = vunpack.c.l.b16 %v405
    %v1824 = vunpack.c.h.b16 %v405
    %v1825 = vunpack.c.l.b16 %v406
    %v1826 = vunpack.c.h.b16 %v406
    %v1827 = vunpack.c.l.b16 %v407
    %v1828 = vunpack.c.h.b16 %v407
    %v1829 = vunpack.c.l.b16 %v408
    %v1830 = vunpack.c.h.b16 %v408
    %v1831 = vunpack.c.l.b16 %v409
    %v1832 = vunpack.c.h.b16 %v409
    %v1833 = vunpack.c.l.b16 %v410
    %v1834 = vunpack.c.h.b16 %v410
    %v1835 = vunpack.c.l.b16 %v411
    %v1836 = vunpack.c.h.b16 %v411
    %v1837 = vunpack.c.l.b16 %v412
    %v1838 = vunpack.c.h.b16 %v412
    %v1839 = vunpack.c.l.b16 %v413
    %v1840 = vunpack.c.h.b16 %v413
    %v1841 = vunpack.c.l.b16 %v414
    %v1842 = vunpack.c.h.b16 %v414
    %v1843 = vunpack.c.l.b16 %v415
    %v1844 = vunpack.c.h.b16 %v415
    %v1845 = vunpack.c.l.b16 %v416
    %v1846 = vunpack.c.h.b16 %v416
    %v1847 = vunpack.c.l.b16 %v417
    %v1848 = vunpack.c.h.b16 %v417
    %v1849 = vunpack.c.l.b16 %v418
    %v1850 = vunpack.c.h.b16 %v418
    %v1851 = vunpack.c.l.b16 %v419
    %v1852 = vunpack.c.h.b16 %v419
    %v1853 = vunpack.c.l.b16 %v420
    %v1854 = vunpack.c.h.b16 %v420
    %v1855 = vunpack.c.l.b16 %v421
    %v1856 = vunpack.c.h.b16 %v421
    %v1857 = vunpack.c.l.b16 %v422
    %v1858 = vunpack.c.h.b16 %v422
    %v1859 = vunpack.c.l.b16 %v423
    %v1860 = vunpack.c.h.b16 %v423
    %v1861 = vunpack.c.l.b16 %v424
    %v1862 = vunpack.c.h.b16 %v424
    %v1863 = vunpack.c.l.b16 %v425
    %v1864 = vunpack.c.h.b16 %v425
    %v1865 = vunpack.c.l.b16 %v426
    %v1866 = vunpack.c.h.b16 %v426
    %v1867 = vunpack.c.l.b16 %v427
    %v1868 = vunpack.c.h.b16 %v427
    %v1869 = vunpack.c.l.b16 %v428
    %v1870 = vunpack.c.h.b16 %v428
    %v1871 = vunpack.c.l.b16 %v429
    %v1872 = vunpack.c.h.b16 %v429
    %v1873 = vunpack.c.l.b16 %v430
    %v1874 = vunpack.c.h.b16 %v430
    %v1875 = vunpack.c.l.b16 %v431
    %v1876 = vunpack.c.h.b16 %v431
    %v1877 = vunpack.c.l.b16 %v432
    %v1878 = vunpack.c.h.b16 %v432
    %v1879 = vunpack.c.l.b16 %v433
    %v1880 = vunpack.c.h.b16 %v433
    %v1881 = vunpack.c.l.b16 %v434
    %v1882 = vunpack.c.h.b16 %v434
    %v1883 = vunpack.c.l.b16 %v435
    %v1884 = vunpack.c.h.b16 %v435
    %v1885 = vunpack.c.l.b16 %v436
    %v1886 = vunpack.c.h.b16 %v436
    %v1887 = vunpack.c.l.b16 %v437
    %v1888 = vunpack.c.h.b16 %v437
    %v1889 = vunpack.c.l.b16 %v438
    %v1890 = vunpack.c.h.b16 %v438
    %v1891 = vunpack.c.l.b16 %v439
    %v1892 = vunpack.c.h.b16 %v439
    %v1893 = vunpack.c.l.b16 %v440
    %v1894 = vunpack.c.h.b16 %v440
    %v1895 = vunpack.c.l.b16 %v441
    %v1896 = vunpack.c.h.b16 %v441
    %v1897 = vunpack.c.l.b16 %v442
    %v1898 = vunpack.c.h.b16 %v442
    %v1899 = vunpack.c.l.b16 %v443
    %v1900 = vunpack.c.h.b16 %v443
    %v1901 = vunpack.c.l.b16 %v444
    %v1902 = vunpack.c.h.b16 %v444
    %v1903 = vunpack.c.l.b16 %v445
    %v1904 = vunpack.c.h.b16 %v445
    %v1905 = vunpack.c.l.b16 %v446
    %v1906 = vunpack.c.h.b16 %v446
    %v1907 = vunpack.c.l.b16 %v447
    %v1908 = vunpack.c.h.b16 %v447
    %v1909 = vunpack.c.l.b16 %v448
    %v1910 = vunpack.c.h.b16 %v448
    %v1911 = vunpack.c.l.b16 %v449
    %v1912 = vunpack.c.h.b16 %v449
    %v1913 = vunpack.c.l.b16 %v450
    %v1914 = vunpack.c.h.b16 %v450
    %v1915 = vunpack.c.l.b16 %v451
    %v1916 = vunpack.c.h.b16 %v451
    %v1917 = vunpack.c.l.b16 %v452
    %v1918 = vunpack.c.h.b16 %v452
    %v1919 = vunpack.c.l.b16 %v453
    %v1920 = vunpack.c.h.b16 %v453
    %v1921 = vunpack.c.l.b16 %v454
    %v1922 = vunpack.c.h.b16 %v454
    %v1923 = vunpack.c.l.b16 %v455
    %v1924 = vunpack.c.h.b16 %v455
    %v1925 = vunpack.c.l.b16 %v456
    %v1926 = vunpack.c.h.b16 %v456
    %v1927 = vunpack.c.l.b16 %v457
    %v1928 = vunpack.c.h.b16 %v457
    %v1929 = vunpack.c.l.b16 %v458
    %v1930 = vunpack.c.h.b16 %v458
    %v1931 = vunpack.c.l.b16 %v459
    %v1932 = vunpack.c.h.b16 %v459
    %v1933 = vunpack.c.l.b16 %v460
    %v1934 = vunpack.c.h.b16 %v460
    %v1935 = vunpack.c.l.b16 %v461
    %v1936 = vunpack.c.h.b16 %v461
    %v1937 = vunpack.c.l.b16 %v462
    %v1938 = vunpack.c.h.b16 %v462
    %v1939 = vunpack.c.l.b16 %v463
    %v1940 = vunpack.c.h.b16 %v463
    %v1941 = vunpack.c.l.b16 %v464
    %v1942 = vunpack.c.h.b16 %v464
    %v1943 = vunpack.c.l.b16 %v465
    %v1944 = vunpack.c.h.b16 %v465
    %v1945 = vunpack.c.l.b16 %v466
    %v1946 = vunpack.c.h.b16 %v466
    %v1947 = vunpack.c.l.b16 %v467
    %v1948 = vunpack.c.h.b16 %v467
    %v1949 = vunpack.c.l.b16 %v468
    %v1950 = vunpack.c.h.b16 %v468
    %v1951 = vunpack.c.l.b16 %v469
    %v1952 = vunpack.c.h.b16 %v469
    %v1953 = vunpack.c.l.b16 %v470
    %v1954 = vunpack.c.h.b16 %v470
    %v1955 = vunpack.c.l.b16 %v471
    %v1956 = vunpack.c.h.b16 %v471
    %v1957 = vunpack.c.l.b16 %v472
    %v1958 = vunpack.c.h.b16 %v472
    %v1959 = vunpack.c.l.b16 %v473
    %v1960 = vunpack.c.h.b16 %v473
    %v1961 = vunpack.c.l.b16 %v474
    %v1962 = vunpack.c.h.b16 %v474
    %v1963 = vunpack.c.l.b16 %v475
    %v1964 = vunpack.c.h.b16 %v475
    %v1965 = vunpack.c.l.b16 %v476
    %v1966 = vunpack.c.h.b16 %v476
    %v1967 = vunpack.c.l.b16 %v477
    %v1968 = vunpack.c.h.b16 %v477
    %v1969 = vunpack.c.l.b16 %v478
    %v1970 = vunpack.c.h.b16 %v478
    %v1971 = vunpack.c.l.b16 %v479
    %v1972 = vunpack.c.h.b16 %v479
    %v1973 = vunpack.c.l.b16 %v480
    %v1974 = vunpack.c.h.b16 %v480
    %v1975 = vunpack.c.l.b16 %v481
    %v1976 = vunpack.c.h.b16 %v481
    %v1977 = vunpack.c.l.b16 %v482
    %v1978 = vunpack.c.h.b16 %v482
    %v1979 = vunpack.c.l.b16 %v483
    %v1980 = vunpack.c.h.b16 %v483
    %v1981 = vunpack.c.l.b16 %v484
    %v1982 = vunpack.c.h.b16 %v484
    %v1983 = vunpack.c.l.b16 %v485
    %v1984 = vunpack.c.h.b16 %v485
    %v1985 = vunpack.c.l.b16 %v486
    %v1986 = vunpack.c.h.b16 %v486
    %v1987 = vunpack.c.l.b16 %v487
    %v1988 = vunpack.c.h.b16 %v487
    %v1989 = vunpack.c.l.b16 %v488
    %v1990 = vunpack.c.h.b16 %v488
    %v1991 = vunpack.c.l.b16 %v489
    %v1992 = vunpack.c.h.b16 %v489
    %v1993 = vunpack.c.l.b16 %v490
    %v1994 = vunpack.c.h.b16 %v490
    %v1995 = vunpack.c.l.b16 %v491
    %v1996 = vunpack.c.h.b16 %v491
    %v1997 = vunpack.c.l.b16 %v492
    %v1998 = vunpack.c.h.b16 %v492
    %v1999 = vunpack.c.l.b16 %v493
    %v2000 = vunpack.c.h.b16 %v493
    %v2001 = vunpack.c.l.b16 %v494
    %v2002 = vunpack.c.h.b16 %v494
    %v2003 = vunpack.c.l.b16 %v495
    %v2004 = vunpack.c.h.b16 %v495
    %v2005 = vunpack.c.l.b16 %v496
    %v2006 = vunpack.c.h.b16 %v496
    %v2007 = vunpack.c.l.b16 %v497
    %v2008 = vunpack.c.h.b16 %v497
    %v2009 = vunpack.c.l.b16 %v498
    %v2010 = vunpack.c.h.b16 %v498
    %v2011 = vunpack.c.l.b16 %v499
    %v2012 = vunpack.c.h.b16 %v499
    %v2013 = vunpack.c.l.b16 %v500
    %v2014 = vunpack.c.h.b16 %v500
    %v2015 = vunpack.c.l.b16 %v501
    %v2016 = vunpack.c.h.b16 %v501
    %v2017 = vunpack.c.l.b16 %v502
    %v2018 = vunpack.c.h.b16 %v502
    %v2019 = vunpack.c.l.b16 %v503
    %v2020 = vunpack.c.h.b16 %v503
    %v2021 = vunpack.c.l.b16 %v504
    %v2022 = vunpack.c.h.b16 %v504
    %v2023 = vunpack.c.l.b16 %v505
    %v2024 = vunpack.c.h.b16 %v505
    %v2025 = vunpack.c.l.b16 %v506
    %v2026 = vunpack.c.h.b16 %v506
    %v2027 = vunpack.c.l.b16 %v507
    %v2028 = vunpack.c.h.b16 %v507
    %v2029 = vunpack.c.l.b16 %v508
    %v2030 = vunpack.c.h.b16 %v508
    %v2031 = vunpack.c.l.b16 %v509
    %v2032 = vunpack.c.h.b16 %v509
    %v2033 = vunpack.c.l.b16 %v510
    %v2034 = vunpack.c.h.b16 %v510
    %v2035 = vunpack.c.l.b16 %v511
    %v2036 = vunpack.c.h.b16 %v511
    %v2037 = vunpack.c.l.b16 %v512
    %v2038 = vunpack.c.h.b16 %v512
    %v2039 = vunpack.c.l.b16 %v513
    %v2040 = vunpack.c.h.b16 %v513
    %v2041 = vunpack.c.l.b16 %v514
    %v2042 = vunpack.c.h.b16 %v514
    %v2043 = vunpack.c.l.b16 %v515
    %v2044 = vunpack.c.h.b16 %v515
    %v2045 = vunpack.c.l.b16 %v516
    %v2046 = vunpack.c.h.b16 %v516
    %v2047 = vunpack.c.l.b16 %v517
    %v2048 = vunpack.c.h.b16 %v517
    %v2049 = vunpack.c.l.b16 %v518
    %v2050 = vunpack.c.h.b16 %v518
    %v2051 = vunpack.c.l.b16 %v519
    %v2052 = vunpack.c.h.b16 %v519
    %v2053 = vunpack.c.l.b16 %v520
    %v2054 = vunpack.c.h.b16 %v520
    %v2055 = vunpack.c.l.b16 %v521
    %v2056 = vunpack.c.h.b16 %v521
    %v2057 = vunpack.c.l.b16 %v522
    %v2058 = vunpack.c.h.b16 %v522
    %v2059 = vunpack.c.l.b16 %v523
    %v2060 = vunpack.c.h.b16 %v523
    %v2061 = vunpack.c.l.b16 %v524
    %v2062 = vunpack.c.h.b16 %v524
    %v2063 = vunpack.c.l.b16 %v525
    %v2064 = vunpack.c.h.b16 %v525
    %v2065 = vunpack.c.l.b16 %v526
    %v2066 = vunpack.c.h.b16 %v526
    %v2067 = vunpack.c.l.b16 %v527
    %v2068 = vunpack.c.h.b16 %v527
    %v2069 = vunpack.c.l.b16 %v528
    %v2070 = vunpack.c.h.b16 %v528
    %v2071 = vunpack.c.l.b16 %v529
    %v2072 = vunpack.c.h.b16 %v529
    %v2073 = vunpack.c.l.b16 %v530
    %v2074 = vunpack.c.h.b16 %v530
    %v2075 = vunpack.c.l.b16 %v531
    %v2076 = vunpack.c.h.b16 %v531
    %v2077 = vunpack.c.l.b16 %v532
    %v2078 = vunpack.c.h.b16 %v532
    %v2079 = vunpack.c.l.b16 %v533
    %v2080 = vunpack.c.h.b16 %v533
    %v2081 = vunpack.c.l.b16 %v534
    %v2082 = vunpack.c.h.b16 %v534
    %v2083 = vunpack.c.l.b16 %v535
    %v2084 = vunpack.c.h.b16 %v535
    %v2085 = vunpack.c.l.b16 %v536
    %v2086 = vunpack.c.h.b16 %v536
    %v2087 = vunpack.c.l.b16 %v537
    %v2088 = vunpack.c.h.b16 %v537
    %v2089 = vunpack.c.l.b16 %v538
    %v2090 = vunpack.c.h.b16 %v538
    %v2091 = vunpack.c.l.b16 %v539
    %v2092 = vunpack.c.h.b16 %v539
    %v2093 = vunpack.c.l.b16 %v540
    %v2094 = vunpack.c.h.b16 %v540
    %v2095 = vunpack.c.l.b16 %v541
    %v2096 = vunpack.c.h.b16 %v541
    %v2097 = vunpack.c.l.b16 %v542
    %v2098 = vunpack.c.h.b16 %v542
    %v2099 = vunpack.c.l.b16 %v543
    %v2100 = vunpack.c.h.b16 %v543
    %v2101 = vunpack.c.l.b16 %v544
    %v2102 = vunpack.c.h.b16 %v544
    %v2103 = vunpack.c.l.b16 %v545
    %v2104 = vunpack.c.h.b16 %v545
    %v2105 = vunpack.c.l.b16 %v546
    %v2106 = vunpack.c.h.b16 %v546
    %v2107 = vunpack.c.l.b16 %v547
    %v2108 = vunpack.c.h.b16 %v547
    %v2109 = vunpack.c.l.b16 %v548
    %v2110 = vunpack.c.h.b16 %v548
    %v2111 = vunpack.c.l.b16 %v549
    %v2112 = vunpack.c.h.b16 %v549
    %v2113 = vunpack.c.l.b16 %v550
    %v2114 = vunpack.c.h.b16 %v550
    %v2115 = vunpack.c.l.b16 %v551
    %v2116 = vunpack.c.h.b16 %v551
    %v2117 = vunpack.c.l.b16 %v552
    %v2118 = vunpack.c.h.b16 %v552
    %v2119 = vunpack.c.l.b16 %v553
    %v2120 = vunpack.c.h.b16 %v553
    %v2121 = vunpack.c.l.b16 %v554
    %v2122 = vunpack.c.h.b16 %v554
    %v2123 = vunpack.c.l.b16 %v555
    %v2124 = vunpack.c.h.b16 %v555
    %v2125 = vunpack.c.l.b16 %v556
    %v2126 = vunpack.c.h.b16 %v556
    %v2127 = vunpack.c.l.b16 %v557
    %v2128 = vunpack.c.h.b16 %v557
    %v2129 = vunpack.c.l.b16 %v558
    %v2130 = vunpack.c.h.b16 %v558
    %v2131 = vunpack.c.l.b16 %v559
    %v2132 = vunpack.c.h.b16 %v559
    %v2133 = vunpack.c.l.b16 %v560
    %v2134 = vunpack.c.h.b16 %v560
    %v2135 = vunpack.c.l.b16 %v561
    %v2136 = vunpack.c.h.b16 %v561
    %v2137 = vunpack.c.l.b16 %v562
    %v2138 = vunpack.c.h.b16 %v562
    %v2139 = vunpack.c.l.b16 %v563
    %v2140 = vunpack.c.h.b16 %v563
    %v2141 = vunpack.c.l.b16 %v564
    %v2142 = vunpack.c.h.b16 %v564
    %v2143 = vunpack.c.l.b16 %v565
    %v2144 = vunpack.c.h.b16 %v565
    %v2145 = vunpack.c.l.b16 %v566
    %v2146 = vunpack.c.h.b16 %v566
    %v2147 = vunpack.c.l.b16 %v567
    %v2148 = vunpack.c.h.b16 %v567
    %v2149 = vunpack.c.l.b16 %v568
    %v2150 = vunpack.c.h.b16 %v568
    %v2151 = vunpack.c.l.b16 %v569
    %v2152 = vunpack.c.h.b16 %v569
    %v2153 = vunpack.c.l.b16 %v570
    %v2154 = vunpack.c.h.b16 %v570
    %v2155 = vunpack.c.l.b16 %v571
    %v2156 = vunpack.c.h.b16 %v571
    %v2157 = vunpack.c.l.b16 %v572
    %v2158 = vunpack.c.h.b16 %v572
    %v2159 = vunpack.c.l.b16 %v573
    %v2160 = vunpack.c.h.b16 %v573
    %v2161 = vunpack.c.l.b16 %v574
    %v2162 = vunpack.c.h.b16 %v574
    %v2163 = vunpack.c.l.b16 %v575
    %v2164 = vunpack.c.h.b16 %v575
    %v2165 = vunpack.c.l.b16 %v576
    %v2166 = vunpack.c.h.b16 %v576
    %v2167 = vunpack.c.l.b16 %v577
    %v2168 = vunpack.c.h.b16 %v577
    %v2169 = vunpack.c.l.b16 %v578
    %v2170 = vunpack.c.h.b16 %v578
    %v2171 = vunpack.c.l.b16 %v579
    %v2172 = vunpack.c.h.b16 %v579
    %v2173 = vunpack.c.l.b16 %v580
    %v2174 = vunpack.c.h.b16 %v580
    %v2175 = vunpack.c.l.b16 %v581
    %v2176 = vunpack.c.h.b16 %v581
    %v2177 = vpack.c.b16 %v1161, %v1153
    %v2178 = vpack.c.b16 %v1162, %v1154
    %v2179 = vpack.c.b16 %v1163, %v1155
    %v2180 = vpack.c.b16 %v1164, %v1156
    %v2181 = vpack.c.b16 %v1165, %v1157
    %v2182 = vpack.c.b16 %v1166, %v1158
    %v2183 = vpack.c.b16 %v1167, %v1159
    %v2184 = vpack.c.b16 %v1168, %v1160
    %v2185 = vpack.c.b16 %v1177, %v1169
    %v2186 = vpack.c.b16 %v1178, %v1170
    %v2187 = vpack.c.b16 %v1179, %v1171
    %v2188 = vpack.c.b16 %v1180, %v1172
    %v2189 = vpack.c.b16 %v1181, %v1173
    %v2190 = vpack.c.b16 %v1182, %v1174
    %v2191 = vpack.c.b16 %v1183, %v1175
    %v2192 = vpack.c.b16 %v1184, %v1176
    %v2193 = vpack.c.b16 %v1193, %v1185
    %v2194 = vpack.c.b16 %v1194, %v1186
    %v2195 = vpack.c.b16 %v1195, %v1187
    %v2196 = vpack.c.b16 %v1196, %v1188
    %v2197 = vpack.c.b16 %v1197, %v1189
    %v2198 = vpack.c.b16 %v1198, %v1190
    %v2199 = vpack.c.b16 %v1199, %v1191
    %v2200 = vpack.c.b16 %v1200, %v1192
    %v2201 = vpack.c.b16 %v1209, %v1201
    %v2202 = vpack.c.b16 %v1210, %v1202
    %v2203 = vpack.c.b16 %v1211, %v1203
    %v2204 = vpack.c.b16 %v1212, %v1204
    %v2205 = vpack.c.b16 %v1213, %v1205
    %v2206 = vpack.c.b16 %v1214, %v1206
    %v2207 = vpack.c.b16 %v1215, %v1207
    %v2208 = vpack.c.b16 %v1216, %v1208
    %v2209 = vpack.c.b16 %v1225, %v1217
    %v2210 = vpack.c.b16 %v1226, %v1218
    %v2211 = vpack.c.b16 %v1227, %v1219
    %v2212 = vpack.c.b16 %v1228, %v1220
    %v2213 = vpack.c.b16 %v1229, %v1221
    %v2214 = vpack.c.b16 %v1230, %v1222
    %v2215 = vpack.c.b16 %v1231, %v1223
    %v2216 = vpack.c.b16 %v1232, %v1224
    %v2217 = vpack.c.b16 %v1241, %v1233
    %v2218 = vpack.c.b16 %v1242, %v1234
    %v2219 = vpack.c.b16 %v1243, %v1235
    %v2220 = vpack.c.b16 %v1244, %v1236
    %v2221 = vpack.c.b16 %v1245, %v1237
    %v2222 = vpack.c.b16 %v1246, %v1238
    %v2223 = vpack.c.b16 %v1247, %v1239
    %v2224 = vpack.c.b16 %v1248, %v1240
    %v2225 = vpack.c.b16 %v1257, %v1249
    %v2226 = vpack.c.b16 %v1258, %v1250
    %v2227 = vpack.c.b16 %v1259, %v1251
    %v2228 = vpack.c.b16 %v1260, %v1252
    %v2229 = vpack.c.b16 %v1261, %v1253
    %v2230 = vpack.c.b16 %v1262, %v1254
    %v2231 = vpack.c.b16 %v1263, %v1255
    %v2232 = vpack.c.b16 %v1264, %v1256
    %v2233 = vpack.c.b16 %v1273, %v1265
    %v2234 = vpack.c.b16 %v1274, %v1266
    %v2235 = vpack.c.b16 %v1275, %v1267
    %v2236 = vpack.c.b16 %v1276, %v1268
    %v2237 = vpack.c.b16 %v1277, %v1269
    %v2238 = vpack.c.b16 %v1278, %v1270
    %v2239 = vpack.c.b16 %v1279, %v1271
    %v2240 = vpack.c.b16 %v1280, %v1272
    %v2241 = vpack.c.b16 %v1289, %v1281
    %v2242 = vpack.c.b16 %v1290, %v1282
    %v2243 = vpack.c.b16 %v1291, %v1283
    %v2244 = vpack.c.b16 %v1292, %v1284
    %v2245 = vpack.c.b16 %v1293, %v1285
    %v2246 = vpack.c.b16 %v1294, %v1286
    %v2247 = vpack.c.b16 %v1295, %v1287
    %v2248 = vpack.c.b16 %v1296, %v1288
    %v2249 = vpack.c.b16 %v1305, %v1297
    %v2250 = vpack.c.b16 %v1306, %v1298
    %v2251 = vpack.c.b16 %v1307, %v1299
    %v2252 = vpack.c.b16 %v1308, %v1300
    %v2253 = vpack.c.b16 %v1309, %v1301
    %v2254 = vpack.c.b16 %v1310, %v1302
    %v2255 = vpack.c.b16 %v1311, %v1303
    %v2256 = vpack.c.b16 %v1312, %v1304
    %v2257 = vpack.c.b16 %v1321, %v1313
    %v2258 = vpack.c.b16 %v1322, %v1314
    %v2259 = vpack.c.b16 %v1323, %v1315
    %v2260 = vpack.c.b16 %v1324, %v1316
    %v2261 = vpack.c.b16 %v1325, %v1317
    %v2262 = vpack.c.b16 %v1326, %v1318
    %v2263 = vpack.c.b16 %v1327, %v1319
    %v2264 = vpack.c.b16 %v1328, %v1320
    %v2265 = vpack.c.b16 %v1337, %v1329
    %v2266 = vpack.c.b16 %v1338, %v1330
    %v2267 = vpack.c.b16 %v1339, %v1331
    %v2268 = vpack.c.b16 %v1340, %v1332
    %v2269 = vpack.c.b16 %v1341, %v1333
    %v2270 = vpack.c.b16 %v1342, %v1334
    %v2271 = vpack.c.b16 %v1343, %v1335
    %v2272 = vpack.c.b16 %v1344, %v1336
    %v2273 = vpack.c.b16 %v1353, %v1345
    %v2274 = vpack.c.b16 %v1354, %v1346
    %v2275 = vpack.c.b16 %v1355, %v1347
    %v2276 = vpack.c.b16 %v1356, %v1348
    %v2277 = vpack.c.b16 %v1357, %v1349
    %v2278 = vpack.c.b16 %v1358, %v1350
    %v2279 = vpack.c.b16 %v1359, %v1351
    %v2280 = vpack.c.b16 %v1360, %v1352
    %v2281 = vpack.c.b16 %v1369, %v1361
    %v2282 = vpack.c.b16 %v1370, %v1362
    %v2283 = vpack.c.b16 %v1371, %v1363
    %v2284 = vpack.c.b16 %v1372, %v1364
    %v2285 = vpack.c.b16 %v1373, %v1365
    %v2286 = vpack.c.b16 %v1374, %v1366
    %v2287 = vpack.c.b16 %v1375, %v1367
    %v2288 = vpack.c.b16 %v1376, %v1368
    %v2289 = vpack.c.b16 %v1385, %v1377
    %v2290 = vpack.c.b16 %v1386, %v1378
    %v2291 = vpack.c.b16 %v1387, %v1379
    %v2292 = vpack.c.b16 %v1388, %v1380
    %v2293 = vpack.c.b16 %v1389, %v1381
    %v2294 = vpack.c.b16 %v1390, %v1382
    %v2295 = vpack.c.b16 %v1391, %v1383
    %v2296 = vpack.c.b16 %v1392, %v1384
    %v2297 = vpack.c.b16 %v1401, %v1393
    %v2298 = vpack.c.b16 %v1402, %v1394
    %v2299 = vpack.c.b16 %v1403, %v1395
    %v2300 = vpack.c.b16 %v1404, %v1396
    %v2301 = vpack.c.b16 %v1405, %v1397
    %v2302 = vpack.c.b16 %v1406, %v1398
    %v2303 = vpack.c.b16 %v1407, %v1399
    %v2304 = vpack.c.b16 %v1408, %v1400
    %v2305 = vpack.c.b16 %v1417, %v1409
    %v2306 = vpack.c.b16 %v1418, %v1410
    %v2307 = vpack.c.b16 %v1419, %v1411
    %v2308 = vpack.c.b16 %v1420, %v1412
    %v2309 = vpack.c.b16 %v1421, %v1413
    %v2310 = vpack.c.b16 %v1422, %v1414
    %v2311 = vpack.c.b16 %v1423, %v1415
    %v2312 = vpack.c.b16 %v1424, %v1416
    %v2313 = vpack.c.b16 %v1433, %v1425
    %v2314 = vpack.c.b16 %v1434, %v1426
    %v2315 = vpack.c.b16 %v1435, %v1427
    %v2316 = vpack.c.b16 %v1436, %v1428
    %v2317 = vpack.c.b16 %v1437, %v1429
    %v2318 = vpack.c.b16 %v1438, %v1430
    %v2319 = vpack.c.b16 %v1439, %v1431
    %v2320 = vpack.c.b16 %v1440, %v1432
    %v2321 = vpack.c.b16 %v1449, %v1441
    %v2322 = vpack.c.b16 %v1450, %v1442
    %v2323 = vpack.c.b16 %v1451, %v1443
    %v2324 = vpack.c.b16 %v1452, %v1444
    %v2325 = vpack.c.b16 %v1453, %v1445
    %v2326 = vpack.c.b16 %v1454, %v1446
    %v2327 = vpack.c.b16 %v1455, %v1447
    %v2328 = vpack.c.b16 %v1456, %v1448
    %v2329 = vpack.c.b16 %v1465, %v1457
    %v2330 = vpack.c.b16 %v1466, %v1458
    %v2331 = vpack.c.b16 %v1467, %v1459
    %v2332 = vpack.c.b16 %v1468, %v1460
    %v2333 = vpack.c.b16 %v1469, %v1461
    %v2334 = vpack.c.b16 %v1470, %v1462
    %v2335 = vpack.c.b16 %v1471, %v1463
    %v2336 = vpack.c.b16 %v1472, %v1464
    %v2337 = vpack.c.b16 %v1481, %v1473
    %v2338 = vpack.c.b16 %v1482, %v1474
    %v2339 = vpack.c.b16 %v1483, %v1475
    %v2340 = vpack.c.b16 %v1484, %v1476
    %v2341 = vpack.c.b16 %v1485, %v1477
    %v2342 = vpack.c.b16 %v1486, %v1478
    %v2343 = vpack.c.b16 %v1487, %v1479
    %v2344 = vpack.c.b16 %v1488, %v1480
    %v2345 = vpack.c.b16 %v1497, %v1489
    %v2346 = vpack.c.b16 %v1498, %v1490
    %v2347 = vpack.c.b16 %v1499, %v1491
    %v2348 = vpack.c.b16 %v1500, %v1492
    %v2349 = vpack.c.b16 %v1501, %v1493
    %v2350 = vpack.c.b16 %v1502, %v1494
    %v2351 = vpack.c.b16 %v1503, %v1495
    %v2352 = vpack.c.b16 %v1504, %v1496
    %v2353 = vpack.c.b16 %v1513, %v1505
    %v2354 = vpack.c.b16 %v1514, %v1506
    %v2355 = vpack.c.b16 %v1515, %v1507
    %v2356 = vpack.c.b16 %v1516, %v1508
    %v2357 = vpack.c.b16 %v1517, %v1509
    %v2358 = vpack.c.b16 %v1518, %v1510
    %v2359 = vpack.c.b16 %v1519, %v1511
    %v2360 = vpack.c.b16 %v1520, %v1512
    %v2361 = vpack.c.b16 %v1529, %v1521
    %v2362 = vpack.c.b16 %v1530, %v1522
    %v2363 = vpack.c.b16 %v1531, %v1523
    %v2364 = vpack.c.b16 %v1532, %v1524
    %v2365 = vpack.c.b16 %v1533, %v1525
    %v2366 = vpack.c.b16 %v1534, %v1526
    %v2367 = vpack.c.b16 %v1535, %v1527
    %v2368 = vpack.c.b16 %v1536, %v1528
    %v2369 = vpack.c.b16 %v1545, %v1537
    %v2370 = vpack.c.b16 %v1546, %v1538
    %v2371 = vpack.c.b16 %v1547, %v1539
    %v2372 = vpack.c.b16 %v1548, %v1540
    %v2373 = vpack.c.b16 %v1549, %v1541
    %v2374 = vpack.c.b16 %v1550, %v1542
    %v2375 = vpack.c.b16 %v1551, %v1543
    %v2376 = vpack.c.b16 %v1552, %v1544
    %v2377 = vpack.c.b16 %v1561, %v1553
    %v2378 = vpack.c.b16 %v1562, %v1554
    %v2379 = vpack.c.b16 %v1563, %v1555
    %v2380 = vpack.c.b16 %v1564, %v1556
    %v2381 = vpack.c.b16 %v1565, %v1557
    %v2382 = vpack.c.b16 %v1566, %v1558
    %v2383 = vpack.c.b16 %v1567, %v1559
    %v2384 = vpack.c.b16 %v1568, %v1560
    %v2385 = vpack.c.b16 %v1577, %v1569
    %v2386 = vpack.c.b16 %v1578, %v1570
    %v2387 = vpack.c.b16 %v1579, %v1571
    %v2388 = vpack.c.b16 %v1580, %v1572
    %v2389 = vpack.c.b16 %v1581, %v1573
    %v2390 = vpack.c.b16 %v1582, %v1574
    %v2391 = vpack.c.b16 %v1583, %v1575
    %v2392 = vpack.c.b16 %v1584, %v1576
    %v2393 = vpack.c.b16 %v1593, %v1585
    %v2394 = vpack.c.b16 %v1594, %v1586
    %v2395 = vpack.c.b16 %v1595, %v1587
    %v2396 = vpack.c.b16 %v1596, %v1588
    %v2397 = vpack.c.b16 %v1597, %v1589
    %v2398 = vpack.c.b16 %v1598, %v1590
    %v2399 = vpack.c.b16 %v1599, %v1591
    %v2400 = vpack.c.b16 %v1600, %v1592
    %v2401 = vpack.c.b16 %v1609, %v1601
    %v2402 = vpack.c.b16 %v1610, %v1602
    %v2403 = vpack.c.b16 %v1611, %v1603
    %v2404 = vpack.c.b16 %v1612, %v1604
    %v2405 = vpack.c.b16 %v1613, %v1605
    %v2406 = vpack.c.b16 %v1614, %v1606
    %v2407 = vpack.c.b16 %v1615, %v1607
    %v2408 = vpack.c.b16 %v1616, %v1608
    %v2409 = vpack.c.b16 %v1625, %v1617
    %v2410 = vpack.c.b16 %v1626, %v1618
    %v2411 = vpack.c.b16 %v1627, %v1619
    %v2412 = vpack.c.b16 %v1628, %v1620
    %v2413 = vpack.c.b16 %v1629, %v1621
    %v2414 = vpack.c.b16 %v1630, %v1622
    %v2415 = vpack.c.b16 %v1631, %v1623
    %v2416 = vpack.c.b16 %v1632, %v1624
    %v2417 = vpack.c.b16 %v1641, %v1633
    %v2418 = vpack.c.b16 %v1642, %v1634
    %v2419 = vpack.c.b16 %v1643, %v1635
    %v2420 = vpack.c.b16 %v1644, %v1636
    %v2421 = vpack.c.b16 %v1645, %v1637
    %v2422 = vpack.c.b16 %v1646, %v1638
    %v2423 = vpack.c.b16 %v1647, %v1639
    %v2424 = vpack.c.b16 %v1648, %v1640
    %v2425 = vpack.c.b16 %v1657, %v1649
    %v2426 = vpack.c.b16 %v1658, %v1650
    %v2427 = vpack.c.b16 %v1659, %v1651
    %v2428 = vpack.c.b16 %v1660, %v1652
    %v2429 = vpack.c.b16 %v1661, %v1653
    %v2430 = vpack.c.b16 %v1662, %v1654
    %v2431 = vpack.c.b16 %v1663, %v1655
    %v2432 = vpack.c.b16 %v1664, %v1656
    %v2433 = vpack.c.b16 %v1673, %v1665
    %v2434 = vpack.c.b16 %v1674, %v1666
    %v2435 = vpack.c.b16 %v1675, %v1667
    %v2436 = vpack.c.b16 %v1676, %v1668
    %v2437 = vpack.c.b16 %v1677, %v1669
    %v2438 = vpack.c.b16 %v1678, %v1670
    %v2439 = vpack.c.b16 %v1679, %v1671
    %v2440 = vpack.c.b16 %v1680, %v1672
    %v2441 = vpack.c.b16 %v1689, %v1681
    %v2442 = vpack.c.b16 %v1690, %v1682
    %v2443 = vpack.c.b16 %v1691, %v1683
    %v2444 = vpack.c.b16 %v1692, %v1684
    %v2445 = vpack.c.b16 %v1693, %v1685
    %v2446 = vpack.c.b16 %v1694, %v1686
    %v2447 = vpack.c.b16 %v1695, %v1687
    %v2448 = vpack.c.b16 %v1696, %v1688
    %v2449 = vpack.c.b16 %v1705, %v1697
    %v2450 = vpack.c.b16 %v1706, %v1698
    %v2451 = vpack.c.b16 %v1707, %v1699
    %v2452 = vpack.c.b16 %v1708, %v1700
    %v2453 = vpack.c.b16 %v1709, %v1701
    %v2454 = vpack.c.b16 %v1710, %v1702
    %v2455 = vpack.c.b16 %v1711, %v1703
    %v2456 = vpack.c.b16 %v1712, %v1704
    %v2457 = vpack.c.b16 %v1721, %v1713
    %v2458 = vpack.c.b16 %v1722, %v1714
    %v2459 = vpack.c.b16 %v1723, %v1715
    %v2460 = vpack.c.b16 %v1724, %v1716
    %v2461 = vpack.c.b16 %v1725, %v1717
    %v2462 = vpack.c.b16 %v1726, %v1718
    %v2463 = vpack.c.b16 %v1727, %v1719
    %v2464 = vpack.c.b16 %v1728, %v1720
    %v2465 = vpack.c.b16 %v1737, %v1729
    %v2466 = vpack.c.b16 %v1738, %v1730
    %v2467 = vpack.c.b16 %v1739, %v1731
    %v2468 = vpack.c.b16 %v1740, %v1732
    %v2469 = vpack.c.b16 %v1741, %v1733
    %v2470 = vpack.c.b16 %v1742, %v1734
    %v2471 = vpack.c.b16 %v1743, %v1735
    %v2472 = vpack.c.b16 %v1744, %v1736
    %v2473 = vpack.c.b16 %v1753, %v1745
    %v2474 = vpack.c.b16 %v1754, %v1746
    %v2475 = vpack.c.b16 %v1755, %v1747
    %v2476 = vpack.c.b16 %v1756, %v1748
    %v2477 = vpack.c.b16 %v1757, %v1749
    %v2478 = vpack.c.b16 %v1758, %v1750
    %v2479 = vpack.c.b16 %v1759, %v1751
    %v2480 = vpack.c.b16 %v1760, %v1752
    %v2481 = vpack.c.b16 %v1769, %v1761
    %v2482 = vpack.c.b16 %v1770, %v1762
    %v2483 = vpack.c.b16 %v1771, %v1763
    %v2484 = vpack.c.b16 %v1772, %v1764
    %v2485 = vpack.c.b16 %v1773, %v1765
    %v2486 = vpack.c.b16 %v1774, %v1766
    %v2487 = vpack.c.b16 %v1775, %v1767
    %v2488 = vpack.c.b16 %v1776, %v1768
    %v2489 = vpack.c.b16 %v1785, %v1777
    %v2490 = vpack.c.b16 %v1786, %v1778
    %v2491 = vpack.c.b16 %v1787, %v1779
    %v2492 = vpack.c.b16 %v1788, %v1780
    %v2493 = vpack.c.b16 %v1789, %v1781
    %v2494 = vpack.c.b16 %v1790, %v1782
    %v2495 = vpack.c.b16 %v1791, %v1783
    %v2496 = vpack.c.b16 %v1792, %v1784
    %v2497 = vpack.c.b16 %v1801, %v1793
    %v2498 = vpack.c.b16 %v1802, %v1794
    %v2499 = vpack.c.b16 %v1803, %v1795
    %v2500 = vpack.c.b16 %v1804, %v1796
    %v2501 = vpack.c.b16 %v1805, %v1797
    %v2502 = vpack.c.b16 %v1806, %v1798
    %v2503 = vpack.c.b16 %v1807, %v1799
    %v2504 = vpack.c.b16 %v1808, %v1800
    %v2505 = vpack.c.b16 %v1817, %v1809
    %v2506 = vpack.c.b16 %v1818, %v1810
    %v2507 = vpack.c.b16 %v1819, %v1811
    %v2508 = vpack.c.b16 %v1820, %v1812
    %v2509 = vpack.c.b16 %v1821, %v1813
    %v2510 = vpack.c.b16 %v1822, %v1814
    %v2511 = vpack.c.b16 %v1823, %v1815
    %v2512 = vpack.c.b16 %v1824, %v1816
    %v2513 = vpack.c.b16 %v1833, %v1825
    %v2514 = vpack.c.b16 %v1834, %v1826
    %v2515 = vpack.c.b16 %v1835, %v1827
    %v2516 = vpack.c.b16 %v1836, %v1828
    %v2517 = vpack.c.b16 %v1837, %v1829
    %v2518 = vpack.c.b16 %v1838, %v1830
    %v2519 = vpack.c.b16 %v1839, %v1831
    %v2520 = vpack.c.b16 %v1840, %v1832
    %v2521 = vpack.c.b16 %v1849, %v1841
    %v2522 = vpack.c.b16 %v1850, %v1842
    %v2523 = vpack.c.b16 %v1851, %v1843
    %v2524 = vpack.c.b16 %v1852, %v1844
    %v2525 = vpack.c.b16 %v1853, %v1845
    %v2526 = vpack.c.b16 %v1854, %v1846
    %v2527 = vpack.c.b16 %v1855, %v1847
    %v2528 = vpack.c.b16 %v1856, %v1848
    %v2529 = vpack.c.b16 %v1865, %v1857
    %v2530 = vpack.c.b16 %v1866, %v1858
    %v2531 = vpack.c.b16 %v1867, %v1859
    %v2532 = vpack.c.b16 %v1868, %v1860
    %v2533 = vpack.c.b16 %v1869, %v1861
    %v2534 = vpack.c.b16 %v1870, %v1862
    %v2535 = vpack.c.b16 %v1871, %v1863
    %v2536 = vpack.c.b16 %v1872, %v1864
    %v2537 = vpack.c.b16 %v1881, %v1873
    %v2538 = vpack.c.b16 %v1882, %v1874
    %v2539 = vpack.c.b16 %v1883, %v1875
    %v2540 = vpack.c.b16 %v1884, %v1876
    %v2541 = vpack.c.b16 %v1885, %v1877
    %v2542 = vpack.c.b16 %v1886, %v1878
    %v2543 = vpack.c.b16 %v1887, %v1879
    %v2544 = vpack.c.b16 %v1888, %v1880
    %v2545 = vpack.c.b16 %v1897, %v1889
    %v2546 = vpack.c.b16 %v1898, %v1890
    %v2547 = vpack.c.b16 %v1899, %v1891
    %v2548 = vpack.c.b16 %v1900, %v1892
    %v2549 = vpack.c.b16 %v1901, %v1893
    %v2550 = vpack.c.b16 %v1902, %v1894
    %v2551 = vpack.c.b16 %v1903, %v1895
    %v2552 = vpack.c.b16 %v1904, %v1896
    %v2553 = vpack.c.b16 %v1913, %v1905
    %v2554 = vpack.c.b16 %v1914, %v1906
    %v2555 = vpack.c.b16 %v1915, %v1907
    %v2556 = vpack.c.b16 %v1916, %v1908
    %v2557 = vpack.c.b16 %v1917, %v1909
    %v2558 = vpack.c.b16 %v1918, %v1910
    %v2559 = vpack.c.b16 %v1919, %v1911
    %v2560 = vpack.c.b16 %v1920, %v1912
    %v2561 = vpack.c.b16 %v1929, %v1921
    %v2562 = vpack.c.b16 %v1930, %v1922
    %v2563 = vpack.c.b16 %v1931, %v1923
    %v2564 = vpack.c.b16 %v1932, %v1924
    %v2565 = vpack.c.b16 %v1933, %v1925
    %v2566 = vpack.c.b16 %v1934, %v1926
    %v2567 = vpack.c.b16 %v1935, %v1927
    %v2568 = vpack.c.b16 %v1936, %v1928
    %v2569 = vpack.c.b16 %v1945, %v1937
    %v2570 = vpack.c.b16 %v1946, %v1938
    %v2571 = vpack.c.b16 %v1947, %v1939
    %v2572 = vpack.c.b16 %v1948, %v1940
    %v2573 = vpack.c.b16 %v1949, %v1941
    %v2574 = vpack.c.b16 %v1950, %v1942
    %v2575 = vpack.c.b16 %v1951, %v1943
    %v2576 = vpack.c.b16 %v1952, %v1944
    %v2577 = vpack.c.b16 %v1961, %v1953
    %v2578 = vpack.c.b16 %v1962, %v1954
    %v2579 = vpack.c.b16 %v1963, %v1955
    %v2580 = vpack.c.b16 %v1964, %v1956
    %v2581 = vpack.c.b16 %v1965, %v1957
    %v2582 = vpack.c.b16 %v1966, %v1958
    %v2583 = vpack.c.b16 %v1967, %v1959
    %v2584 = vpack.c.b16 %v1968, %v1960
    %v2585 = vpack.c.b16 %v1977, %v1969
    %v2586 = vpack.c.b16 %v1978, %v1970
    %v2587 = vpack.c.b16 %v1979, %v1971
    %v2588 = vpack.c.b16 %v1980, %v1972
    %v2589 = vpack.c.b16 %v1981, %v1973
    %v2590 = vpack.c.b16 %v1982, %v1974
    %v2591 = vpack.c.b16 %v1983, %v1975
    %v2592 = vpack.c.b16 %v1984, %v1976
    %v2593 = vpack.c.b16 %v1993, %v1985
    %v2594 = vpack.c.b16 %v1994, %v1986
    %v2595 = vpack.c.b16 %v1995, %v1987
    %v2596 = vpack.c.b16 %v1996, %v1988
    %v2597 = vpack.c.b16 %v1997, %v1989
    %v2598 = vpack.c.b16 %v1998, %v1990
    %v2599 = vpack.c.b16 %v1999, %v1991
    %v2600 = vpack.c.b16 %v2000, %v1992
    %v2601 = vpack.c.b16 %v2009, %v2001
    %v2602 = vpack.c.b16 %v2010, %v2002
    %v2603 = vpack.c.b16 %v2011, %v2003
    %v2604 = vpack.c.b16 %v2012, %v2004
    %v2605 = vpack.c.b16 %v2013, %v2005
    %v2606 = vpack.c.b16 %v2014, %v2006
    %v2607 = vpack.c.b16 %v2015, %v2007
    %v2608 = vpack.c.b16 %v2016, %v2008
    %v2609 = vpack.c.b16 %v2025, %v2017
    %v2610 = vpack.c.b16 %v2026, %v2018
    %v2611 = vpack.c.b16 %v2027, %v2019
    %v2612 = vpack.c.b16 %v2028, %v2020
    %v2613 = vpack.c.b16 %v2029, %v2021
    %v2614 = vpack.c.b16 %v2030, %v2022
    %v2615 = vpack.c.b16 %v2031, %v2023
    %v2616 = vpack.c.b16 %v2032, %v2024
    %v2617 = vpack.c.b16 %v2041, %v2033
    %v2618 = vpack.c.b16 %v2042, %v2034
    %v2619 = vpack.c.b16 %v2043, %v2035
    %v2620 = vpack.c.b16 %v2044, %v2036
    %v2621 = vpack.c.b16 %v2045, %v2037
    %v2622 = vpack.c.b16 %v2046, %v2038
    %v2623 = vpack.c.b16 %v2047, %v2039
    %v2624 = vpack.c.b16 %v2048, %v2040
    %v2625 = vpack.c.b16 %v2057, %v2049
    %v2626 = vpack.c.b16 %v2058, %v2050
    %v2627 = vpack.c.b16 %v2059, %v2051
    %v2628 = vpack.c.b16 %v2060, %v2052
    %v2629 = vpack.c.b16 %v2061, %v2053
    %v2630 = vpack.c.b16 %v2062, %v2054
    %v2631 = vpack.c.b16 %v2063, %v2055
    %v2632 = vpack.c.b16 %v2064, %v2056
    %v2633 = vpack.c.b16 %v2073, %v2065
    %v2634 = vpack.c.b16 %v2074, %v2066
    %v2635 = vpack.c.b16 %v2075, %v2067
    %v2636 = vpack.c.b16 %v2076, %v2068
    %v2637 = vpack.c.b16 %v2077, %v2069
    %v2638 = vpack.c.b16 %v2078, %v2070
    %v2639 = vpack.c.b16 %v2079, %v2071
    %v2640 = vpack.c.b16 %v2080, %v2072
    %v2641 = vpack.c.b16 %v2089, %v2081
    %v2642 = vpack.c.b16 %v2090, %v2082
    %v2643 = vpack.c.b16 %v2091, %v2083
    %v2644 = vpack.c.b16 %v2092, %v2084
    %v2645 = vpack.c.b16 %v2093, %v2085
    %v2646 = vpack.c.b16 %v2094, %v2086
    %v2647 = vpack.c.b16 %v2095, %v2087
    %v2648 = vpack.c.b16 %v2096, %v2088
    %v2649 = vpack.c.b16 %v2105, %v2097
    %v2650 = vpack.c.b16 %v2106, %v2098
    %v2651 = vpack.c.b16 %v2107, %v2099
    %v2652 = vpack.c.b16 %v2108, %v2100
    %v2653 = vpack.c.b16 %v2109, %v2101
    %v2654 = vpack.c.b16 %v2110, %v2102
    %v2655 = vpack.c.b16 %v2111, %v2103
    %v2656 = vpack.c.b16 %v2112, %v2104
    %v2657 = vpack.c.b16 %v2121, %v2113
    %v2658 = vpack.c.b16 %v2122, %v2114
    %v2659 = vpack.c.b16 %v2123, %v2115
    %v2660 = vpack.c.b16 %v2124, %v2116
    %v2661 = vpack.c.b16 %v2125, %v2117
    %v2662 = vpack.c.b16 %v2126, %v2118
    %v2663 = vpack.c.b16 %v2127, %v2119
    %v2664 = vpack.c.b16 %v2128, %v2120
    %v2665 = vpack.c.b16 %v2137, %v2129
    %v2666 = vpack.c.b16 %v2138, %v2130
    %v2667 = vpack.c.b16 %v2139, %v2131
    %v2668 = vpack.c.b16 %v2140, %v2132
    %v2669 = vpack.c.b16 %v2141, %v2133
    %v2670 = vpack.c.b16 %v2142, %v2134
    %v2671 = vpack.c.b16 %v2143, %v2135
    %v2672 = vpack.c.b16 %v2144, %v2136
    %v2673 = vpack.c.b16 %v2153, %v2145
    %v2674 = vpack.c.b16 %v2154, %v2146
    %v2675 = vpack.c.b16 %v2155, %v2147
    %v2676 = vpack.c.b16 %v2156, %v2148
    %v2677 = vpack.c.b16 %v2157, %v2149
    %v2678 = vpack.c.b16 %v2158, %v2150
    %v2679 = vpack.c.b16 %v2159, %v2151
    %v2680 = vpack.c.b16 %v2160, %v2152
    %v2681 = vpack.c.b16 %v2169, %v2161
    %v2682 = vpack.c.b16 %v2170, %v2162
    %v2683 = vpack.c.b16 %v2171, %v2163
    %v2684 = vpack.c.b16 %v2172, %v2164
    %v2685 = vpack.c.b16 %v2173, %v2165
    %v2686 = vpack.c.b16 %v2174, %v2166
    %v2687 = vpack.c.b16 %v2175, %v2167
    %v2688 = vpack.c.b16 %v2176, %v2168
    %v3202 = vlaneseq
    %v3203 = vshrl.u32 %v3202, 7
    %v3204 = vsub.s32 0, %v3203
    %v3205 = vrot.slane %v582, %v3204
    %v3206 = vlaneseq
    %v3207 = vshrl.u32 %v3206, 7
    %v3208 = vsub.s32 1, %v3207
    %v3209 = vrot.slane %v582, %v3208
    %v3210 = vlaneseq
    %v3211 = vshrl.u32 %v3210, 7
    %v3212 = vsub.s32 2, %v3211
    %v3213 = vrot.slane %v582, %v3212
    %v3214 = vlaneseq
    %v3215 = vshrl.u32 %v3214, 7
    %v3216 = vsub.s32 3, %v3215
    %v3217 = vrot.slane %v582, %v3216
    %v3218 = vlaneseq
    %v3219 = vshrl.u32 %v3218, 7
    %v3220 = vsub.s32 4, %v3219
    %v3221 = vrot.slane %v582, %v3220
    %v3222 = vlaneseq
    %v3223 = vshrl.u32 %v3222, 7
    %v3224 = vsub.s32 5, %v3223
    %v3225 = vrot.slane %v582, %v3224
    %v3226 = vlaneseq
    %v3227 = vshrl.u32 %v3226, 7
    %v3228 = vsub.s32 6, %v3227
    %v3229 = vrot.slane %v582, %v3228
    %v3230 = vlaneseq
    %v3231 = vshrl.u32 %v3230, 7
    %v3232 = vsub.s32 7, %v3231
    %v3233 = vrot.slane %v582, %v3232
    %3242 = vmatprep.subr.bf16.mxu0 %v2234
    %3243 = vmatpush1.bf16.msra.mxu0 %v2233
    %3244 = vmatprep.subr.bf16.mxu0 %v2226
    %3245 = vmatpush1.bf16.msra.mxu0 %v2225
    %3246 = vmatprep.subr.bf16.mxu0 %v2218
    %3247 = vmatpush1.bf16.msra.mxu0 %v2217
    %3248 = vmatprep.subr.bf16.mxu0 %v2210
    %3249 = vmatpush1.bf16.msra.mxu0 %v2209
    %3250 = vmatprep.subr.bf16.mxu0 %v2202
    %3251 = vmatpush1.bf16.msra.mxu0 %v2201
    %3252 = vmatprep.subr.bf16.mxu0 %v2194
    %3253 = vmatpush1.bf16.msra.mxu0 %v2193
    %3254 = vmatprep.subr.bf16.mxu0 %v2186
    %3255 = vmatpush1.bf16.msra.mxu0 %v2185
    %3256 = vmatprep.subr.bf16.mxu0 %v2178
    %3257 = vmatpush1.bf16.msra.mxu0 %v2177
    %3258 = vmatprep.subr.bf16.mxu0 %v2298
    %3259 = vmatpush2.bf16.msra.mxu0 %v2297
    %3260 = vmatprep.subr.bf16.mxu0 %v2290
    %3261 = vmatpush2.bf16.msra.mxu0 %v2289
    %3262 = vmatprep.subr.bf16.mxu0 %v2282
    %3263 = vmatpush2.bf16.msra.mxu0 %v2281
    %3264 = vmatprep.subr.bf16.mxu0 %v2274
    %3265 = vmatpush2.bf16.msra.mxu0 %v2273
    %3266 = vmatprep.subr.bf16.mxu0 %v2266
    %3267 = vmatpush2.bf16.msra.mxu0 %v2265
    %3268 = vmatprep.subr.bf16.mxu0 %v2258
    %3269 = vmatpush2.bf16.msra.mxu0 %v2257
    %3270 = vmatprep.subr.bf16.mxu0 %v2250
    %3271 = vmatpush2.bf16.msra.mxu0 %v2249
    %3272 = vmatprep.subr.bf16.mxu0 %v2242
    %3273 = vmatpush2.bf16.msra.mxu0 %v2241
    %3274 = vmatprep.mubr.bf16.mxu0 %v621
    %3275 = vmatmul.mubr.bf16.gmra.mxu0 %v607
    %v3276 = vpop.f32.mrf.mxu0
    %v3277 = vadd.f32 %v3205, %v3276
    %v3278 = vpop.f32.mrf.mxu0
    %v3279 = vadd.f32 %v3209, %v3278
    %v3280 = vpop.f32.mrf.mxu0
    %v3281 = vpop.f32.mrf.mxu0
    %3282 = vdwg.mxu0
    %3283 = vmatprep.subr.bf16.mxu0 %v2362
    %3284 = vmatpush1.bf16.msra.mxu0 %v2361
    %3285 = vmatprep.subr.bf16.mxu0 %v2354
    %3286 = vmatpush1.bf16.msra.mxu0 %v2353
    %3287 = vmatprep.subr.bf16.mxu0 %v2346
    %3288 = vmatpush1.bf16.msra.mxu0 %v2345
    %3289 = vmatprep.subr.bf16.mxu0 %v2338
    %3290 = vmatpush1.bf16.msra.mxu0 %v2337
    %3291 = vmatprep.subr.bf16.mxu0 %v2330
    %3292 = vmatpush1.bf16.msra.mxu0 %v2329
    %3293 = vmatprep.subr.bf16.mxu0 %v2322
    %3294 = vmatpush1.bf16.msra.mxu0 %v2321
    %3295 = vmatprep.subr.bf16.mxu0 %v2314
    %3296 = vmatpush1.bf16.msra.mxu0 %v2313
    %3297 = vmatprep.subr.bf16.mxu0 %v2306
    %3298 = vmatpush1.bf16.msra.mxu0 %v2305
    %3299 = vmatprep.subr.bf16.mxu0 %v2426
    %3300 = vmatpush2.bf16.msra.mxu0 %v2425
    %3301 = vmatprep.subr.bf16.mxu0 %v2418
    %3302 = vmatpush2.bf16.msra.mxu0 %v2417
    %3303 = vmatprep.subr.bf16.mxu0 %v2410
    %3304 = vmatpush2.bf16.msra.mxu0 %v2409
    %3305 = vmatprep.subr.bf16.mxu0 %v2402
    %3306 = vmatpush2.bf16.msra.mxu0 %v2401
    %3307 = vmatprep.subr.bf16.mxu0 %v2394
    %3308 = vmatpush2.bf16.msra.mxu0 %v2393
    %3309 = vmatprep.subr.bf16.mxu0 %v2386
    %3310 = vmatpush2.bf16.msra.mxu0 %v2385
    %3311 = vmatprep.subr.bf16.mxu0 %v2378
    %3312 = vmatpush2.bf16.msra.mxu0 %v2377
    %3313 = vmatprep.subr.bf16.mxu0 %v2370
    %3314 = vmatpush2.bf16.msra.mxu0 %v2369
    %3315 = vmatprep.mubr.bf16.mxu0 %v631
    %3316 = vmatmul.mubr.bf16.gmra.mxu0 %v629
    %v3317 = vpop.f32.mrf.mxu0
    %v3318 = vadd.f32 %v3277, %v3317
    %v3319 = vpop.f32.mrf.mxu0
    %v3320 = vadd.f32 %v3279, %v3319
    %v3321 = vpop.f32.mrf.mxu0
    %v3322 = vpop.f32.mrf.mxu0
    %3323 = vdwg.mxu0
    %3324 = vmatprep.subr.bf16.mxu0 %v2490
    %3325 = vmatpush1.bf16.msra.mxu0 %v2489
    %3326 = vmatprep.subr.bf16.mxu0 %v2482
    %3327 = vmatpush1.bf16.msra.mxu0 %v2481
    %3328 = vmatprep.subr.bf16.mxu0 %v2474
    %3329 = vmatpush1.bf16.msra.mxu0 %v2473
    %3330 = vmatprep.subr.bf16.mxu0 %v2466
    %3331 = vmatpush1.bf16.msra.mxu0 %v2465
    %3332 = vmatprep.subr.bf16.mxu0 %v2458
    %3333 = vmatpush1.bf16.msra.mxu0 %v2457
    %3334 = vmatprep.subr.bf16.mxu0 %v2450
    %3335 = vmatpush1.bf16.msra.mxu0 %v2449
    %3336 = vmatprep.subr.bf16.mxu0 %v2442
    %3337 = vmatpush1.bf16.msra.mxu0 %v2441
    %3338 = vmatprep.subr.bf16.mxu0 %v2434
    %3339 = vmatpush1.bf16.msra.mxu0 %v2433
    %3340 = vmatprep.subr.bf16.mxu0 %v2554
    %3341 = vmatpush2.bf16.msra.mxu0 %v2553
    %3342 = vmatprep.subr.bf16.mxu0 %v2546
    %3343 = vmatpush2.bf16.msra.mxu0 %v2545
    %3344 = vmatprep.subr.bf16.mxu0 %v2538
    %3345 = vmatpush2.bf16.msra.mxu0 %v2537
    %3346 = vmatprep.subr.bf16.mxu0 %v2530
    %3347 = vmatpush2.bf16.msra.mxu0 %v2529
    %3348 = vmatprep.subr.bf16.mxu0 %v2522
    %3349 = vmatpush2.bf16.msra.mxu0 %v2521
    %3350 = vmatprep.subr.bf16.mxu0 %v2514
    %3351 = vmatpush2.bf16.msra.mxu0 %v2513
    %3352 = vmatprep.subr.bf16.mxu0 %v2506
    %3353 = vmatpush2.bf16.msra.mxu0 %v2505
    %3354 = vmatprep.subr.bf16.mxu0 %v2498
    %3355 = vmatpush2.bf16.msra.mxu0 %v2497
    %3356 = vmatprep.mubr.bf16.mxu0 %v628
    %3357 = vmatmul.mubr.bf16.gmra.mxu0 %v614
    %v3358 = vpop.f32.mrf.mxu0
    %v3359 = vadd.f32 %v3318, %v3358
    %v3360 = vpop.f32.mrf.mxu0
    %v3361 = vadd.f32 %v3320, %v3360
    %v3362 = vpop.f32.mrf.mxu0
    %v3363 = vpop.f32.mrf.mxu0
    %3364 = vdwg.mxu0
    %3365 = vmatprep.subr.bf16.mxu0 %v2618
    %3366 = vmatpush1.bf16.msra.mxu0 %v2617
    %3367 = vmatprep.subr.bf16.mxu0 %v2610
    %3368 = vmatpush1.bf16.msra.mxu0 %v2609
    %3369 = vmatprep.subr.bf16.mxu0 %v2602
    %3370 = vmatpush1.bf16.msra.mxu0 %v2601
    %3371 = vmatprep.subr.bf16.mxu0 %v2594
    %3372 = vmatpush1.bf16.msra.mxu0 %v2593
    %3373 = vmatprep.subr.bf16.mxu0 %v2586
    %3374 = vmatpush1.bf16.msra.mxu0 %v2585
    %3375 = vmatprep.subr.bf16.mxu0 %v2578
    %3376 = vmatpush1.bf16.msra.mxu0 %v2577
    %3377 = vmatprep.subr.bf16.mxu0 %v2570
    %3378 = vmatpush1.bf16.msra.mxu0 %v2569
    %3379 = vmatprep.subr.bf16.mxu0 %v2562
    %3380 = vmatpush1.bf16.msra.mxu0 %v2561
    %3381 = vmatprep.subr.bf16.mxu0 %v2682
    %3382 = vmatpush2.bf16.msra.mxu0 %v2681
    %3383 = vmatprep.subr.bf16.mxu0 %v2674
    %3384 = vmatpush2.bf16.msra.mxu0 %v2673
    %3385 = vmatprep.subr.bf16.mxu0 %v2666
    %3386 = vmatpush2.bf16.msra.mxu0 %v2665
    %3387 = vmatprep.subr.bf16.mxu0 %v2658
    %3388 = vmatpush2.bf16.msra.mxu0 %v2657
    %3389 = vmatprep.subr.bf16.mxu0 %v2650
    %3390 = vmatpush2.bf16.msra.mxu0 %v2649
    %3391 = vmatprep.subr.bf16.mxu0 %v2642
    %3392 = vmatpush2.bf16.msra.mxu0 %v2641
    %3393 = vmatprep.subr.bf16.mxu0 %v2634
    %3394 = vmatpush2.bf16.msra.mxu0 %v2633
    %3395 = vmatprep.subr.bf16.mxu0 %v2626
    %3396 = vmatpush2.bf16.msra.mxu0 %v2625
    %3397 = vmatprep.mubr.bf16.mxu0 %v632
    %3398 = vmatmul.mubr.bf16.gmra.mxu0 %v630
    %v3399 = vpop.f32.mrf.mxu0
    %v3400 = vadd.f32 %v3359, %v3399
    %v3401 = vpop.f32.mrf.mxu0
    %v3402 = vadd.f32 %v3361, %v3401
    %v3403 = vpop.f32.mrf.mxu0
    %v3404 = vpop.f32.mrf.mxu0
    %3405 = vdwg.mxu0
    %3406 = vmatprep.subr.bf16.mxu0 %v2236
    %3407 = vmatpush1.bf16.msra.mxu0 %v2235
    %3408 = vmatprep.subr.bf16.mxu0 %v2228
    %3409 = vmatpush1.bf16.msra.mxu0 %v2227
    %3410 = vmatprep.subr.bf16.mxu0 %v2220
    %3411 = vmatpush1.bf16.msra.mxu0 %v2219
    %3412 = vmatprep.subr.bf16.mxu0 %v2212
    %3413 = vmatpush1.bf16.msra.mxu0 %v2211
    %3414 = vmatprep.subr.bf16.mxu0 %v2204
    %3415 = vmatpush1.bf16.msra.mxu0 %v2203
    %3416 = vmatprep.subr.bf16.mxu0 %v2196
    %3417 = vmatpush1.bf16.msra.mxu0 %v2195
    %3418 = vmatprep.subr.bf16.mxu0 %v2188
    %3419 = vmatpush1.bf16.msra.mxu0 %v2187
    %3420 = vmatprep.subr.bf16.mxu0 %v2180
    %3421 = vmatpush1.bf16.msra.mxu0 %v2179
    %3422 = vmatprep.subr.bf16.mxu0 %v2300
    %3423 = vmatpush2.bf16.msra.mxu0 %v2299
    %3424 = vmatprep.subr.bf16.mxu0 %v2292
    %3425 = vmatpush2.bf16.msra.mxu0 %v2291
    %3426 = vmatprep.subr.bf16.mxu0 %v2284
    %3427 = vmatpush2.bf16.msra.mxu0 %v2283
    %3428 = vmatprep.subr.bf16.mxu0 %v2276
    %3429 = vmatpush2.bf16.msra.mxu0 %v2275
    %3430 = vmatprep.subr.bf16.mxu0 %v2268
    %3431 = vmatpush2.bf16.msra.mxu0 %v2267
    %3432 = vmatprep.subr.bf16.mxu0 %v2260
    %3433 = vmatpush2.bf16.msra.mxu0 %v2259
    %3434 = vmatprep.subr.bf16.mxu0 %v2252
    %3435 = vmatpush2.bf16.msra.mxu0 %v2251
    %3436 = vmatprep.subr.bf16.mxu0 %v2244
    %3437 = vmatpush2.bf16.msra.mxu0 %v2243
    %3438 = vmatprep.mubr.bf16.mxu0 %v621
    %3439 = vmatmul.mubr.bf16.gmra.mxu0 %v607
    %v3440 = vpop.f32.mrf.mxu0
    %v3441 = vadd.f32 %v3213, %v3440
    %v3442 = vpop.f32.mrf.mxu0
    %v3443 = vadd.f32 %v3217, %v3442
    %v3444 = vpop.f32.mrf.mxu0
    %v3445 = vpop.f32.mrf.mxu0
    %3446 = vdwg.mxu0
    %3447 = vmatprep.subr.bf16.mxu0 %v2364
    %3448 = vmatpush1.bf16.msra.mxu0 %v2363
    %3449 = vmatprep.subr.bf16.mxu0 %v2356
    %3450 = vmatpush1.bf16.msra.mxu0 %v2355
    %3451 = vmatprep.subr.bf16.mxu0 %v2348
    %3452 = vmatpush1.bf16.msra.mxu0 %v2347
    %3453 = vmatprep.subr.bf16.mxu0 %v2340
    %3454 = vmatpush1.bf16.msra.mxu0 %v2339
    %3455 = vmatprep.subr.bf16.mxu0 %v2332
    %3456 = vmatpush1.bf16.msra.mxu0 %v2331
    %3457 = vmatprep.subr.bf16.mxu0 %v2324
    %3458 = vmatpush1.bf16.msra.mxu0 %v2323
    %3459 = vmatprep.subr.bf16.mxu0 %v2316
    %3460 = vmatpush1.bf16.msra.mxu0 %v2315
    %3461 = vmatprep.subr.bf16.mxu0 %v2308
    %3462 = vmatpush1.bf16.msra.mxu0 %v2307
    %3463 = vmatprep.subr.bf16.mxu0 %v2428
    %3464 = vmatpush2.bf16.msra.mxu0 %v2427
    %3465 = vmatprep.subr.bf16.mxu0 %v2420
    %3466 = vmatpush2.bf16.msra.mxu0 %v2419
    %3467 = vmatprep.subr.bf16.mxu0 %v2412
    %3468 = vmatpush2.bf16.msra.mxu0 %v2411
    %3469 = vmatprep.subr.bf16.mxu0 %v2404
    %3470 = vmatpush2.bf16.msra.mxu0 %v2403
    %3471 = vmatprep.subr.bf16.mxu0 %v2396
    %3472 = vmatpush2.bf16.msra.mxu0 %v2395
    %3473 = vmatprep.subr.bf16.mxu0 %v2388
    %3474 = vmatpush2.bf16.msra.mxu0 %v2387
    %3475 = vmatprep.subr.bf16.mxu0 %v2380
    %3476 = vmatpush2.bf16.msra.mxu0 %v2379
    %3477 = vmatprep.subr.bf16.mxu0 %v2372
    %3478 = vmatpush2.bf16.msra.mxu0 %v2371
    %3479 = vmatprep.mubr.bf16.mxu0 %v631
    %3480 = vmatmul.mubr.bf16.gmra.mxu0 %v629
    %v3481 = vpop.f32.mrf.mxu0
    %v3482 = vadd.f32 %v3441, %v3481
    %v3483 = vpop.f32.mrf.mxu0
    %v3484 = vadd.f32 %v3443, %v3483
    %v3485 = vpop.f32.mrf.mxu0
    %v3486 = vpop.f32.mrf.mxu0
    %3487 = vdwg.mxu0
    %3488 = vmatprep.subr.bf16.mxu0 %v2492
    %3489 = vmatpush1.bf16.msra.mxu0 %v2491
    %3490 = vmatprep.subr.bf16.mxu0 %v2484
    %3491 = vmatpush1.bf16.msra.mxu0 %v2483
    %3492 = vmatprep.subr.bf16.mxu0 %v2476
    %3493 = vmatpush1.bf16.msra.mxu0 %v2475
    %3494 = vmatprep.subr.bf16.mxu0 %v2468
    %3495 = vmatpush1.bf16.msra.mxu0 %v2467
    %3496 = vmatprep.subr.bf16.mxu0 %v2460
    %3497 = vmatpush1.bf16.msra.mxu0 %v2459
    %3498 = vmatprep.subr.bf16.mxu0 %v2452
    %3499 = vmatpush1.bf16.msra.mxu0 %v2451
    %3500 = vmatprep.subr.bf16.mxu0 %v2444
    %3501 = vmatpush1.bf16.msra.mxu0 %v2443
    %3502 = vmatprep.subr.bf16.mxu0 %v2436
    %3503 = vmatpush1.bf16.msra.mxu0 %v2435
    %3504 = vmatprep.subr.bf16.mxu0 %v2556
    %3505 = vmatpush2.bf16.msra.mxu0 %v2555
    %3506 = vmatprep.subr.bf16.mxu0 %v2548
    %3507 = vmatpush2.bf16.msra.mxu0 %v2547
    %3508 = vmatprep.subr.bf16.mxu0 %v2540
    %3509 = vmatpush2.bf16.msra.mxu0 %v2539
    %3510 = vmatprep.subr.bf16.mxu0 %v2532
    %3511 = vmatpush2.bf16.msra.mxu0 %v2531
    %3512 = vmatprep.subr.bf16.mxu0 %v2524
    %3513 = vmatpush2.bf16.msra.mxu0 %v2523
    %3514 = vmatprep.subr.bf16.mxu0 %v2516
    %3515 = vmatpush2.bf16.msra.mxu0 %v2515
    %3516 = vmatprep.subr.bf16.mxu0 %v2508
    %3517 = vmatpush2.bf16.msra.mxu0 %v2507
    %3518 = vmatprep.subr.bf16.mxu0 %v2500
    %3519 = vmatpush2.bf16.msra.mxu0 %v2499
    %3520 = vmatprep.mubr.bf16.mxu0 %v628
    %3521 = vmatmul.mubr.bf16.gmra.mxu0 %v614
    %v3522 = vpop.f32.mrf.mxu0
    %v3523 = vadd.f32 %v3482, %v3522
    %v3524 = vpop.f32.mrf.mxu0
    %v3525 = vadd.f32 %v3484, %v3524
    %v3526 = vpop.f32.mrf.mxu0
    %v3527 = vpop.f32.mrf.mxu0
    %3528 = vdwg.mxu0
    %3529 = vmatprep.subr.bf16.mxu0 %v2620
    %3530 = vmatpush1.bf16.msra.mxu0 %v2619
    %3531 = vmatprep.subr.bf16.mxu0 %v2612
    %3532 = vmatpush1.bf16.msra.mxu0 %v2611
    %3533 = vmatprep.subr.bf16.mxu0 %v2604
    %3534 = vmatpush1.bf16.msra.mxu0 %v2603
    %3535 = vmatprep.subr.bf16.mxu0 %v2596
    %3536 = vmatpush1.bf16.msra.mxu0 %v2595
    %3537 = vmatprep.subr.bf16.mxu0 %v2588
    %3538 = vmatpush1.bf16.msra.mxu0 %v2587
    %3539 = vmatprep.subr.bf16.mxu0 %v2580
    %3540 = vmatpush1.bf16.msra.mxu0 %v2579
    %3541 = vmatprep.subr.bf16.mxu0 %v2572
    %3542 = vmatpush1.bf16.msra.mxu0 %v2571
    %3543 = vmatprep.subr.bf16.mxu0 %v2564
    %3544 = vmatpush1.bf16.msra.mxu0 %v2563
    %3545 = vmatprep.subr.bf16.mxu0 %v2684
    %3546 = vmatpush2.bf16.msra.mxu0 %v2683
    %3547 = vmatprep.subr.bf16.mxu0 %v2676
    %3548 = vmatpush2.bf16.msra.mxu0 %v2675
    %3549 = vmatprep.subr.bf16.mxu0 %v2668
    %3550 = vmatpush2.bf16.msra.mxu0 %v2667
    %3551 = vmatprep.subr.bf16.mxu0 %v2660
    %3552 = vmatpush2.bf16.msra.mxu0 %v2659
    %3553 = vmatprep.subr.bf16.mxu0 %v2652
    %3554 = vmatpush2.bf16.msra.mxu0 %v2651
    %3555 = vmatprep.subr.bf16.mxu0 %v2644
    %3556 = vmatpush2.bf16.msra.mxu0 %v2643
    %3557 = vmatprep.subr.bf16.mxu0 %v2636
    %3558 = vmatpush2.bf16.msra.mxu0 %v2635
    %3559 = vmatprep.subr.bf16.mxu0 %v2628
    %3560 = vmatpush2.bf16.msra.mxu0 %v2627
    %3561 = vmatprep.mubr.bf16.mxu0 %v632
    %3562 = vmatmul.mubr.bf16.gmra.mxu0 %v630
    %v3563 = vpop.f32.mrf.mxu0
    %v3564 = vadd.f32 %v3523, %v3563
    %v3565 = vpop.f32.mrf.mxu0
    %v3566 = vadd.f32 %v3525, %v3565
    %v3567 = vpop.f32.mrf.mxu0
    %v3568 = vpop.f32.mrf.mxu0
    %3569 = vdwg.mxu0
    %3570 = vmatprep.subr.bf16.mxu0 %v2238
    %3571 = vmatpush1.bf16.msra.mxu0 %v2237
    %3572 = vmatprep.subr.bf16.mxu0 %v2230
    %3573 = vmatpush1.bf16.msra.mxu0 %v2229
    %3574 = vmatprep.subr.bf16.mxu0 %v2222
    %3575 = vmatpush1.bf16.msra.mxu0 %v2221
    %3576 = vmatprep.subr.bf16.mxu0 %v2214
    %3577 = vmatpush1.bf16.msra.mxu0 %v2213
    %3578 = vmatprep.subr.bf16.mxu0 %v2206
    %3579 = vmatpush1.bf16.msra.mxu0 %v2205
    %3580 = vmatprep.subr.bf16.mxu0 %v2198
    %3581 = vmatpush1.bf16.msra.mxu0 %v2197
    %3582 = vmatprep.subr.bf16.mxu0 %v2190
    %3583 = vmatpush1.bf16.msra.mxu0 %v2189
    %3584 = vmatprep.subr.bf16.mxu0 %v2182
    %3585 = vmatpush1.bf16.msra.mxu0 %v2181
    %3586 = vmatprep.subr.bf16.mxu0 %v2302
    %3587 = vmatpush2.bf16.msra.mxu0 %v2301
    %3588 = vmatprep.subr.bf16.mxu0 %v2294
    %3589 = vmatpush2.bf16.msra.mxu0 %v2293
    %3590 = vmatprep.subr.bf16.mxu0 %v2286
    %3591 = vmatpush2.bf16.msra.mxu0 %v2285
    %3592 = vmatprep.subr.bf16.mxu0 %v2278
    %3593 = vmatpush2.bf16.msra.mxu0 %v2277
    %3594 = vmatprep.subr.bf16.mxu0 %v2270
    %3595 = vmatpush2.bf16.msra.mxu0 %v2269
    %3596 = vmatprep.subr.bf16.mxu0 %v2262
    %3597 = vmatpush2.bf16.msra.mxu0 %v2261
    %3598 = vmatprep.subr.bf16.mxu0 %v2254
    %3599 = vmatpush2.bf16.msra.mxu0 %v2253
    %3600 = vmatprep.subr.bf16.mxu0 %v2246
    %3601 = vmatpush2.bf16.msra.mxu0 %v2245
    %3602 = vmatprep.mubr.bf16.mxu0 %v621
    %3603 = vmatmul.mubr.bf16.gmra.mxu0 %v607
    %v3604 = vpop.f32.mrf.mxu0
    %v3605 = vadd.f32 %v3221, %v3604
    %v3606 = vpop.f32.mrf.mxu0
    %v3607 = vadd.f32 %v3225, %v3606
    %v3608 = vpop.f32.mrf.mxu0
    %v3609 = vpop.f32.mrf.mxu0
    %3610 = vdwg.mxu0
    %3611 = vmatprep.subr.bf16.mxu0 %v2366
    %3612 = vmatpush1.bf16.msra.mxu0 %v2365
    %3613 = vmatprep.subr.bf16.mxu0 %v2358
    %3614 = vmatpush1.bf16.msra.mxu0 %v2357
    %3615 = vmatprep.subr.bf16.mxu0 %v2350
    %3616 = vmatpush1.bf16.msra.mxu0 %v2349
    %3617 = vmatprep.subr.bf16.mxu0 %v2342
    %3618 = vmatpush1.bf16.msra.mxu0 %v2341
    %3619 = vmatprep.subr.bf16.mxu0 %v2334
    %3620 = vmatpush1.bf16.msra.mxu0 %v2333
    %3621 = vmatprep.subr.bf16.mxu0 %v2326
    %3622 = vmatpush1.bf16.msra.mxu0 %v2325
    %3623 = vmatprep.subr.bf16.mxu0 %v2318
    %3624 = vmatpush1.bf16.msra.mxu0 %v2317
    %3625 = vmatprep.subr.bf16.mxu0 %v2310
    %3626 = vmatpush1.bf16.msra.mxu0 %v2309
    %3627 = vmatprep.subr.bf16.mxu0 %v2430
    %3628 = vmatpush2.bf16.msra.mxu0 %v2429
    %3629 = vmatprep.subr.bf16.mxu0 %v2422
    %3630 = vmatpush2.bf16.msra.mxu0 %v2421
    %3631 = vmatprep.subr.bf16.mxu0 %v2414
    %3632 = vmatpush2.bf16.msra.mxu0 %v2413
    %3633 = vmatprep.subr.bf16.mxu0 %v2406
    %3634 = vmatpush2.bf16.msra.mxu0 %v2405
    %3635 = vmatprep.subr.bf16.mxu0 %v2398
    %3636 = vmatpush2.bf16.msra.mxu0 %v2397
    %3637 = vmatprep.subr.bf16.mxu0 %v2390
    %3638 = vmatpush2.bf16.msra.mxu0 %v2389
    %3639 = vmatprep.subr.bf16.mxu0 %v2382
    %3640 = vmatpush2.bf16.msra.mxu0 %v2381
    %3641 = vmatprep.subr.bf16.mxu0 %v2374
    %3642 = vmatpush2.bf16.msra.mxu0 %v2373
    %3643 = vmatprep.mubr.bf16.mxu0 %v631
    %3644 = vmatmul.mubr.bf16.gmra.mxu0 %v629
    %v3645 = vpop.f32.mrf.mxu0
    %v3646 = vadd.f32 %v3605, %v3645
    %v3647 = vpop.f32.mrf.mxu0
    %v3648 = vadd.f32 %v3607, %v3647
    %v3649 = vpop.f32.mrf.mxu0
    %v3650 = vpop.f32.mrf.mxu0
    %3651 = vdwg.mxu0
    %3652 = vmatprep.subr.bf16.mxu0 %v2494
    %3653 = vmatpush1.bf16.msra.mxu0 %v2493
    %3654 = vmatprep.subr.bf16.mxu0 %v2486
    %3655 = vmatpush1.bf16.msra.mxu0 %v2485
    %3656 = vmatprep.subr.bf16.mxu0 %v2478
    %3657 = vmatpush1.bf16.msra.mxu0 %v2477
    %3658 = vmatprep.subr.bf16.mxu0 %v2470
    %3659 = vmatpush1.bf16.msra.mxu0 %v2469
    %3660 = vmatprep.subr.bf16.mxu0 %v2462
    %3661 = vmatpush1.bf16.msra.mxu0 %v2461
    %3662 = vmatprep.subr.bf16.mxu0 %v2454
    %3663 = vmatpush1.bf16.msra.mxu0 %v2453
    %3664 = vmatprep.subr.bf16.mxu0 %v2446
    %3665 = vmatpush1.bf16.msra.mxu0 %v2445
    %3666 = vmatprep.subr.bf16.mxu0 %v2438
    %3667 = vmatpush1.bf16.msra.mxu0 %v2437
    %3668 = vmatprep.subr.bf16.mxu0 %v2558
    %3669 = vmatpush2.bf16.msra.mxu0 %v2557
    %3670 = vmatprep.subr.bf16.mxu0 %v2550
    %3671 = vmatpush2.bf16.msra.mxu0 %v2549
    %3672 = vmatprep.subr.bf16.mxu0 %v2542
    %3673 = vmatpush2.bf16.msra.mxu0 %v2541
    %3674 = vmatprep.subr.bf16.mxu0 %v2534
    %3675 = vmatpush2.bf16.msra.mxu0 %v2533
    %3676 = vmatprep.subr.bf16.mxu0 %v2526
    %3677 = vmatpush2.bf16.msra.mxu0 %v2525
    %3678 = vmatprep.subr.bf16.mxu0 %v2518
    %3679 = vmatpush2.bf16.msra.mxu0 %v2517
    %3680 = vmatprep.subr.bf16.mxu0 %v2510
    %3681 = vmatpush2.bf16.msra.mxu0 %v2509
    %3682 = vmatprep.subr.bf16.mxu0 %v2502
    %3683 = vmatpush2.bf16.msra.mxu0 %v2501
    %3684 = vmatprep.mubr.bf16.mxu0 %v628
    %3685 = vmatmul.mubr.bf16.gmra.mxu0 %v614
    %v3686 = vpop.f32.mrf.mxu0
    %v3687 = vadd.f32 %v3646, %v3686
    %v3688 = vpop.f32.mrf.mxu0
    %v3689 = vadd.f32 %v3648, %v3688
    %v3690 = vpop.f32.mrf.mxu0
    %v3691 = vpop.f32.mrf.mxu0
    %3692 = vdwg.mxu0
    %3693 = vmatprep.subr.bf16.mxu0 %v2622
    %3694 = vmatpush1.bf16.msra.mxu0 %v2621
    %3695 = vmatprep.subr.bf16.mxu0 %v2614
    %3696 = vmatpush1.bf16.msra.mxu0 %v2613
    %3697 = vmatprep.subr.bf16.mxu0 %v2606
    %3698 = vmatpush1.bf16.msra.mxu0 %v2605
    %3699 = vmatprep.subr.bf16.mxu0 %v2598
    %3700 = vmatpush1.bf16.msra.mxu0 %v2597
    %3701 = vmatprep.subr.bf16.mxu0 %v2590
    %3702 = vmatpush1.bf16.msra.mxu0 %v2589
    %3703 = vmatprep.subr.bf16.mxu0 %v2582
    %3704 = vmatpush1.bf16.msra.mxu0 %v2581
    %3705 = vmatprep.subr.bf16.mxu0 %v2574
    %3706 = vmatpush1.bf16.msra.mxu0 %v2573
    %3707 = vmatprep.subr.bf16.mxu0 %v2566
    %3708 = vmatpush1.bf16.msra.mxu0 %v2565
    %3709 = vmatprep.subr.bf16.mxu0 %v2686
    %3710 = vmatpush2.bf16.msra.mxu0 %v2685
    %3711 = vmatprep.subr.bf16.mxu0 %v2678
    %3712 = vmatpush2.bf16.msra.mxu0 %v2677
    %3713 = vmatprep.subr.bf16.mxu0 %v2670
    %3714 = vmatpush2.bf16.msra.mxu0 %v2669
    %3715 = vmatprep.subr.bf16.mxu0 %v2662
    %3716 = vmatpush2.bf16.msra.mxu0 %v2661
    %3717 = vmatprep.subr.bf16.mxu0 %v2654
    %3718 = vmatpush2.bf16.msra.mxu0 %v2653
    %3719 = vmatprep.subr.bf16.mxu0 %v2646
    %3720 = vmatpush2.bf16.msra.mxu0 %v2645
    %3721 = vmatprep.subr.bf16.mxu0 %v2638
    %3722 = vmatpush2.bf16.msra.mxu0 %v2637
    %3723 = vmatprep.subr.bf16.mxu0 %v2630
    %3724 = vmatpush2.bf16.msra.mxu0 %v2629
    %3725 = vmatprep.mubr.bf16.mxu0 %v632
    %3726 = vmatmul.mubr.bf16.gmra.mxu0 %v630
    %v3727 = vpop.f32.mrf.mxu0
    %v3728 = vadd.f32 %v3687, %v3727
    %v3729 = vpop.f32.mrf.mxu0
    %v3730 = vadd.f32 %v3689, %v3729
    %v3731 = vpop.f32.mrf.mxu0
    %v3732 = vpop.f32.mrf.mxu0
    %3733 = vdwg.mxu0
    %3734 = vmatprep.subr.bf16.mxu0 %v2240
    %3735 = vmatpush1.bf16.msra.mxu0 %v2239
    %3736 = vmatprep.subr.bf16.mxu0 %v2232
    %3737 = vmatpush1.bf16.msra.mxu0 %v2231
    %3738 = vmatprep.subr.bf16.mxu0 %v2224
    %3739 = vmatpush1.bf16.msra.mxu0 %v2223
    %3740 = vmatprep.subr.bf16.mxu0 %v2216
    %3741 = vmatpush1.bf16.msra.mxu0 %v2215
    %3742 = vmatprep.subr.bf16.mxu0 %v2208
    %3743 = vmatpush1.bf16.msra.mxu0 %v2207
    %3744 = vmatprep.subr.bf16.mxu0 %v2200
    %3745 = vmatpush1.bf16.msra.mxu0 %v2199
    %3746 = vmatprep.subr.bf16.mxu0 %v2192
    %3747 = vmatpush1.bf16.msra.mxu0 %v2191
    %3748 = vmatprep.subr.bf16.mxu0 %v2184
    %3749 = vmatpush1.bf16.msra.mxu0 %v2183
    %3750 = vmatprep.subr.bf16.mxu0 %v2304
    %3751 = vmatpush2.bf16.msra.mxu0 %v2303
    %3752 = vmatprep.subr.bf16.mxu0 %v2296
    %3753 = vmatpush2.bf16.msra.mxu0 %v2295
    %3754 = vmatprep.subr.bf16.mxu0 %v2288
    %3755 = vmatpush2.bf16.msra.mxu0 %v2287
    %3756 = vmatprep.subr.bf16.mxu0 %v2280
    %3757 = vmatpush2.bf16.msra.mxu0 %v2279
    %3758 = vmatprep.subr.bf16.mxu0 %v2272
    %3759 = vmatpush2.bf16.msra.mxu0 %v2271
    %3760 = vmatprep.subr.bf16.mxu0 %v2264
    %3761 = vmatpush2.bf16.msra.mxu0 %v2263
    %3762 = vmatprep.subr.bf16.mxu0 %v2256
    %3763 = vmatpush2.bf16.msra.mxu0 %v2255
    %3764 = vmatprep.subr.bf16.mxu0 %v2248
    %3765 = vmatpush2.bf16.msra.mxu0 %v2247
    %3766 = vmatprep.mubr.bf16.mxu0 %v621
    %3767 = vmatmul.mubr.bf16.gmra.mxu0 %v607
    %v3768 = vpop.f32.mrf.mxu0
    %v3769 = vadd.f32 %v3229, %v3768
    %v3770 = vpop.f32.mrf.mxu0
    %v3771 = vadd.f32 %v3233, %v3770
    %v3772 = vpop.f32.mrf.mxu0
    %v3773 = vpop.f32.mrf.mxu0
    %3774 = vdwg.mxu0
    %3775 = vmatprep.subr.bf16.mxu0 %v2368
    %3776 = vmatpush1.bf16.msra.mxu0 %v2367
    %3777 = vmatprep.subr.bf16.mxu0 %v2360
    %3778 = vmatpush1.bf16.msra.mxu0 %v2359
    %3779 = vmatprep.subr.bf16.mxu0 %v2352
    %3780 = vmatpush1.bf16.msra.mxu0 %v2351
    %3781 = vmatprep.subr.bf16.mxu0 %v2344
    %3782 = vmatpush1.bf16.msra.mxu0 %v2343
    %3783 = vmatprep.subr.bf16.mxu0 %v2336
    %3784 = vmatpush1.bf16.msra.mxu0 %v2335
    %3785 = vmatprep.subr.bf16.mxu0 %v2328
    %3786 = vmatpush1.bf16.msra.mxu0 %v2327
    %3787 = vmatprep.subr.bf16.mxu0 %v2320
    %3788 = vmatpush1.bf16.msra.mxu0 %v2319
    %3789 = vmatprep.subr.bf16.mxu0 %v2312
    %3790 = vmatpush1.bf16.msra.mxu0 %v2311
    %3791 = vmatprep.subr.bf16.mxu0 %v2432
    %3792 = vmatpush2.bf16.msra.mxu0 %v2431
    %3793 = vmatprep.subr.bf16.mxu0 %v2424
    %3794 = vmatpush2.bf16.msra.mxu0 %v2423
    %3795 = vmatprep.subr.bf16.mxu0 %v2416
    %3796 = vmatpush2.bf16.msra.mxu0 %v2415
    %3797 = vmatprep.subr.bf16.mxu0 %v2408
    %3798 = vmatpush2.bf16.msra.mxu0 %v2407
    %3799 = vmatprep.subr.bf16.mxu0 %v2400
    %3800 = vmatpush2.bf16.msra.mxu0 %v2399
    %3801 = vmatprep.subr.bf16.mxu0 %v2392
    %3802 = vmatpush2.bf16.msra.mxu0 %v2391
    %3803 = vmatprep.subr.bf16.mxu0 %v2384
    %3804 = vmatpush2.bf16.msra.mxu0 %v2383
    %3805 = vmatprep.subr.bf16.mxu0 %v2376
    %3806 = vmatpush2.bf16.msra.mxu0 %v2375
    %3807 = vmatprep.mubr.bf16.mxu0 %v631
    %3808 = vmatmul.mubr.bf16.gmra.mxu0 %v629
    %v3809 = vpop.f32.mrf.mxu0
    %v3810 = vadd.f32 %v3769, %v3809
    %v3811 = vpop.f32.mrf.mxu0
    %v3812 = vadd.f32 %v3771, %v3811
    %v3813 = vpop.f32.mrf.mxu0
    %v3814 = vpop.f32.mrf.mxu0
    %3815 = vdwg.mxu0
    %3816 = vmatprep.subr.bf16.mxu0 %v2496
    %3817 = vmatpush1.bf16.msra.mxu0 %v2495
    %3818 = vmatprep.subr.bf16.mxu0 %v2488
    %3819 = vmatpush1.bf16.msra.mxu0 %v2487
    %3820 = vmatprep.subr.bf16.mxu0 %v2480
    %3821 = vmatpush1.bf16.msra.mxu0 %v2479
    %3822 = vmatprep.subr.bf16.mxu0 %v2472
    %3823 = vmatpush1.bf16.msra.mxu0 %v2471
    %3824 = vmatprep.subr.bf16.mxu0 %v2464
    %3825 = vmatpush1.bf16.msra.mxu0 %v2463
    %3826 = vmatprep.subr.bf16.mxu0 %v2456
    %3827 = vmatpush1.bf16.msra.mxu0 %v2455
    %3828 = vmatprep.subr.bf16.mxu0 %v2448
    %3829 = vmatpush1.bf16.msra.mxu0 %v2447
    %3830 = vmatprep.subr.bf16.mxu0 %v2440
    %3831 = vmatpush1.bf16.msra.mxu0 %v2439
    %3832 = vmatprep.subr.bf16.mxu0 %v2560
    %3833 = vmatpush2.bf16.msra.mxu0 %v2559
    %3834 = vmatprep.subr.bf16.mxu0 %v2552
    %3835 = vmatpush2.bf16.msra.mxu0 %v2551
    %3836 = vmatprep.subr.bf16.mxu0 %v2544
    %3837 = vmatpush2.bf16.msra.mxu0 %v2543
    %3838 = vmatprep.subr.bf16.mxu0 %v2536
    %3839 = vmatpush2.bf16.msra.mxu0 %v2535
    %3840 = vmatprep.subr.bf16.mxu0 %v2528
    %3841 = vmatpush2.bf16.msra.mxu0 %v2527
    %3842 = vmatprep.subr.bf16.mxu0 %v2520
    %3843 = vmatpush2.bf16.msra.mxu0 %v2519
    %3844 = vmatprep.subr.bf16.mxu0 %v2512
    %3845 = vmatpush2.bf16.msra.mxu0 %v2511
    %3846 = vmatprep.subr.bf16.mxu0 %v2504
    %3847 = vmatpush2.bf16.msra.mxu0 %v2503
    %3848 = vmatprep.mubr.bf16.mxu0 %v628
    %3849 = vmatmul.mubr.bf16.gmra.mxu0 %v614
    %v3850 = vpop.f32.mrf.mxu0
    %v3851 = vadd.f32 %v3810, %v3850
    %v3852 = vpop.f32.mrf.mxu0
    %v3853 = vadd.f32 %v3812, %v3852
    %v3854 = vpop.f32.mrf.mxu0
    %v3855 = vpop.f32.mrf.mxu0
    %3856 = vdwg.mxu0
    %3857 = vmatprep.subr.bf16.mxu0 %v2624
    %3858 = vmatpush1.bf16.msra.mxu0 %v2623
    %3859 = vmatprep.subr.bf16.mxu0 %v2616
    %3860 = vmatpush1.bf16.msra.mxu0 %v2615
    %3861 = vmatprep.subr.bf16.mxu0 %v2608
    %3862 = vmatpush1.bf16.msra.mxu0 %v2607
    %3863 = vmatprep.subr.bf16.mxu0 %v2600
    %3864 = vmatpush1.bf16.msra.mxu0 %v2599
    %3865 = vmatprep.subr.bf16.mxu0 %v2592
    %3866 = vmatpush1.bf16.msra.mxu0 %v2591
    %3867 = vmatprep.subr.bf16.mxu0 %v2584
    %3868 = vmatpush1.bf16.msra.mxu0 %v2583
    %3869 = vmatprep.subr.bf16.mxu0 %v2576
    %3870 = vmatpush1.bf16.msra.mxu0 %v2575
    %3871 = vmatprep.subr.bf16.mxu0 %v2568
    %3872 = vmatpush1.bf16.msra.mxu0 %v2567
    %3873 = vmatprep.subr.bf16.mxu0 %v2688
    %3874 = vmatpush2.bf16.msra.mxu0 %v2687
    %3875 = vmatprep.subr.bf16.mxu0 %v2680
    %3876 = vmatpush2.bf16.msra.mxu0 %v2679
    %3877 = vmatprep.subr.bf16.mxu0 %v2672
    %3878 = vmatpush2.bf16.msra.mxu0 %v2671
    %3879 = vmatprep.subr.bf16.mxu0 %v2664
    %3880 = vmatpush2.bf16.msra.mxu0 %v2663
    %3881 = vmatprep.subr.bf16.mxu0 %v2656
    %3882 = vmatpush2.bf16.msra.mxu0 %v2655
    %3883 = vmatprep.subr.bf16.mxu0 %v2648
    %3884 = vmatpush2.bf16.msra.mxu0 %v2647
    %3885 = vmatprep.subr.bf16.mxu0 %v2640
    %3886 = vmatpush2.bf16.msra.mxu0 %v2639
    %3887 = vmatprep.subr.bf16.mxu0 %v2632
    %3888 = vmatpush2.bf16.msra.mxu0 %v2631
    %3889 = vmatprep.mubr.bf16.mxu0 %v632
    %3890 = vmatmul.mubr.bf16.gmra.mxu0 %v630
    %v3891 = vpop.f32.mrf.mxu0
    %v3892 = vadd.f32 %v3851, %v3891
    %v3893 = vpop.f32.mrf.mxu0
    %v3894 = vadd.f32 %v3853, %v3893
    %v3895 = vpop.f32.mrf.mxu0
    %v3896 = vpop.f32.mrf.mxu0
    %3897 = vdwg.mxu0
    %vm3898 = vcmask 1040384
    %v3899 = vsel %vm3898, %v3400, -inf
    %v3900 = vsel %vm3898, %v3402, -inf
    %v3901 = vsel %vm3898, %v3564, -inf
    %v3902 = vsel %vm3898, %v3566, -inf
    %v3903 = vsel %vm3898, %v3728, -inf
    %v3904 = vmax.f32 %v3899, %v3903
    %v3905 = vsel %vm3898, %v3730, -inf
    %v3906 = vmax.f32 %v3900, %v3905
    %v3907 = vsel %vm3898, %v3892, -inf
    %v3908 = vmax.f32 %v3901, %v3907
    %v3909 = vsel %vm3898, %v3894, -inf
    %v3910 = vmax.f32 %v3902, %v3909
    %v3911 = vmax.f32 %v3904, %v3906
    %v3912 = vmax.f32 %v3908, %v3910
    %v3913 = vmax.f32 %v3911, %v3912
    %3914 = vmax.xlane.f32.xlu0 %v3913
    %v3915 = vpop.xlane.xlu0 %3914
    %v3916 = vsub.f32 %v3400, %v3915
    %v3917 = vsub.f32 %v3402, %v3915
    %v3918 = vsub.f32 %v3564, %v3915
    %v3919 = vsub.f32 %v3566, %v3915
    %v3920 = vsub.f32 %v3728, %v3915
    %v3921 = vsub.f32 %v3730, %v3915
    %v3922 = vsub.f32 %v3892, %v3915
    %v3923 = vsub.f32 %v3894, %v3915
    %v3924 = vmul.f32 %v3916, 1.442695
    %v3925 = vpow.pop %v3924
    %v3926 = vmul.f32 %v3917, 1.442695
    %v3927 = vpow.pop %v3926
    %v3928 = vmul.f32 %v3918, 1.442695
    %v3929 = vpow.pop %v3928
    %v3930 = vmul.f32 %v3919, 1.442695
    %v3931 = vpow.pop %v3930
    %v3932 = vmul.f32 %v3920, 1.442695
    %v3933 = vpow.pop %v3932
    %v3934 = vmul.f32 %v3921, 1.442695
    %v3935 = vpow.pop %v3934
    %v3936 = vmul.f32 %v3922, 1.442695
    %v3937 = vpow.pop %v3936
    %v3938 = vmul.f32 %v3923, 1.442695
    %v3939 = vpow.pop %v3938
    %v3940 = vsel %vm3898, %v3925, 0.0
    %v3941 = vsel %vm3898, %v3927, 0.0
    %v3942 = vadd.f32 %v3940, %v3941
    %v3943 = vsel %vm3898, %v3929, 0.0
    %v3944 = vadd.f32 %v3942, %v3943
    %v3945 = vsel %vm3898, %v3931, 0.0
    %v3946 = vadd.f32 %v3944, %v3945
    %v3947 = vsel %vm3898, %v3933, 0.0
    %v3948 = vadd.f32 %v3946, %v3947
    %v3949 = vsel %vm3898, %v3935, 0.0
    %v3950 = vadd.f32 %v3948, %v3949
    %v3951 = vsel %vm3898, %v3937, 0.0
    %v3952 = vadd.f32 %v3950, %v3951
    %v3953 = vsel %vm3898, %v3939, 0.0
    %v3954 = vadd.f32 %v3952, %v3953
    %3955 = vadd.xlane.f32.xlu0 %v3954
    %v3956 = vpop.xlane.xlu0 %3955
    %v3957 = vpack.c.bf16 %v3925, %v3925
    %v3958 = vpack.c.bf16 %v3927, %v3927
    %v3959 = vpack.c.bf16 %v3929, %v3929
    %v3960 = vpack.c.bf16 %v3931, %v3931
    %v3961 = vpack.c.bf16 %v3933, %v3933
    %v3962 = vpack.c.bf16 %v3935, %v3935
    %v3963 = vpack.c.bf16 %v3937, %v3937
    %v3964 = vpack.c.bf16 %v3939, %v3939
    %v3965 = vld [vmem:[#allocation8] sm:$0xff]
    %v3966 = vld [vmem:[#allocation8 + $0x8] sm:$0xff]
    %v3967 = vld [vmem:[#allocation8 + $0x10] sm:$0xff]
    %v3968 = vld [vmem:[#allocation8 + $0x18] sm:$0xff]
    %v3969 = vld [vmem:[#allocation8 + $0x20] sm:$0xff]
    %v3970 = vld [vmem:[#allocation8 + $0x28] sm:$0xff]
    %v3971 = vld [vmem:[#allocation8 + $0x30] sm:$0xff]
    %v3972 = vld [vmem:[#allocation8 + $0x38] sm:$0xff]
    %v3973 = vld [vmem:[#allocation8 + $0x40] sm:$0xff]
    %v3974 = vld [vmem:[#allocation8 + $0x48] sm:$0xff]
    %v3975 = vld [vmem:[#allocation8 + $0x50] sm:$0xff]
    %v3976 = vld [vmem:[#allocation8 + $0x58] sm:$0xff]
    %v3977 = vld [vmem:[#allocation8 + $0x60] sm:$0xff]
    %v3978 = vld [vmem:[#allocation8 + $0x68] sm:$0xff]
    %v3979 = vld [vmem:[#allocation8 + $0x70] sm:$0xff]
    %v3980 = vld [vmem:[#allocation8 + $0x78] sm:$0xff]
    %v3981 = vld [vmem:[#allocation8 + $0x80] sm:$0xff]
    %v3982 = vld [vmem:[#allocation8 + $0x88] sm:$0xff]
    %v3983 = vld [vmem:[#allocation8 + $0x90] sm:$0xff]
    %v3984 = vld [vmem:[#allocation8 + $0x98] sm:$0xff]
    %v3985 = vld [vmem:[#allocation8 + $0xa0] sm:$0xff]
    %v3986 = vld [vmem:[#allocation8 + $0xa8] sm:$0xff]
    %v3987 = vld [vmem:[#allocation8 + $0xb0] sm:$0xff]
    %v3988 = vld [vmem:[#allocation8 + $0xb8] sm:$0xff]
    %v3989 = vld [vmem:[#allocation8 + $0xc0] sm:$0xff]
    %v3990 = vld [vmem:[#allocation8 + $0xc8] sm:$0xff]
    %v3991 = vld [vmem:[#allocation8 + $0xd0] sm:$0xff]
    %v3992 = vld [vmem:[#allocation8 + $0xd8] sm:$0xff]
    %v3993 = vld [vmem:[#allocation8 + $0xe0] sm:$0xff]
    %v3994 = vld [vmem:[#allocation8 + $0xe8] sm:$0xff]
    %v3995 = vld [vmem:[#allocation8 + $0xf0] sm:$0xff]
    %v3996 = vld [vmem:[#allocation8 + $0xf8] sm:$0xff]
    %v3997 = vld [vmem:[#allocation8 + $0x100] sm:$0xff]
    %v3998 = vld [vmem:[#allocation8 + $0x108] sm:$0xff]
    %v3999 = vld [vmem:[#allocation8 + $0x110] sm:$0xff]
    %v4000 = vld [vmem:[#allocation8 + $0x118] sm:$0xff]
    %v4001 = vld [vmem:[#allocation8 + $0x120] sm:$0xff]
    %v4002 = vld [vmem:[#allocation8 + $0x128] sm:$0xff]
    %v4003 = vld [vmem:[#allocation8 + $0x130] sm:$0xff]
    %v4004 = vld [vmem:[#allocation8 + $0x138] sm:$0xff]
    %v4005 = vld [vmem:[#allocation8 + $0x140] sm:$0xff]
    %v4006 = vld [vmem:[#allocation8 + $0x148] sm:$0xff]
    %v4007 = vld [vmem:[#allocation8 + $0x150] sm:$0xff]
    %v4008 = vld [vmem:[#allocation8 + $0x158] sm:$0xff]
    %v4009 = vld [vmem:[#allocation8 + $0x160] sm:$0xff]
    %v4010 = vld [vmem:[#allocation8 + $0x168] sm:$0xff]
    %v4011 = vld [vmem:[#allocation8 + $0x170] sm:$0xff]
    %v4012 = vld [vmem:[#allocation8 + $0x178] sm:$0xff]
    %v4013 = vld [vmem:[#allocation8 + $0x180] sm:$0xff]
    %v4014 = vld [vmem:[#allocation8 + $0x188] sm:$0xff]
    %v4015 = vld [vmem:[#allocation8 + $0x190] sm:$0xff]
    %v4016 = vld [vmem:[#allocation8 + $0x198] sm:$0xff]
    %v4017 = vld [vmem:[#allocation8 + $0x1a0] sm:$0xff]
    %v4018 = vld [vmem:[#allocation8 + $0x1a8] sm:$0xff]
    %v4019 = vld [vmem:[#allocation8 + $0x1b0] sm:$0xff]
    %v4020 = vld [vmem:[#allocation8 + $0x1b8] sm:$0xff]
    %v4021 = vld [vmem:[#allocation8 + $0x1c0] sm:$0xff]
    %v4022 = vld [vmem:[#allocation8 + $0x1c8] sm:$0xff]
    %v4023 = vld [vmem:[#allocation8 + $0x1d0] sm:$0xff]
    %v4024 = vld [vmem:[#allocation8 + $0x1d8] sm:$0xff]
    %v4025 = vld [vmem:[#allocation8 + $0x1e0] sm:$0xff]
    %v4026 = vld [vmem:[#allocation8 + $0x1e8] sm:$0xff]
    %v4027 = vld [vmem:[#allocation8 + $0x1f0] sm:$0xff]
    %v4028 = vld [vmem:[#allocation8 + $0x1f8] sm:$0xff]
    %v4029 = vld [vmem:[#allocation8 + $0x200] sm:$0xff]
    %v4030 = vld [vmem:[#allocation8 + $0x208] sm:$0xff]
    %v4031 = vld [vmem:[#allocation8 + $0x210] sm:$0xff]
    %v4032 = vld [vmem:[#allocation8 + $0x218] sm:$0xff]
    %v4033 = vld [vmem:[#allocation8 + $0x220] sm:$0xff]
    %v4034 = vld [vmem:[#allocation8 + $0x228] sm:$0xff]
    %v4035 = vld [vmem:[#allocation8 + $0x230] sm:$0xff]
    %v4036 = vld [vmem:[#allocation8 + $0x238] sm:$0xff]
    %v4037 = vld [vmem:[#allocation8 + $0x240] sm:$0xff]
    %v4038 = vld [vmem:[#allocation8 + $0x248] sm:$0xff]
    %v4039 = vld [vmem:[#allocation8 + $0x250] sm:$0xff]
    %v4040 = vld [vmem:[#allocation8 + $0x258] sm:$0xff]
    %v4041 = vld [vmem:[#allocation8 + $0x260] sm:$0xff]
    %v4042 = vld [vmem:[#allocation8 + $0x268] sm:$0xff]
    %v4043 = vld [vmem:[#allocation8 + $0x270] sm:$0xff]
    %v4044 = vld [vmem:[#allocation8 + $0x278] sm:$0xff]
    %v4045 = vld [vmem:[#allocation8 + $0x280] sm:$0xff]
    %v4046 = vld [vmem:[#allocation8 + $0x288] sm:$0xff]
    %v4047 = vld [vmem:[#allocation8 + $0x290] sm:$0xff]
    %v4048 = vld [vmem:[#allocation8 + $0x298] sm:$0xff]
    %v4049 = vld [vmem:[#allocation8 + $0x2a0] sm:$0xff]
    %v4050 = vld [vmem:[#allocation8 + $0x2a8] sm:$0xff]
    %v4051 = vld [vmem:[#allocation8 + $0x2b0] sm:$0xff]
    %v4052 = vld [vmem:[#allocation8 + $0x2b8] sm:$0xff]
    %v4053 = vld [vmem:[#allocation8 + $0x2c0] sm:$0xff]
    %v4054 = vld [vmem:[#allocation8 + $0x2c8] sm:$0xff]
    %v4055 = vld [vmem:[#allocation8 + $0x2d0] sm:$0xff]
    %v4056 = vld [vmem:[#allocation8 + $0x2d8] sm:$0xff]
    %v4057 = vld [vmem:[#allocation8 + $0x2e0] sm:$0xff]
    %v4058 = vld [vmem:[#allocation8 + $0x2e8] sm:$0xff]
    %v4059 = vld [vmem:[#allocation8 + $0x2f0] sm:$0xff]
    %v4060 = vld [vmem:[#allocation8 + $0x2f8] sm:$0xff]
    %v4061 = vld [vmem:[#allocation8 + $0x300] sm:$0xff]
    %v4062 = vld [vmem:[#allocation8 + $0x308] sm:$0xff]
    %v4063 = vld [vmem:[#allocation8 + $0x310] sm:$0xff]
    %v4064 = vld [vmem:[#allocation8 + $0x318] sm:$0xff]
    %v4065 = vld [vmem:[#allocation8 + $0x320] sm:$0xff]
    %v4066 = vld [vmem:[#allocation8 + $0x328] sm:$0xff]
    %v4067 = vld [vmem:[#allocation8 + $0x330] sm:$0xff]
    %v4068 = vld [vmem:[#allocation8 + $0x338] sm:$0xff]
    %v4069 = vld [vmem:[#allocation8 + $0x340] sm:$0xff]
    %v4070 = vld [vmem:[#allocation8 + $0x348] sm:$0xff]
    %v4071 = vld [vmem:[#allocation8 + $0x350] sm:$0xff]
    %v4072 = vld [vmem:[#allocation8 + $0x358] sm:$0xff]
    %v4073 = vld [vmem:[#allocation8 + $0x360] sm:$0xff]
    %v4074 = vld [vmem:[#allocation8 + $0x368] sm:$0xff]
    %v4075 = vld [vmem:[#allocation8 + $0x370] sm:$0xff]
    %v4076 = vld [vmem:[#allocation8 + $0x378] sm:$0xff]
    %v4077 = vld [vmem:[#allocation8 + $0x380] sm:$0xff]
    %v4078 = vld [vmem:[#allocation8 + $0x388] sm:$0xff]
    %v4079 = vld [vmem:[#allocation8 + $0x390] sm:$0xff]
    %v4080 = vld [vmem:[#allocation8 + $0x398] sm:$0xff]
    %v4081 = vld [vmem:[#allocation8 + $0x3a0] sm:$0xff]
    %v4082 = vld [vmem:[#allocation8 + $0x3a8] sm:$0xff]
    %v4083 = vld [vmem:[#allocation8 + $0x3b0] sm:$0xff]
    %v4084 = vld [vmem:[#allocation8 + $0x3b8] sm:$0xff]
    %v4085 = vld [vmem:[#allocation8 + $0x3c0] sm:$0xff]
    %v4086 = vld [vmem:[#allocation8 + $0x3c8] sm:$0xff]
    %v4087 = vld [vmem:[#allocation8 + $0x3d0] sm:$0xff]
    %v4088 = vld [vmem:[#allocation8 + $0x3d8] sm:$0xff]
    %v4089 = vld [vmem:[#allocation8 + $0x3e0] sm:$0xff]
    %v4090 = vld [vmem:[#allocation8 + $0x3e8] sm:$0xff]
    %v4091 = vld [vmem:[#allocation8 + $0x3f0] sm:$0xff]
    %v4092 = vld [vmem:[#allocation8 + $0x3f8] sm:$0xff]
    %v4093 = vld [vmem:[#allocation8 + $0x400] sm:$0xff]
    %v4094 = vld [vmem:[#allocation8 + $0x408] sm:$0xff]
    %v4095 = vld [vmem:[#allocation8 + $0x410] sm:$0xff]
    %v4096 = vld [vmem:[#allocation8 + $0x418] sm:$0xff]
    %v4097 = vld [vmem:[#allocation8 + $0x420] sm:$0xff]
    %v4098 = vld [vmem:[#allocation8 + $0x428] sm:$0xff]
    %v4099 = vld [vmem:[#allocation8 + $0x430] sm:$0xff]
    %v4100 = vld [vmem:[#allocation8 + $0x438] sm:$0xff]
    %v4101 = vld [vmem:[#allocation8 + $0x440] sm:$0xff]
    %v4102 = vld [vmem:[#allocation8 + $0x448] sm:$0xff]
    %v4103 = vld [vmem:[#allocation8 + $0x450] sm:$0xff]
    %v4104 = vld [vmem:[#allocation8 + $0x458] sm:$0xff]
    %v4105 = vld [vmem:[#allocation8 + $0x460] sm:$0xff]
    %v4106 = vld [vmem:[#allocation8 + $0x468] sm:$0xff]
    %v4107 = vld [vmem:[#allocation8 + $0x470] sm:$0xff]
    %v4108 = vld [vmem:[#allocation8 + $0x478] sm:$0xff]
    %v4109 = vld [vmem:[#allocation8 + $0x480] sm:$0xff]
    %v4110 = vld [vmem:[#allocation8 + $0x488] sm:$0xff]
    %v4111 = vld [vmem:[#allocation8 + $0x490] sm:$0xff]
    %v4112 = vld [vmem:[#allocation8 + $0x498] sm:$0xff]
    %v4113 = vld [vmem:[#allocation8 + $0x4a0] sm:$0xff]
    %v4114 = vld [vmem:[#allocation8 + $0x4a8] sm:$0xff]
    %v4115 = vld [vmem:[#allocation8 + $0x4b0] sm:$0xff]
    %v4116 = vld [vmem:[#allocation8 + $0x4b8] sm:$0xff]
    %v4117 = vld [vmem:[#allocation8 + $0x4c0] sm:$0xff]
    %v4118 = vld [vmem:[#allocation8 + $0x4c8] sm:$0xff]
    %v4119 = vld [vmem:[#allocation8 + $0x4d0] sm:$0xff]
    %v4120 = vld [vmem:[#allocation8 + $0x4d8] sm:$0xff]
    %v4121 = vld [vmem:[#allocation8 + $0x4e0] sm:$0xff]
    %v4122 = vld [vmem:[#allocation8 + $0x4e8] sm:$0xff]
    %v4123 = vld [vmem:[#allocation8 + $0x4f0] sm:$0xff]
    %v4124 = vld [vmem:[#allocation8 + $0x4f8] sm:$0xff]
    %v4125 = vld [vmem:[#allocation8 + $0x500] sm:$0xff]
    %v4126 = vld [vmem:[#allocation8 + $0x508] sm:$0xff]
    %v4127 = vld [vmem:[#allocation8 + $0x510] sm:$0xff]
    %v4128 = vld [vmem:[#allocation8 + $0x518] sm:$0xff]
    %v4129 = vld [vmem:[#allocation8 + $0x520] sm:$0xff]
    %v4130 = vld [vmem:[#allocation8 + $0x528] sm:$0xff]
    %v4131 = vld [vmem:[#allocation8 + $0x530] sm:$0xff]
    %v4132 = vld [vmem:[#allocation8 + $0x538] sm:$0xff]
    %v4133 = vld [vmem:[#allocation8 + $0x540] sm:$0xff]
    %v4134 = vld [vmem:[#allocation8 + $0x548] sm:$0xff]
    %v4135 = vld [vmem:[#allocation8 + $0x550] sm:$0xff]
    %v4136 = vld [vmem:[#allocation8 + $0x558] sm:$0xff]
    %v4137 = vld [vmem:[#allocation8 + $0x560] sm:$0xff]
    %v4138 = vld [vmem:[#allocation8 + $0x568] sm:$0xff]
    %v4139 = vld [vmem:[#allocation8 + $0x570] sm:$0xff]
    %v4140 = vld [vmem:[#allocation8 + $0x578] sm:$0xff]
    %v4141 = vld [vmem:[#allocation8 + $0x580] sm:$0xff]
    %v4142 = vld [vmem:[#allocation8 + $0x588] sm:$0xff]
    %v4143 = vld [vmem:[#allocation8 + $0x590] sm:$0xff]
    %v4144 = vld [vmem:[#allocation8 + $0x598] sm:$0xff]
    %v4145 = vld [vmem:[#allocation8 + $0x5a0] sm:$0xff]
    %v4146 = vld [vmem:[#allocation8 + $0x5a8] sm:$0xff]
    %v4147 = vld [vmem:[#allocation8 + $0x5b0] sm:$0xff]
    %v4148 = vld [vmem:[#allocation8 + $0x5b8] sm:$0xff]
    %v4149 = vld [vmem:[#allocation8 + $0x5c0] sm:$0xff]
    %v4150 = vld [vmem:[#allocation8 + $0x5c8] sm:$0xff]
    %v4151 = vld [vmem:[#allocation8 + $0x5d0] sm:$0xff]
    %v4152 = vld [vmem:[#allocation8 + $0x5d8] sm:$0xff]
    %v4153 = vld [vmem:[#allocation8 + $0x5e0] sm:$0xff]
    %v4154 = vld [vmem:[#allocation8 + $0x5e8] sm:$0xff]
    %v4155 = vld [vmem:[#allocation8 + $0x5f0] sm:$0xff]
    %v4156 = vld [vmem:[#allocation8 + $0x5f8] sm:$0xff]
    %v4157 = vld [vmem:[#allocation8 + $0x600] sm:$0xff]
    %v4158 = vld [vmem:[#allocation8 + $0x608] sm:$0xff]
    %v4159 = vld [vmem:[#allocation8 + $0x610] sm:$0xff]
    %v4160 = vld [vmem:[#allocation8 + $0x618] sm:$0xff]
    %v4161 = vld [vmem:[#allocation8 + $0x620] sm:$0xff]
    %v4162 = vld [vmem:[#allocation8 + $0x628] sm:$0xff]
    %v4163 = vld [vmem:[#allocation8 + $0x630] sm:$0xff]
    %v4164 = vld [vmem:[#allocation8 + $0x638] sm:$0xff]
    %v4165 = vld [vmem:[#allocation8 + $0x640] sm:$0xff]
    %v4166 = vld [vmem:[#allocation8 + $0x648] sm:$0xff]
    %v4167 = vld [vmem:[#allocation8 + $0x650] sm:$0xff]
    %v4168 = vld [vmem:[#allocation8 + $0x658] sm:$0xff]
    %v4169 = vld [vmem:[#allocation8 + $0x660] sm:$0xff]
    %v4170 = vld [vmem:[#allocation8 + $0x668] sm:$0xff]
    %v4171 = vld [vmem:[#allocation8 + $0x670] sm:$0xff]
    %v4172 = vld [vmem:[#allocation8 + $0x678] sm:$0xff]
    %v4173 = vld [vmem:[#allocation8 + $0x680] sm:$0xff]
    %v4174 = vld [vmem:[#allocation8 + $0x688] sm:$0xff]
    %v4175 = vld [vmem:[#allocation8 + $0x690] sm:$0xff]
    %v4176 = vld [vmem:[#allocation8 + $0x698] sm:$0xff]
    %v4177 = vld [vmem:[#allocation8 + $0x6a0] sm:$0xff]
    %v4178 = vld [vmem:[#allocation8 + $0x6a8] sm:$0xff]
    %v4179 = vld [vmem:[#allocation8 + $0x6b0] sm:$0xff]
    %v4180 = vld [vmem:[#allocation8 + $0x6b8] sm:$0xff]
    %v4181 = vld [vmem:[#allocation8 + $0x6c0] sm:$0xff]
    %v4182 = vld [vmem:[#allocation8 + $0x6c8] sm:$0xff]
    %v4183 = vld [vmem:[#allocation8 + $0x6d0] sm:$0xff]
    %v4184 = vld [vmem:[#allocation8 + $0x6d8] sm:$0xff]
    %v4185 = vld [vmem:[#allocation8 + $0x6e0] sm:$0xff]
    %v4186 = vld [vmem:[#allocation8 + $0x6e8] sm:$0xff]
    %v4187 = vld [vmem:[#allocation8 + $0x6f0] sm:$0xff]
    %v4188 = vld [vmem:[#allocation8 + $0x6f8] sm:$0xff]
    %v4189 = vld [vmem:[#allocation8 + $0x700] sm:$0xff]
    %v4190 = vld [vmem:[#allocation8 + $0x708] sm:$0xff]
    %v4191 = vld [vmem:[#allocation8 + $0x710] sm:$0xff]
    %v4192 = vld [vmem:[#allocation8 + $0x718] sm:$0xff]
    %v4193 = vld [vmem:[#allocation8 + $0x720] sm:$0xff]
    %v4194 = vld [vmem:[#allocation8 + $0x728] sm:$0xff]
    %v4195 = vld [vmem:[#allocation8 + $0x730] sm:$0xff]
    %v4196 = vld [vmem:[#allocation8 + $0x738] sm:$0xff]
    %v4197 = vld [vmem:[#allocation8 + $0x740] sm:$0xff]
    %v4198 = vld [vmem:[#allocation8 + $0x748] sm:$0xff]
    %v4199 = vld [vmem:[#allocation8 + $0x750] sm:$0xff]
    %v4200 = vld [vmem:[#allocation8 + $0x758] sm:$0xff]
    %v4201 = vld [vmem:[#allocation8 + $0x760] sm:$0xff]
    %v4202 = vld [vmem:[#allocation8 + $0x768] sm:$0xff]
    %v4203 = vld [vmem:[#allocation8 + $0x770] sm:$0xff]
    %v4204 = vld [vmem:[#allocation8 + $0x778] sm:$0xff]
    %v4205 = vld [vmem:[#allocation8 + $0x780] sm:$0xff]
    %v4206 = vld [vmem:[#allocation8 + $0x788] sm:$0xff]
    %v4207 = vld [vmem:[#allocation8 + $0x790] sm:$0xff]
    %v4208 = vld [vmem:[#allocation8 + $0x798] sm:$0xff]
    %v4209 = vld [vmem:[#allocation8 + $0x7a0] sm:$0xff]
    %v4210 = vld [vmem:[#allocation8 + $0x7a8] sm:$0xff]
    %v4211 = vld [vmem:[#allocation8 + $0x7b0] sm:$0xff]
    %v4212 = vld [vmem:[#allocation8 + $0x7b8] sm:$0xff]
    %v4213 = vld [vmem:[#allocation8 + $0x7c0] sm:$0xff]
    %v4214 = vld [vmem:[#allocation8 + $0x7c8] sm:$0xff]
    %v4215 = vld [vmem:[#allocation8 + $0x7d0] sm:$0xff]
    %v4216 = vld [vmem:[#allocation8 + $0x7d8] sm:$0xff]
    %v4217 = vld [vmem:[#allocation8 + $0x7e0] sm:$0xff]
    %v4218 = vld [vmem:[#allocation8 + $0x7e8] sm:$0xff]
    %v4219 = vld [vmem:[#allocation8 + $0x7f0] sm:$0xff]
    %v4220 = vld [vmem:[#allocation8 + $0x7f8] sm:$0xff]
    %v4221 = vld [vmem:[#allocation8 + $0x800] sm:$0xff]
    %v4222 = vld [vmem:[#allocation8 + $0x808] sm:$0xff]
    %v4223 = vld [vmem:[#allocation8 + $0x810] sm:$0xff]
    %v4224 = vld [vmem:[#allocation8 + $0x818] sm:$0xff]
    %v4225 = vld [vmem:[#allocation8 + $0x820] sm:$0xff]
    %v4226 = vld [vmem:[#allocation8 + $0x828] sm:$0xff]
    %v4227 = vld [vmem:[#allocation8 + $0x830] sm:$0xff]
    %v4228 = vld [vmem:[#allocation8 + $0x838] sm:$0xff]
    %v4229 = vld [vmem:[#allocation8 + $0x840] sm:$0xff]
    %v4230 = vld [vmem:[#allocation8 + $0x848] sm:$0xff]
    %v4231 = vld [vmem:[#allocation8 + $0x850] sm:$0xff]
    %v4232 = vld [vmem:[#allocation8 + $0x858] sm:$0xff]
    %v4233 = vld [vmem:[#allocation8 + $0x860] sm:$0xff]
    %v4234 = vld [vmem:[#allocation8 + $0x868] sm:$0xff]
    %v4235 = vld [vmem:[#allocation8 + $0x870] sm:$0xff]
    %v4236 = vld [vmem:[#allocation8 + $0x878] sm:$0xff]
    %v4237 = vld [vmem:[#allocation8 + $0x880] sm:$0xff]
    %v4238 = vld [vmem:[#allocation8 + $0x888] sm:$0xff]
    %v4239 = vld [vmem:[#allocation8 + $0x890] sm:$0xff]
    %v4240 = vld [vmem:[#allocation8 + $0x898] sm:$0xff]
    %v4241 = vld [vmem:[#allocation8 + $0x8a0] sm:$0xff]
    %v4242 = vld [vmem:[#allocation8 + $0x8a8] sm:$0xff]
    %v4243 = vld [vmem:[#allocation8 + $0x8b0] sm:$0xff]
    %v4244 = vld [vmem:[#allocation8 + $0x8b8] sm:$0xff]
    %v4245 = vld [vmem:[#allocation8 + $0x8c0] sm:$0xff]
    %v4246 = vld [vmem:[#allocation8 + $0x8c8] sm:$0xff]
    %v4247 = vld [vmem:[#allocation8 + $0x8d0] sm:$0xff]
    %v4248 = vld [vmem:[#allocation8 + $0x8d8] sm:$0xff]
    %v4249 = vld [vmem:[#allocation8 + $0x8e0] sm:$0xff]
    %v4250 = vld [vmem:[#allocation8 + $0x8e8] sm:$0xff]
    %v4251 = vld [vmem:[#allocation8 + $0x8f0] sm:$0xff]
    %v4252 = vld [vmem:[#allocation8 + $0x8f8] sm:$0xff]
    %v4253 = vld [vmem:[#allocation8 + $0x900] sm:$0xff]
    %v4254 = vld [vmem:[#allocation8 + $0x908] sm:$0xff]
    %v4255 = vld [vmem:[#allocation8 + $0x910] sm:$0xff]
    %v4256 = vld [vmem:[#allocation8 + $0x918] sm:$0xff]
    %v4257 = vld [vmem:[#allocation8 + $0x920] sm:$0xff]
    %v4258 = vld [vmem:[#allocation8 + $0x928] sm:$0xff]
    %v4259 = vld [vmem:[#allocation8 + $0x930] sm:$0xff]
    %v4260 = vld [vmem:[#allocation8 + $0x938] sm:$0xff]
    %v4261 = vld [vmem:[#allocation8 + $0x940] sm:$0xff]
    %v4262 = vld [vmem:[#allocation8 + $0x948] sm:$0xff]
    %v4263 = vld [vmem:[#allocation8 + $0x950] sm:$0xff]
    %v4264 = vld [vmem:[#allocation8 + $0x958] sm:$0xff]
    %v4265 = vld [vmem:[#allocation8 + $0x960] sm:$0xff]
    %v4266 = vld [vmem:[#allocation8 + $0x968] sm:$0xff]
    %v4267 = vld [vmem:[#allocation8 + $0x970] sm:$0xff]
    %v4268 = vld [vmem:[#allocation8 + $0x978] sm:$0xff]
    %v4269 = vld [vmem:[#allocation8 + $0x980] sm:$0xff]
    %v4270 = vld [vmem:[#allocation8 + $0x988] sm:$0xff]
    %v4271 = vld [vmem:[#allocation8 + $0x990] sm:$0xff]
    %v4272 = vld [vmem:[#allocation8 + $0x998] sm:$0xff]
    %v4273 = vld [vmem:[#allocation8 + $0x9a0] sm:$0xff]
    %v4274 = vld [vmem:[#allocation8 + $0x9a8] sm:$0xff]
    %v4275 = vld [vmem:[#allocation8 + $0x9b0] sm:$0xff]
    %v4276 = vld [vmem:[#allocation8 + $0x9b8] sm:$0xff]
    %v4277 = vld [vmem:[#allocation8 + $0x9c0] sm:$0xff]
    %v4278 = vld [vmem:[#allocation8 + $0x9c8] sm:$0xff]
    %v4279 = vld [vmem:[#allocation8 + $0x9d0] sm:$0xff]
    %v4280 = vld [vmem:[#allocation8 + $0x9d8] sm:$0xff]
    %v4281 = vld [vmem:[#allocation8 + $0x9e0] sm:$0xff]
    %v4282 = vld [vmem:[#allocation8 + $0x9e8] sm:$0xff]
    %v4283 = vld [vmem:[#allocation8 + $0x9f0] sm:$0xff]
    %v4284 = vld [vmem:[#allocation8 + $0x9f8] sm:$0xff]
    %v4285 = vld [vmem:[#allocation8 + $0xa00] sm:$0xff]
    %v4286 = vld [vmem:[#allocation8 + $0xa08] sm:$0xff]
    %v4287 = vld [vmem:[#allocation8 + $0xa10] sm:$0xff]
    %v4288 = vld [vmem:[#allocation8 + $0xa18] sm:$0xff]
    %v4289 = vld [vmem:[#allocation8 + $0xa20] sm:$0xff]
    %v4290 = vld [vmem:[#allocation8 + $0xa28] sm:$0xff]
    %v4291 = vld [vmem:[#allocation8 + $0xa30] sm:$0xff]
    %v4292 = vld [vmem:[#allocation8 + $0xa38] sm:$0xff]
    %v4293 = vld [vmem:[#allocation8 + $0xa40] sm:$0xff]
    %v4294 = vld [vmem:[#allocation8 + $0xa48] sm:$0xff]
    %v4295 = vld [vmem:[#allocation8 + $0xa50] sm:$0xff]
    %v4296 = vld [vmem:[#allocation8 + $0xa58] sm:$0xff]
    %v4297 = vld [vmem:[#allocation8 + $0xa60] sm:$0xff]
    %v4298 = vld [vmem:[#allocation8 + $0xa68] sm:$0xff]
    %v4299 = vld [vmem:[#allocation8 + $0xa70] sm:$0xff]
    %v4300 = vld [vmem:[#allocation8 + $0xa78] sm:$0xff]
    %v4301 = vld [vmem:[#allocation8 + $0xa80] sm:$0xff]
    %v4302 = vld [vmem:[#allocation8 + $0xa88] sm:$0xff]
    %v4303 = vld [vmem:[#allocation8 + $0xa90] sm:$0xff]
    %v4304 = vld [vmem:[#allocation8 + $0xa98] sm:$0xff]
    %v4305 = vld [vmem:[#allocation8 + $0xaa0] sm:$0xff]
    %v4306 = vld [vmem:[#allocation8 + $0xaa8] sm:$0xff]
    %v4307 = vld [vmem:[#allocation8 + $0xab0] sm:$0xff]
    %v4308 = vld [vmem:[#allocation8 + $0xab8] sm:$0xff]
    %v4309 = vld [vmem:[#allocation8 + $0xac0] sm:$0xff]
    %v4310 = vld [vmem:[#allocation8 + $0xac8] sm:$0xff]
    %v4311 = vld [vmem:[#allocation8 + $0xad0] sm:$0xff]
    %v4312 = vld [vmem:[#allocation8 + $0xad8] sm:$0xff]
    %v4313 = vld [vmem:[#allocation8 + $0xae0] sm:$0xff]
    %v4314 = vld [vmem:[#allocation8 + $0xae8] sm:$0xff]
    %v4315 = vld [vmem:[#allocation8 + $0xaf0] sm:$0xff]
    %v4316 = vld [vmem:[#allocation8 + $0xaf8] sm:$0xff]
    %v4317 = vld [vmem:[#allocation8 + $0xb00] sm:$0xff]
    %v4318 = vld [vmem:[#allocation8 + $0xb08] sm:$0xff]
    %v4319 = vld [vmem:[#allocation8 + $0xb10] sm:$0xff]
    %v4320 = vld [vmem:[#allocation8 + $0xb18] sm:$0xff]
    %v4321 = vld [vmem:[#allocation8 + $0xb20] sm:$0xff]
    %v4322 = vld [vmem:[#allocation8 + $0xb28] sm:$0xff]
    %v4323 = vld [vmem:[#allocation8 + $0xb30] sm:$0xff]
    %v4324 = vld [vmem:[#allocation8 + $0xb38] sm:$0xff]
    %v4325 = vld [vmem:[#allocation8 + $0xb40] sm:$0xff]
    %v4326 = vld [vmem:[#allocation8 + $0xb48] sm:$0xff]
    %v4327 = vld [vmem:[#allocation8 + $0xb50] sm:$0xff]
    %v4328 = vld [vmem:[#allocation8 + $0xb58] sm:$0xff]
    %v4329 = vld [vmem:[#allocation8 + $0xb60] sm:$0xff]
    %v4330 = vld [vmem:[#allocation8 + $0xb68] sm:$0xff]
    %v4331 = vld [vmem:[#allocation8 + $0xb70] sm:$0xff]
    %v4332 = vld [vmem:[#allocation8 + $0xb78] sm:$0xff]
    %v4333 = vld [vmem:[#allocation8 + $0xb80] sm:$0xff]
    %v4334 = vld [vmem:[#allocation8 + $0xb88] sm:$0xff]
    %v4335 = vld [vmem:[#allocation8 + $0xb90] sm:$0xff]
    %v4336 = vld [vmem:[#allocation8 + $0xb98] sm:$0xff]
    %v4337 = vld [vmem:[#allocation8 + $0xba0] sm:$0xff]
    %v4338 = vld [vmem:[#allocation8 + $0xba8] sm:$0xff]
    %v4339 = vld [vmem:[#allocation8 + $0xbb0] sm:$0xff]
    %v4340 = vld [vmem:[#allocation8 + $0xbb8] sm:$0xff]
    %v4341 = vld [vmem:[#allocation8 + $0xbc0] sm:$0xff]
    %v4342 = vld [vmem:[#allocation8 + $0xbc8] sm:$0xff]
    %v4343 = vld [vmem:[#allocation8 + $0xbd0] sm:$0xff]
    %v4344 = vld [vmem:[#allocation8 + $0xbd8] sm:$0xff]
    %v4345 = vld [vmem:[#allocation8 + $0xbe0] sm:$0xff]
    %v4346 = vld [vmem:[#allocation8 + $0xbe8] sm:$0xff]
    %v4347 = vld [vmem:[#allocation8 + $0xbf0] sm:$0xff]
    %v4348 = vld [vmem:[#allocation8 + $0xbf8] sm:$0xff]
    %v4349 = vld [vmem:[#allocation8 + $0xc00] sm:$0xff]
    %v4350 = vld [vmem:[#allocation8 + $0xc08] sm:$0xff]
    %v4351 = vld [vmem:[#allocation8 + $0xc10] sm:$0xff]
    %v4352 = vld [vmem:[#allocation8 + $0xc18] sm:$0xff]
    %v4353 = vld [vmem:[#allocation8 + $0xc20] sm:$0xff]
    %v4354 = vld [vmem:[#allocation8 + $0xc28] sm:$0xff]
    %v4355 = vld [vmem:[#allocation8 + $0xc30] sm:$0xff]
    %v4356 = vld [vmem:[#allocation8 + $0xc38] sm:$0xff]
    %v4357 = vld [vmem:[#allocation8 + $0xc40] sm:$0xff]
    %v4358 = vld [vmem:[#allocation8 + $0xc48] sm:$0xff]
    %v4359 = vld [vmem:[#allocation8 + $0xc50] sm:$0xff]
    %v4360 = vld [vmem:[#allocation8 + $0xc58] sm:$0xff]
    %v4361 = vld [vmem:[#allocation8 + $0xc60] sm:$0xff]
    %v4362 = vld [vmem:[#allocation8 + $0xc68] sm:$0xff]
    %v4363 = vld [vmem:[#allocation8 + $0xc70] sm:$0xff]
    %v4364 = vld [vmem:[#allocation8 + $0xc78] sm:$0xff]
    %v4365 = vld [vmem:[#allocation8 + $0xc80] sm:$0xff]
    %v4366 = vld [vmem:[#allocation8 + $0xc88] sm:$0xff]
    %v4367 = vld [vmem:[#allocation8 + $0xc90] sm:$0xff]
    %v4368 = vld [vmem:[#allocation8 + $0xc98] sm:$0xff]
    %v4369 = vld [vmem:[#allocation8 + $0xca0] sm:$0xff]
    %v4370 = vld [vmem:[#allocation8 + $0xca8] sm:$0xff]
    %v4371 = vld [vmem:[#allocation8 + $0xcb0] sm:$0xff]
    %v4372 = vld [vmem:[#allocation8 + $0xcb8] sm:$0xff]
    %v4373 = vld [vmem:[#allocation8 + $0xcc0] sm:$0xff]
    %v4374 = vld [vmem:[#allocation8 + $0xcc8] sm:$0xff]
    %v4375 = vld [vmem:[#allocation8 + $0xcd0] sm:$0xff]
    %v4376 = vld [vmem:[#allocation8 + $0xcd8] sm:$0xff]
    %v4377 = vld [vmem:[#allocation8 + $0xce0] sm:$0xff]
    %v4378 = vld [vmem:[#allocation8 + $0xce8] sm:$0xff]
    %v4379 = vld [vmem:[#allocation8 + $0xcf0] sm:$0xff]
    %v4380 = vld [vmem:[#allocation8 + $0xcf8] sm:$0xff]
    %v4381 = vld [vmem:[#allocation8 + $0xd00] sm:$0xff]
    %v4382 = vld [vmem:[#allocation8 + $0xd08] sm:$0xff]
    %v4383 = vld [vmem:[#allocation8 + $0xd10] sm:$0xff]
    %v4384 = vld [vmem:[#allocation8 + $0xd18] sm:$0xff]
    %v4385 = vld [vmem:[#allocation8 + $0xd20] sm:$0xff]
    %v4386 = vld [vmem:[#allocation8 + $0xd28] sm:$0xff]
    %v4387 = vld [vmem:[#allocation8 + $0xd30] sm:$0xff]
    %v4388 = vld [vmem:[#allocation8 + $0xd38] sm:$0xff]
    %v4389 = vld [vmem:[#allocation8 + $0xd40] sm:$0xff]
    %v4390 = vld [vmem:[#allocation8 + $0xd48] sm:$0xff]
    %v4391 = vld [vmem:[#allocation8 + $0xd50] sm:$0xff]
    %v4392 = vld [vmem:[#allocation8 + $0xd58] sm:$0xff]
    %v4393 = vld [vmem:[#allocation8 + $0xd60] sm:$0xff]
    %v4394 = vld [vmem:[#allocation8 + $0xd68] sm:$0xff]
    %v4395 = vld [vmem:[#allocation8 + $0xd70] sm:$0xff]
    %v4396 = vld [vmem:[#allocation8 + $0xd78] sm:$0xff]
    %v4397 = vld [vmem:[#allocation8 + $0xd80] sm:$0xff]
    %v4398 = vld [vmem:[#allocation8 + $0xd88] sm:$0xff]
    %v4399 = vld [vmem:[#allocation8 + $0xd90] sm:$0xff]
    %v4400 = vld [vmem:[#allocation8 + $0xd98] sm:$0xff]
    %v4401 = vld [vmem:[#allocation8 + $0xda0] sm:$0xff]
    %v4402 = vld [vmem:[#allocation8 + $0xda8] sm:$0xff]
    %v4403 = vld [vmem:[#allocation8 + $0xdb0] sm:$0xff]
    %v4404 = vld [vmem:[#allocation8 + $0xdb8] sm:$0xff]
    %v4405 = vld [vmem:[#allocation8 + $0xdc0] sm:$0xff]
    %v4406 = vld [vmem:[#allocation8 + $0xdc8] sm:$0xff]
    %v4407 = vld [vmem:[#allocation8 + $0xdd0] sm:$0xff]
    %v4408 = vld [vmem:[#allocation8 + $0xdd8] sm:$0xff]
    %v4409 = vld [vmem:[#allocation8 + $0xde0] sm:$0xff]
    %v4410 = vld [vmem:[#allocation8 + $0xde8] sm:$0xff]
    %v4411 = vld [vmem:[#allocation8 + $0xdf0] sm:$0xff]
    %v4412 = vld [vmem:[#allocation8 + $0xdf8] sm:$0xff]
    %v4413 = vld [vmem:[#allocation8 + $0xe00] sm:$0xff]
    %v4414 = vld [vmem:[#allocation8 + $0xe08] sm:$0xff]
    %v4415 = vld [vmem:[#allocation8 + $0xe10] sm:$0xff]
    %v4416 = vld [vmem:[#allocation8 + $0xe18] sm:$0xff]
    %v4417 = vld [vmem:[#allocation8 + $0xe20] sm:$0xff]
    %v4418 = vld [vmem:[#allocation8 + $0xe28] sm:$0xff]
    %v4419 = vld [vmem:[#allocation8 + $0xe30] sm:$0xff]
    %v4420 = vld [vmem:[#allocation8 + $0xe38] sm:$0xff]
    %v4421 = vld [vmem:[#allocation8 + $0xe40] sm:$0xff]
    %v4422 = vld [vmem:[#allocation8 + $0xe48] sm:$0xff]
    %v4423 = vld [vmem:[#allocation8 + $0xe50] sm:$0xff]
    %v4424 = vld [vmem:[#allocation8 + $0xe58] sm:$0xff]
    %v4425 = vld [vmem:[#allocation8 + $0xe60] sm:$0xff]
    %v4426 = vld [vmem:[#allocation8 + $0xe68] sm:$0xff]
    %v4427 = vld [vmem:[#allocation8 + $0xe70] sm:$0xff]
    %v4428 = vld [vmem:[#allocation8 + $0xe78] sm:$0xff]
    %v4429 = vld [vmem:[#allocation8 + $0xe80] sm:$0xff]
    %v4430 = vld [vmem:[#allocation8 + $0xe88] sm:$0xff]
    %v4431 = vld [vmem:[#allocation8 + $0xe90] sm:$0xff]
    %v4432 = vld [vmem:[#allocation8 + $0xe98] sm:$0xff]
    %v4433 = vld [vmem:[#allocation8 + $0xea0] sm:$0xff]
    %v4434 = vld [vmem:[#allocation8 + $0xea8] sm:$0xff]
    %v4435 = vld [vmem:[#allocation8 + $0xeb0] sm:$0xff]
    %v4436 = vld [vmem:[#allocation8 + $0xeb8] sm:$0xff]
    %v4437 = vld [vmem:[#allocation8 + $0xec0] sm:$0xff]
    %v4438 = vld [vmem:[#allocation8 + $0xec8] sm:$0xff]
    %v4439 = vld [vmem:[#allocation8 + $0xed0] sm:$0xff]
    %v4440 = vld [vmem:[#allocation8 + $0xed8] sm:$0xff]
    %v4441 = vld [vmem:[#allocation8 + $0xee0] sm:$0xff]
    %v4442 = vld [vmem:[#allocation8 + $0xee8] sm:$0xff]
    %v4443 = vld [vmem:[#allocation8 + $0xef0] sm:$0xff]
    %v4444 = vld [vmem:[#allocation8 + $0xef8] sm:$0xff]
    %v4445 = vld [vmem:[#allocation8 + $0xf00] sm:$0xff]
    %v4446 = vld [vmem:[#allocation8 + $0xf08] sm:$0xff]
    %v4447 = vld [vmem:[#allocation8 + $0xf10] sm:$0xff]
    %v4448 = vld [vmem:[#allocation8 + $0xf18] sm:$0xff]
    %v4449 = vld [vmem:[#allocation8 + $0xf20] sm:$0xff]
    %v4450 = vld [vmem:[#allocation8 + $0xf28] sm:$0xff]
    %v4451 = vld [vmem:[#allocation8 + $0xf30] sm:$0xff]
    %v4452 = vld [vmem:[#allocation8 + $0xf38] sm:$0xff]
    %v4453 = vld [vmem:[#allocation8 + $0xf40] sm:$0xff]
    %v4454 = vld [vmem:[#allocation8 + $0xf48] sm:$0xff]
    %v4455 = vld [vmem:[#allocation8 + $0xf50] sm:$0xff]
    %v4456 = vld [vmem:[#allocation8 + $0xf58] sm:$0xff]
    %v4457 = vld [vmem:[#allocation8 + $0xf60] sm:$0xff]
    %v4458 = vld [vmem:[#allocation8 + $0xf68] sm:$0xff]
    %v4459 = vld [vmem:[#allocation8 + $0xf70] sm:$0xff]
    %v4460 = vld [vmem:[#allocation8 + $0xf78] sm:$0xff]
    %v4461 = vld [vmem:[#allocation8 + $0xf80] sm:$0xff]
    %v4462 = vld [vmem:[#allocation8 + $0xf88] sm:$0xff]
    %v4463 = vld [vmem:[#allocation8 + $0xf90] sm:$0xff]
    %v4464 = vld [vmem:[#allocation8 + $0xf98] sm:$0xff]
    %v4465 = vld [vmem:[#allocation8 + $0xfa0] sm:$0xff]
    %v4466 = vld [vmem:[#allocation8 + $0xfa8] sm:$0xff]
    %v4467 = vld [vmem:[#allocation8 + $0xfb0] sm:$0xff]
    %v4468 = vld [vmem:[#allocation8 + $0xfb8] sm:$0xff]
    %v4469 = vld [vmem:[#allocation8 + $0xfc0] sm:$0xff]
    %v4470 = vld [vmem:[#allocation8 + $0xfc8] sm:$0xff]
    %v4471 = vld [vmem:[#allocation8 + $0xfd0] sm:$0xff]
    %v4472 = vld [vmem:[#allocation8 + $0xfd8] sm:$0xff]
    %v4473 = vld [vmem:[#allocation8 + $0xfe0] sm:$0xff]
    %v4474 = vld [vmem:[#allocation8 + $0xfe8] sm:$0xff]
    %v4475 = vld [vmem:[#allocation8 + $0xff0] sm:$0xff]
    %v4476 = vld [vmem:[#allocation8 + $0xff8] sm:$0xff]
    %v4989 = vunpack.c.l.b16 %v3965
    %v4990 = vunpack.c.h.b16 %v3965
    %v4991 = vunpack.c.l.b16 %v3966
    %v4992 = vunpack.c.h.b16 %v3966
    %v4993 = vunpack.c.l.b16 %v3967
    %v4994 = vunpack.c.h.b16 %v3967
    %v4995 = vunpack.c.l.b16 %v3968
    %v4996 = vunpack.c.h.b16 %v3968
    %v4997 = vunpack.c.l.b16 %v3969
    %v4998 = vunpack.c.h.b16 %v3969
    %v4999 = vunpack.c.l.b16 %v3970
    %v5000 = vunpack.c.h.b16 %v3970
    %v5001 = vunpack.c.l.b16 %v3971
    %v5002 = vunpack.c.h.b16 %v3971
    %v5003 = vunpack.c.l.b16 %v3972
    %v5004 = vunpack.c.h.b16 %v3972
    %v5005 = vunpack.c.l.b16 %v3973
    %v5006 = vunpack.c.h.b16 %v3973
    %v5007 = vunpack.c.l.b16 %v3974
    %v5008 = vunpack.c.h.b16 %v3974
    %v5009 = vunpack.c.l.b16 %v3975
    %v5010 = vunpack.c.h.b16 %v3975
    %v5011 = vunpack.c.l.b16 %v3976
    %v5012 = vunpack.c.h.b16 %v3976
    %v5013 = vunpack.c.l.b16 %v3977
    %v5014 = vunpack.c.h.b16 %v3977
    %v5015 = vunpack.c.l.b16 %v3978
    %v5016 = vunpack.c.h.b16 %v3978
    %v5017 = vunpack.c.l.b16 %v3979
    %v5018 = vunpack.c.h.b16 %v3979
    %v5019 = vunpack.c.l.b16 %v3980
    %v5020 = vunpack.c.h.b16 %v3980
    %v5021 = vunpack.c.l.b16 %v3981
    %v5022 = vunpack.c.h.b16 %v3981
    %v5023 = vunpack.c.l.b16 %v3982
    %v5024 = vunpack.c.h.b16 %v3982
    %v5025 = vunpack.c.l.b16 %v3983
    %v5026 = vunpack.c.h.b16 %v3983
    %v5027 = vunpack.c.l.b16 %v3984
    %v5028 = vunpack.c.h.b16 %v3984
    %v5029 = vunpack.c.l.b16 %v3985
    %v5030 = vunpack.c.h.b16 %v3985
    %v5031 = vunpack.c.l.b16 %v3986
    %v5032 = vunpack.c.h.b16 %v3986
    %v5033 = vunpack.c.l.b16 %v3987
    %v5034 = vunpack.c.h.b16 %v3987
    %v5035 = vunpack.c.l.b16 %v3988
    %v5036 = vunpack.c.h.b16 %v3988
    %v5037 = vunpack.c.l.b16 %v3989
    %v5038 = vunpack.c.h.b16 %v3989
    %v5039 = vunpack.c.l.b16 %v3990
    %v5040 = vunpack.c.h.b16 %v3990
    %v5041 = vunpack.c.l.b16 %v3991
    %v5042 = vunpack.c.h.b16 %v3991
    %v5043 = vunpack.c.l.b16 %v3992
    %v5044 = vunpack.c.h.b16 %v3992
    %v5045 = vunpack.c.l.b16 %v3993
    %v5046 = vunpack.c.h.b16 %v3993
    %v5047 = vunpack.c.l.b16 %v3994
    %v5048 = vunpack.c.h.b16 %v3994
    %v5049 = vunpack.c.l.b16 %v3995
    %v5050 = vunpack.c.h.b16 %v3995
    %v5051 = vunpack.c.l.b16 %v3996
    %v5052 = vunpack.c.h.b16 %v3996
    %v5053 = vunpack.c.l.b16 %v3997
    %v5054 = vunpack.c.h.b16 %v3997
    %v5055 = vunpack.c.l.b16 %v3998
    %v5056 = vunpack.c.h.b16 %v3998
    %v5057 = vunpack.c.l.b16 %v3999
    %v5058 = vunpack.c.h.b16 %v3999
    %v5059 = vunpack.c.l.b16 %v4000
    %v5060 = vunpack.c.h.b16 %v4000
    %v5061 = vunpack.c.l.b16 %v4001
    %v5062 = vunpack.c.h.b16 %v4001
    %v5063 = vunpack.c.l.b16 %v4002
    %v5064 = vunpack.c.h.b16 %v4002
    %v5065 = vunpack.c.l.b16 %v4003
    %v5066 = vunpack.c.h.b16 %v4003
    %v5067 = vunpack.c.l.b16 %v4004
    %v5068 = vunpack.c.h.b16 %v4004
    %v5069 = vunpack.c.l.b16 %v4005
    %v5070 = vunpack.c.h.b16 %v4005
    %v5071 = vunpack.c.l.b16 %v4006
    %v5072 = vunpack.c.h.b16 %v4006
    %v5073 = vunpack.c.l.b16 %v4007
    %v5074 = vunpack.c.h.b16 %v4007
    %v5075 = vunpack.c.l.b16 %v4008
    %v5076 = vunpack.c.h.b16 %v4008
    %v5077 = vunpack.c.l.b16 %v4009
    %v5078 = vunpack.c.h.b16 %v4009
    %v5079 = vunpack.c.l.b16 %v4010
    %v5080 = vunpack.c.h.b16 %v4010
    %v5081 = vunpack.c.l.b16 %v4011
    %v5082 = vunpack.c.h.b16 %v4011
    %v5083 = vunpack.c.l.b16 %v4012
    %v5084 = vunpack.c.h.b16 %v4012
    %v5085 = vunpack.c.l.b16 %v4013
    %v5086 = vunpack.c.h.b16 %v4013
    %v5087 = vunpack.c.l.b16 %v4014
    %v5088 = vunpack.c.h.b16 %v4014
    %v5089 = vunpack.c.l.b16 %v4015
    %v5090 = vunpack.c.h.b16 %v4015
    %v5091 = vunpack.c.l.b16 %v4016
    %v5092 = vunpack.c.h.b16 %v4016
    %v5093 = vunpack.c.l.b16 %v4017
    %v5094 = vunpack.c.h.b16 %v4017
    %v5095 = vunpack.c.l.b16 %v4018
    %v5096 = vunpack.c.h.b16 %v4018
    %v5097 = vunpack.c.l.b16 %v4019
    %v5098 = vunpack.c.h.b16 %v4019
    %v5099 = vunpack.c.l.b16 %v4020
    %v5100 = vunpack.c.h.b16 %v4020
    %v5101 = vunpack.c.l.b16 %v4021
    %v5102 = vunpack.c.h.b16 %v4021
    %v5103 = vunpack.c.l.b16 %v4022
    %v5104 = vunpack.c.h.b16 %v4022
    %v5105 = vunpack.c.l.b16 %v4023
    %v5106 = vunpack.c.h.b16 %v4023
    %v5107 = vunpack.c.l.b16 %v4024
    %v5108 = vunpack.c.h.b16 %v4024
    %v5109 = vunpack.c.l.b16 %v4025
    %v5110 = vunpack.c.h.b16 %v4025
    %v5111 = vunpack.c.l.b16 %v4026
    %v5112 = vunpack.c.h.b16 %v4026
    %v5113 = vunpack.c.l.b16 %v4027
    %v5114 = vunpack.c.h.b16 %v4027
    %v5115 = vunpack.c.l.b16 %v4028
    %v5116 = vunpack.c.h.b16 %v4028
    %v5117 = vunpack.c.l.b16 %v4029
    %v5118 = vunpack.c.h.b16 %v4029
    %v5119 = vunpack.c.l.b16 %v4030
    %v5120 = vunpack.c.h.b16 %v4030
    %v5121 = vunpack.c.l.b16 %v4031
    %v5122 = vunpack.c.h.b16 %v4031
    %v5123 = vunpack.c.l.b16 %v4032
    %v5124 = vunpack.c.h.b16 %v4032
    %v5125 = vunpack.c.l.b16 %v4033
    %v5126 = vunpack.c.h.b16 %v4033
    %v5127 = vunpack.c.l.b16 %v4034
    %v5128 = vunpack.c.h.b16 %v4034
    %v5129 = vunpack.c.l.b16 %v4035
    %v5130 = vunpack.c.h.b16 %v4035
    %v5131 = vunpack.c.l.b16 %v4036
    %v5132 = vunpack.c.h.b16 %v4036
    %v5133 = vunpack.c.l.b16 %v4037
    %v5134 = vunpack.c.h.b16 %v4037
    %v5135 = vunpack.c.l.b16 %v4038
    %v5136 = vunpack.c.h.b16 %v4038
    %v5137 = vunpack.c.l.b16 %v4039
    %v5138 = vunpack.c.h.b16 %v4039
    %v5139 = vunpack.c.l.b16 %v4040
    %v5140 = vunpack.c.h.b16 %v4040
    %v5141 = vunpack.c.l.b16 %v4041
    %v5142 = vunpack.c.h.b16 %v4041
    %v5143 = vunpack.c.l.b16 %v4042
    %v5144 = vunpack.c.h.b16 %v4042
    %v5145 = vunpack.c.l.b16 %v4043
    %v5146 = vunpack.c.h.b16 %v4043
    %v5147 = vunpack.c.l.b16 %v4044
    %v5148 = vunpack.c.h.b16 %v4044
    %v5149 = vunpack.c.l.b16 %v4045
    %v5150 = vunpack.c.h.b16 %v4045
    %v5151 = vunpack.c.l.b16 %v4046
    %v5152 = vunpack.c.h.b16 %v4046
    %v5153 = vunpack.c.l.b16 %v4047
    %v5154 = vunpack.c.h.b16 %v4047
    %v5155 = vunpack.c.l.b16 %v4048
    %v5156 = vunpack.c.h.b16 %v4048
    %v5157 = vunpack.c.l.b16 %v4049
    %v5158 = vunpack.c.h.b16 %v4049
    %v5159 = vunpack.c.l.b16 %v4050
    %v5160 = vunpack.c.h.b16 %v4050
    %v5161 = vunpack.c.l.b16 %v4051
    %v5162 = vunpack.c.h.b16 %v4051
    %v5163 = vunpack.c.l.b16 %v4052
    %v5164 = vunpack.c.h.b16 %v4052
    %v5165 = vunpack.c.l.b16 %v4053
    %v5166 = vunpack.c.h.b16 %v4053
    %v5167 = vunpack.c.l.b16 %v4054
    %v5168 = vunpack.c.h.b16 %v4054
    %v5169 = vunpack.c.l.b16 %v4055
    %v5170 = vunpack.c.h.b16 %v4055
    %v5171 = vunpack.c.l.b16 %v4056
    %v5172 = vunpack.c.h.b16 %v4056
    %v5173 = vunpack.c.l.b16 %v4057
    %v5174 = vunpack.c.h.b16 %v4057
    %v5175 = vunpack.c.l.b16 %v4058
    %v5176 = vunpack.c.h.b16 %v4058
    %v5177 = vunpack.c.l.b16 %v4059
    %v5178 = vunpack.c.h.b16 %v4059
    %v5179 = vunpack.c.l.b16 %v4060
    %v5180 = vunpack.c.h.b16 %v4060
    %v5181 = vunpack.c.l.b16 %v4061
    %v5182 = vunpack.c.h.b16 %v4061
    %v5183 = vunpack.c.l.b16 %v4062
    %v5184 = vunpack.c.h.b16 %v4062
    %v5185 = vunpack.c.l.b16 %v4063
    %v5186 = vunpack.c.h.b16 %v4063
    %v5187 = vunpack.c.l.b16 %v4064
    %v5188 = vunpack.c.h.b16 %v4064
    %v5189 = vunpack.c.l.b16 %v4065
    %v5190 = vunpack.c.h.b16 %v4065
    %v5191 = vunpack.c.l.b16 %v4066
    %v5192 = vunpack.c.h.b16 %v4066
    %v5193 = vunpack.c.l.b16 %v4067
    %v5194 = vunpack.c.h.b16 %v4067
    %v5195 = vunpack.c.l.b16 %v4068
    %v5196 = vunpack.c.h.b16 %v4068
    %v5197 = vunpack.c.l.b16 %v4069
    %v5198 = vunpack.c.h.b16 %v4069
    %v5199 = vunpack.c.l.b16 %v4070
    %v5200 = vunpack.c.h.b16 %v4070
    %v5201 = vunpack.c.l.b16 %v4071
    %v5202 = vunpack.c.h.b16 %v4071
    %v5203 = vunpack.c.l.b16 %v4072
    %v5204 = vunpack.c.h.b16 %v4072
    %v5205 = vunpack.c.l.b16 %v4073
    %v5206 = vunpack.c.h.b16 %v4073
    %v5207 = vunpack.c.l.b16 %v4074
    %v5208 = vunpack.c.h.b16 %v4074
    %v5209 = vunpack.c.l.b16 %v4075
    %v5210 = vunpack.c.h.b16 %v4075
    %v5211 = vunpack.c.l.b16 %v4076
    %v5212 = vunpack.c.h.b16 %v4076
    %v5213 = vunpack.c.l.b16 %v4077
    %v5214 = vunpack.c.h.b16 %v4077
    %v5215 = vunpack.c.l.b16 %v4078
    %v5216 = vunpack.c.h.b16 %v4078
    %v5217 = vunpack.c.l.b16 %v4079
    %v5218 = vunpack.c.h.b16 %v4079
    %v5219 = vunpack.c.l.b16 %v4080
    %v5220 = vunpack.c.h.b16 %v4080
    %v5221 = vunpack.c.l.b16 %v4081
    %v5222 = vunpack.c.h.b16 %v4081
    %v5223 = vunpack.c.l.b16 %v4082
    %v5224 = vunpack.c.h.b16 %v4082
    %v5225 = vunpack.c.l.b16 %v4083
    %v5226 = vunpack.c.h.b16 %v4083
    %v5227 = vunpack.c.l.b16 %v4084
    %v5228 = vunpack.c.h.b16 %v4084
    %v5229 = vunpack.c.l.b16 %v4085
    %v5230 = vunpack.c.h.b16 %v4085
    %v5231 = vunpack.c.l.b16 %v4086
    %v5232 = vunpack.c.h.b16 %v4086
    %v5233 = vunpack.c.l.b16 %v4087
    %v5234 = vunpack.c.h.b16 %v4087
    %v5235 = vunpack.c.l.b16 %v4088
    %v5236 = vunpack.c.h.b16 %v4088
    %v5237 = vunpack.c.l.b16 %v4089
    %v5238 = vunpack.c.h.b16 %v4089
    %v5239 = vunpack.c.l.b16 %v4090
    %v5240 = vunpack.c.h.b16 %v4090
    %v5241 = vunpack.c.l.b16 %v4091
    %v5242 = vunpack.c.h.b16 %v4091
    %v5243 = vunpack.c.l.b16 %v4092
    %v5244 = vunpack.c.h.b16 %v4092
    %v5245 = vunpack.c.l.b16 %v4093
    %v5246 = vunpack.c.h.b16 %v4093
    %v5247 = vunpack.c.l.b16 %v4094
    %v5248 = vunpack.c.h.b16 %v4094
    %v5249 = vunpack.c.l.b16 %v4095
    %v5250 = vunpack.c.h.b16 %v4095
    %v5251 = vunpack.c.l.b16 %v4096
    %v5252 = vunpack.c.h.b16 %v4096
    %v5253 = vunpack.c.l.b16 %v4097
    %v5254 = vunpack.c.h.b16 %v4097
    %v5255 = vunpack.c.l.b16 %v4098
    %v5256 = vunpack.c.h.b16 %v4098
    %v5257 = vunpack.c.l.b16 %v4099
    %v5258 = vunpack.c.h.b16 %v4099
    %v5259 = vunpack.c.l.b16 %v4100
    %v5260 = vunpack.c.h.b16 %v4100
    %v5261 = vunpack.c.l.b16 %v4101
    %v5262 = vunpack.c.h.b16 %v4101
    %v5263 = vunpack.c.l.b16 %v4102
    %v5264 = vunpack.c.h.b16 %v4102
    %v5265 = vunpack.c.l.b16 %v4103
    %v5266 = vunpack.c.h.b16 %v4103
    %v5267 = vunpack.c.l.b16 %v4104
    %v5268 = vunpack.c.h.b16 %v4104
    %v5269 = vunpack.c.l.b16 %v4105
    %v5270 = vunpack.c.h.b16 %v4105
    %v5271 = vunpack.c.l.b16 %v4106
    %v5272 = vunpack.c.h.b16 %v4106
    %v5273 = vunpack.c.l.b16 %v4107
    %v5274 = vunpack.c.h.b16 %v4107
    %v5275 = vunpack.c.l.b16 %v4108
    %v5276 = vunpack.c.h.b16 %v4108
    %v5277 = vunpack.c.l.b16 %v4109
    %v5278 = vunpack.c.h.b16 %v4109
    %v5279 = vunpack.c.l.b16 %v4110
    %v5280 = vunpack.c.h.b16 %v4110
    %v5281 = vunpack.c.l.b16 %v4111
    %v5282 = vunpack.c.h.b16 %v4111
    %v5283 = vunpack.c.l.b16 %v4112
    %v5284 = vunpack.c.h.b16 %v4112
    %v5285 = vunpack.c.l.b16 %v4113
    %v5286 = vunpack.c.h.b16 %v4113
    %v5287 = vunpack.c.l.b16 %v4114
    %v5288 = vunpack.c.h.b16 %v4114
    %v5289 = vunpack.c.l.b16 %v4115
    %v5290 = vunpack.c.h.b16 %v4115
    %v5291 = vunpack.c.l.b16 %v4116
    %v5292 = vunpack.c.h.b16 %v4116
    %v5293 = vunpack.c.l.b16 %v4117
    %v5294 = vunpack.c.h.b16 %v4117
    %v5295 = vunpack.c.l.b16 %v4118
    %v5296 = vunpack.c.h.b16 %v4118
    %v5297 = vunpack.c.l.b16 %v4119
    %v5298 = vunpack.c.h.b16 %v4119
    %v5299 = vunpack.c.l.b16 %v4120
    %v5300 = vunpack.c.h.b16 %v4120
    %v5301 = vunpack.c.l.b16 %v4121
    %v5302 = vunpack.c.h.b16 %v4121
    %v5303 = vunpack.c.l.b16 %v4122
    %v5304 = vunpack.c.h.b16 %v4122
    %v5305 = vunpack.c.l.b16 %v4123
    %v5306 = vunpack.c.h.b16 %v4123
    %v5307 = vunpack.c.l.b16 %v4124
    %v5308 = vunpack.c.h.b16 %v4124
    %v5309 = vunpack.c.l.b16 %v4125
    %v5310 = vunpack.c.h.b16 %v4125
    %v5311 = vunpack.c.l.b16 %v4126
    %v5312 = vunpack.c.h.b16 %v4126
    %v5313 = vunpack.c.l.b16 %v4127
    %v5314 = vunpack.c.h.b16 %v4127
    %v5315 = vunpack.c.l.b16 %v4128
    %v5316 = vunpack.c.h.b16 %v4128
    %v5317 = vunpack.c.l.b16 %v4129
    %v5318 = vunpack.c.h.b16 %v4129
    %v5319 = vunpack.c.l.b16 %v4130
    %v5320 = vunpack.c.h.b16 %v4130
    %v5321 = vunpack.c.l.b16 %v4131
    %v5322 = vunpack.c.h.b16 %v4131
    %v5323 = vunpack.c.l.b16 %v4132
    %v5324 = vunpack.c.h.b16 %v4132
    %v5325 = vunpack.c.l.b16 %v4133
    %v5326 = vunpack.c.h.b16 %v4133
    %v5327 = vunpack.c.l.b16 %v4134
    %v5328 = vunpack.c.h.b16 %v4134
    %v5329 = vunpack.c.l.b16 %v4135
    %v5330 = vunpack.c.h.b16 %v4135
    %v5331 = vunpack.c.l.b16 %v4136
    %v5332 = vunpack.c.h.b16 %v4136
    %v5333 = vunpack.c.l.b16 %v4137
    %v5334 = vunpack.c.h.b16 %v4137
    %v5335 = vunpack.c.l.b16 %v4138
    %v5336 = vunpack.c.h.b16 %v4138
    %v5337 = vunpack.c.l.b16 %v4139
    %v5338 = vunpack.c.h.b16 %v4139
    %v5339 = vunpack.c.l.b16 %v4140
    %v5340 = vunpack.c.h.b16 %v4140
    %v5341 = vunpack.c.l.b16 %v4141
    %v5342 = vunpack.c.h.b16 %v4141
    %v5343 = vunpack.c.l.b16 %v4142
    %v5344 = vunpack.c.h.b16 %v4142
    %v5345 = vunpack.c.l.b16 %v4143
    %v5346 = vunpack.c.h.b16 %v4143
    %v5347 = vunpack.c.l.b16 %v4144
    %v5348 = vunpack.c.h.b16 %v4144
    %v5349 = vunpack.c.l.b16 %v4145
    %v5350 = vunpack.c.h.b16 %v4145
    %v5351 = vunpack.c.l.b16 %v4146
    %v5352 = vunpack.c.h.b16 %v4146
    %v5353 = vunpack.c.l.b16 %v4147
    %v5354 = vunpack.c.h.b16 %v4147
    %v5355 = vunpack.c.l.b16 %v4148
    %v5356 = vunpack.c.h.b16 %v4148
    %v5357 = vunpack.c.l.b16 %v4149
    %v5358 = vunpack.c.h.b16 %v4149
    %v5359 = vunpack.c.l.b16 %v4150
    %v5360 = vunpack.c.h.b16 %v4150
    %v5361 = vunpack.c.l.b16 %v4151
    %v5362 = vunpack.c.h.b16 %v4151
    %v5363 = vunpack.c.l.b16 %v4152
    %v5364 = vunpack.c.h.b16 %v4152
    %v5365 = vunpack.c.l.b16 %v4153
    %v5366 = vunpack.c.h.b16 %v4153
    %v5367 = vunpack.c.l.b16 %v4154
    %v5368 = vunpack.c.h.b16 %v4154
    %v5369 = vunpack.c.l.b16 %v4155
    %v5370 = vunpack.c.h.b16 %v4155
    %v5371 = vunpack.c.l.b16 %v4156
    %v5372 = vunpack.c.h.b16 %v4156
    %v5373 = vunpack.c.l.b16 %v4157
    %v5374 = vunpack.c.h.b16 %v4157
    %v5375 = vunpack.c.l.b16 %v4158
    %v5376 = vunpack.c.h.b16 %v4158
    %v5377 = vunpack.c.l.b16 %v4159
    %v5378 = vunpack.c.h.b16 %v4159
    %v5379 = vunpack.c.l.b16 %v4160
    %v5380 = vunpack.c.h.b16 %v4160
    %v5381 = vunpack.c.l.b16 %v4161
    %v5382 = vunpack.c.h.b16 %v4161
    %v5383 = vunpack.c.l.b16 %v4162
    %v5384 = vunpack.c.h.b16 %v4162
    %v5385 = vunpack.c.l.b16 %v4163
    %v5386 = vunpack.c.h.b16 %v4163
    %v5387 = vunpack.c.l.b16 %v4164
    %v5388 = vunpack.c.h.b16 %v4164
    %v5389 = vunpack.c.l.b16 %v4165
    %v5390 = vunpack.c.h.b16 %v4165
    %v5391 = vunpack.c.l.b16 %v4166
    %v5392 = vunpack.c.h.b16 %v4166
    %v5393 = vunpack.c.l.b16 %v4167
    %v5394 = vunpack.c.h.b16 %v4167
    %v5395 = vunpack.c.l.b16 %v4168
    %v5396 = vunpack.c.h.b16 %v4168
    %v5397 = vunpack.c.l.b16 %v4169
    %v5398 = vunpack.c.h.b16 %v4169
    %v5399 = vunpack.c.l.b16 %v4170
    %v5400 = vunpack.c.h.b16 %v4170
    %v5401 = vunpack.c.l.b16 %v4171
    %v5402 = vunpack.c.h.b16 %v4171
    %v5403 = vunpack.c.l.b16 %v4172
    %v5404 = vunpack.c.h.b16 %v4172
    %v5405 = vunpack.c.l.b16 %v4173
    %v5406 = vunpack.c.h.b16 %v4173
    %v5407 = vunpack.c.l.b16 %v4174
    %v5408 = vunpack.c.h.b16 %v4174
    %v5409 = vunpack.c.l.b16 %v4175
    %v5410 = vunpack.c.h.b16 %v4175
    %v5411 = vunpack.c.l.b16 %v4176
    %v5412 = vunpack.c.h.b16 %v4176
    %v5413 = vunpack.c.l.b16 %v4177
    %v5414 = vunpack.c.h.b16 %v4177
    %v5415 = vunpack.c.l.b16 %v4178
    %v5416 = vunpack.c.h.b16 %v4178
    %v5417 = vunpack.c.l.b16 %v4179
    %v5418 = vunpack.c.h.b16 %v4179
    %v5419 = vunpack.c.l.b16 %v4180
    %v5420 = vunpack.c.h.b16 %v4180
    %v5421 = vunpack.c.l.b16 %v4181
    %v5422 = vunpack.c.h.b16 %v4181
    %v5423 = vunpack.c.l.b16 %v4182
    %v5424 = vunpack.c.h.b16 %v4182
    %v5425 = vunpack.c.l.b16 %v4183
    %v5426 = vunpack.c.h.b16 %v4183
    %v5427 = vunpack.c.l.b16 %v4184
    %v5428 = vunpack.c.h.b16 %v4184
    %v5429 = vunpack.c.l.b16 %v4185
    %v5430 = vunpack.c.h.b16 %v4185
    %v5431 = vunpack.c.l.b16 %v4186
    %v5432 = vunpack.c.h.b16 %v4186
    %v5433 = vunpack.c.l.b16 %v4187
    %v5434 = vunpack.c.h.b16 %v4187
    %v5435 = vunpack.c.l.b16 %v4188
    %v5436 = vunpack.c.h.b16 %v4188
    %v5437 = vunpack.c.l.b16 %v4189
    %v5438 = vunpack.c.h.b16 %v4189
    %v5439 = vunpack.c.l.b16 %v4190
    %v5440 = vunpack.c.h.b16 %v4190
    %v5441 = vunpack.c.l.b16 %v4191
    %v5442 = vunpack.c.h.b16 %v4191
    %v5443 = vunpack.c.l.b16 %v4192
    %v5444 = vunpack.c.h.b16 %v4192
    %v5445 = vunpack.c.l.b16 %v4193
    %v5446 = vunpack.c.h.b16 %v4193
    %v5447 = vunpack.c.l.b16 %v4194
    %v5448 = vunpack.c.h.b16 %v4194
    %v5449 = vunpack.c.l.b16 %v4195
    %v5450 = vunpack.c.h.b16 %v4195
    %v5451 = vunpack.c.l.b16 %v4196
    %v5452 = vunpack.c.h.b16 %v4196
    %v5453 = vunpack.c.l.b16 %v4197
    %v5454 = vunpack.c.h.b16 %v4197
    %v5455 = vunpack.c.l.b16 %v4198
    %v5456 = vunpack.c.h.b16 %v4198
    %v5457 = vunpack.c.l.b16 %v4199
    %v5458 = vunpack.c.h.b16 %v4199
    %v5459 = vunpack.c.l.b16 %v4200
    %v5460 = vunpack.c.h.b16 %v4200
    %v5461 = vunpack.c.l.b16 %v4201
    %v5462 = vunpack.c.h.b16 %v4201
    %v5463 = vunpack.c.l.b16 %v4202
    %v5464 = vunpack.c.h.b16 %v4202
    %v5465 = vunpack.c.l.b16 %v4203
    %v5466 = vunpack.c.h.b16 %v4203
    %v5467 = vunpack.c.l.b16 %v4204
    %v5468 = vunpack.c.h.b16 %v4204
    %v5469 = vunpack.c.l.b16 %v4205
    %v5470 = vunpack.c.h.b16 %v4205
    %v5471 = vunpack.c.l.b16 %v4206
    %v5472 = vunpack.c.h.b16 %v4206
    %v5473 = vunpack.c.l.b16 %v4207
    %v5474 = vunpack.c.h.b16 %v4207
    %v5475 = vunpack.c.l.b16 %v4208
    %v5476 = vunpack.c.h.b16 %v4208
    %v5477 = vunpack.c.l.b16 %v4209
    %v5478 = vunpack.c.h.b16 %v4209
    %v5479 = vunpack.c.l.b16 %v4210
    %v5480 = vunpack.c.h.b16 %v4210
    %v5481 = vunpack.c.l.b16 %v4211
    %v5482 = vunpack.c.h.b16 %v4211
    %v5483 = vunpack.c.l.b16 %v4212
    %v5484 = vunpack.c.h.b16 %v4212
    %v5485 = vunpack.c.l.b16 %v4213
    %v5486 = vunpack.c.h.b16 %v4213
    %v5487 = vunpack.c.l.b16 %v4214
    %v5488 = vunpack.c.h.b16 %v4214
    %v5489 = vunpack.c.l.b16 %v4215
    %v5490 = vunpack.c.h.b16 %v4215
    %v5491 = vunpack.c.l.b16 %v4216
    %v5492 = vunpack.c.h.b16 %v4216
    %v5493 = vunpack.c.l.b16 %v4217
    %v5494 = vunpack.c.h.b16 %v4217
    %v5495 = vunpack.c.l.b16 %v4218
    %v5496 = vunpack.c.h.b16 %v4218
    %v5497 = vunpack.c.l.b16 %v4219
    %v5498 = vunpack.c.h.b16 %v4219
    %v5499 = vunpack.c.l.b16 %v4220
    %v5500 = vunpack.c.h.b16 %v4220
    %v5501 = vunpack.c.l.b16 %v4221
    %v5502 = vunpack.c.h.b16 %v4221
    %v5503 = vunpack.c.l.b16 %v4222
    %v5504 = vunpack.c.h.b16 %v4222
    %v5505 = vunpack.c.l.b16 %v4223
    %v5506 = vunpack.c.h.b16 %v4223
    %v5507 = vunpack.c.l.b16 %v4224
    %v5508 = vunpack.c.h.b16 %v4224
    %v5509 = vunpack.c.l.b16 %v4225
    %v5510 = vunpack.c.h.b16 %v4225
    %v5511 = vunpack.c.l.b16 %v4226
    %v5512 = vunpack.c.h.b16 %v4226
    %v5513 = vunpack.c.l.b16 %v4227
    %v5514 = vunpack.c.h.b16 %v4227
    %v5515 = vunpack.c.l.b16 %v4228
    %v5516 = vunpack.c.h.b16 %v4228
    %v5517 = vunpack.c.l.b16 %v4229
    %v5518 = vunpack.c.h.b16 %v4229
    %v5519 = vunpack.c.l.b16 %v4230
    %v5520 = vunpack.c.h.b16 %v4230
    %v5521 = vunpack.c.l.b16 %v4231
    %v5522 = vunpack.c.h.b16 %v4231
    %v5523 = vunpack.c.l.b16 %v4232
    %v5524 = vunpack.c.h.b16 %v4232
    %v5525 = vunpack.c.l.b16 %v4233
    %v5526 = vunpack.c.h.b16 %v4233
    %v5527 = vunpack.c.l.b16 %v4234
    %v5528 = vunpack.c.h.b16 %v4234
    %v5529 = vunpack.c.l.b16 %v4235
    %v5530 = vunpack.c.h.b16 %v4235
    %v5531 = vunpack.c.l.b16 %v4236
    %v5532 = vunpack.c.h.b16 %v4236
    %v5533 = vunpack.c.l.b16 %v4237
    %v5534 = vunpack.c.h.b16 %v4237
    %v5535 = vunpack.c.l.b16 %v4238
    %v5536 = vunpack.c.h.b16 %v4238
    %v5537 = vunpack.c.l.b16 %v4239
    %v5538 = vunpack.c.h.b16 %v4239
    %v5539 = vunpack.c.l.b16 %v4240
    %v5540 = vunpack.c.h.b16 %v4240
    %v5541 = vunpack.c.l.b16 %v4241
    %v5542 = vunpack.c.h.b16 %v4241
    %v5543 = vunpack.c.l.b16 %v4242
    %v5544 = vunpack.c.h.b16 %v4242
    %v5545 = vunpack.c.l.b16 %v4243
    %v5546 = vunpack.c.h.b16 %v4243
    %v5547 = vunpack.c.l.b16 %v4244
    %v5548 = vunpack.c.h.b16 %v4244
    %v5549 = vunpack.c.l.b16 %v4245
    %v5550 = vunpack.c.h.b16 %v4245
    %v5551 = vunpack.c.l.b16 %v4246
    %v5552 = vunpack.c.h.b16 %v4246
    %v5553 = vunpack.c.l.b16 %v4247
    %v5554 = vunpack.c.h.b16 %v4247
    %v5555 = vunpack.c.l.b16 %v4248
    %v5556 = vunpack.c.h.b16 %v4248
    %v5557 = vunpack.c.l.b16 %v4249
    %v5558 = vunpack.c.h.b16 %v4249
    %v5559 = vunpack.c.l.b16 %v4250
    %v5560 = vunpack.c.h.b16 %v4250
    %v5561 = vunpack.c.l.b16 %v4251
    %v5562 = vunpack.c.h.b16 %v4251
    %v5563 = vunpack.c.l.b16 %v4252
    %v5564 = vunpack.c.h.b16 %v4252
    %v5565 = vunpack.c.l.b16 %v4253
    %v5566 = vunpack.c.h.b16 %v4253
    %v5567 = vunpack.c.l.b16 %v4254
    %v5568 = vunpack.c.h.b16 %v4254
    %v5569 = vunpack.c.l.b16 %v4255
    %v5570 = vunpack.c.h.b16 %v4255
    %v5571 = vunpack.c.l.b16 %v4256
    %v5572 = vunpack.c.h.b16 %v4256
    %v5573 = vunpack.c.l.b16 %v4257
    %v5574 = vunpack.c.h.b16 %v4257
    %v5575 = vunpack.c.l.b16 %v4258
    %v5576 = vunpack.c.h.b16 %v4258
    %v5577 = vunpack.c.l.b16 %v4259
    %v5578 = vunpack.c.h.b16 %v4259
    %v5579 = vunpack.c.l.b16 %v4260
    %v5580 = vunpack.c.h.b16 %v4260
    %v5581 = vunpack.c.l.b16 %v4261
    %v5582 = vunpack.c.h.b16 %v4261
    %v5583 = vunpack.c.l.b16 %v4262
    %v5584 = vunpack.c.h.b16 %v4262
    %v5585 = vunpack.c.l.b16 %v4263
    %v5586 = vunpack.c.h.b16 %v4263
    %v5587 = vunpack.c.l.b16 %v4264
    %v5588 = vunpack.c.h.b16 %v4264
    %v5589 = vunpack.c.l.b16 %v4265
    %v5590 = vunpack.c.h.b16 %v4265
    %v5591 = vunpack.c.l.b16 %v4266
    %v5592 = vunpack.c.h.b16 %v4266
    %v5593 = vunpack.c.l.b16 %v4267
    %v5594 = vunpack.c.h.b16 %v4267
    %v5595 = vunpack.c.l.b16 %v4268
    %v5596 = vunpack.c.h.b16 %v4268
    %v5597 = vunpack.c.l.b16 %v4269
    %v5598 = vunpack.c.h.b16 %v4269
    %v5599 = vunpack.c.l.b16 %v4270
    %v5600 = vunpack.c.h.b16 %v4270
    %v5601 = vunpack.c.l.b16 %v4271
    %v5602 = vunpack.c.h.b16 %v4271
    %v5603 = vunpack.c.l.b16 %v4272
    %v5604 = vunpack.c.h.b16 %v4272
    %v5605 = vunpack.c.l.b16 %v4273
    %v5606 = vunpack.c.h.b16 %v4273
    %v5607 = vunpack.c.l.b16 %v4274
    %v5608 = vunpack.c.h.b16 %v4274
    %v5609 = vunpack.c.l.b16 %v4275
    %v5610 = vunpack.c.h.b16 %v4275
    %v5611 = vunpack.c.l.b16 %v4276
    %v5612 = vunpack.c.h.b16 %v4276
    %v5613 = vunpack.c.l.b16 %v4277
    %v5614 = vunpack.c.h.b16 %v4277
    %v5615 = vunpack.c.l.b16 %v4278
    %v5616 = vunpack.c.h.b16 %v4278
    %v5617 = vunpack.c.l.b16 %v4279
    %v5618 = vunpack.c.h.b16 %v4279
    %v5619 = vunpack.c.l.b16 %v4280
    %v5620 = vunpack.c.h.b16 %v4280
    %v5621 = vunpack.c.l.b16 %v4281
    %v5622 = vunpack.c.h.b16 %v4281
    %v5623 = vunpack.c.l.b16 %v4282
    %v5624 = vunpack.c.h.b16 %v4282
    %v5625 = vunpack.c.l.b16 %v4283
    %v5626 = vunpack.c.h.b16 %v4283
    %v5627 = vunpack.c.l.b16 %v4284
    %v5628 = vunpack.c.h.b16 %v4284
    %v5629 = vunpack.c.l.b16 %v4285
    %v5630 = vunpack.c.h.b16 %v4285
    %v5631 = vunpack.c.l.b16 %v4286
    %v5632 = vunpack.c.h.b16 %v4286
    %v5633 = vunpack.c.l.b16 %v4287
    %v5634 = vunpack.c.h.b16 %v4287
    %v5635 = vunpack.c.l.b16 %v4288
    %v5636 = vunpack.c.h.b16 %v4288
    %v5637 = vunpack.c.l.b16 %v4289
    %v5638 = vunpack.c.h.b16 %v4289
    %v5639 = vunpack.c.l.b16 %v4290
    %v5640 = vunpack.c.h.b16 %v4290
    %v5641 = vunpack.c.l.b16 %v4291
    %v5642 = vunpack.c.h.b16 %v4291
    %v5643 = vunpack.c.l.b16 %v4292
    %v5644 = vunpack.c.h.b16 %v4292
    %v5645 = vunpack.c.l.b16 %v4293
    %v5646 = vunpack.c.h.b16 %v4293
    %v5647 = vunpack.c.l.b16 %v4294
    %v5648 = vunpack.c.h.b16 %v4294
    %v5649 = vunpack.c.l.b16 %v4295
    %v5650 = vunpack.c.h.b16 %v4295
    %v5651 = vunpack.c.l.b16 %v4296
    %v5652 = vunpack.c.h.b16 %v4296
    %v5653 = vunpack.c.l.b16 %v4297
    %v5654 = vunpack.c.h.b16 %v4297
    %v5655 = vunpack.c.l.b16 %v4298
    %v5656 = vunpack.c.h.b16 %v4298
    %v5657 = vunpack.c.l.b16 %v4299
    %v5658 = vunpack.c.h.b16 %v4299
    %v5659 = vunpack.c.l.b16 %v4300
    %v5660 = vunpack.c.h.b16 %v4300
    %v5661 = vunpack.c.l.b16 %v4301
    %v5662 = vunpack.c.h.b16 %v4301
    %v5663 = vunpack.c.l.b16 %v4302
    %v5664 = vunpack.c.h.b16 %v4302
    %v5665 = vunpack.c.l.b16 %v4303
    %v5666 = vunpack.c.h.b16 %v4303
    %v5667 = vunpack.c.l.b16 %v4304
    %v5668 = vunpack.c.h.b16 %v4304
    %v5669 = vunpack.c.l.b16 %v4305
    %v5670 = vunpack.c.h.b16 %v4305
    %v5671 = vunpack.c.l.b16 %v4306
    %v5672 = vunpack.c.h.b16 %v4306
    %v5673 = vunpack.c.l.b16 %v4307
    %v5674 = vunpack.c.h.b16 %v4307
    %v5675 = vunpack.c.l.b16 %v4308
    %v5676 = vunpack.c.h.b16 %v4308
    %v5677 = vunpack.c.l.b16 %v4309
    %v5678 = vunpack.c.h.b16 %v4309
    %v5679 = vunpack.c.l.b16 %v4310
    %v5680 = vunpack.c.h.b16 %v4310
    %v5681 = vunpack.c.l.b16 %v4311
    %v5682 = vunpack.c.h.b16 %v4311
    %v5683 = vunpack.c.l.b16 %v4312
    %v5684 = vunpack.c.h.b16 %v4312
    %v5685 = vunpack.c.l.b16 %v4313
    %v5686 = vunpack.c.h.b16 %v4313
    %v5687 = vunpack.c.l.b16 %v4314
    %v5688 = vunpack.c.h.b16 %v4314
    %v5689 = vunpack.c.l.b16 %v4315
    %v5690 = vunpack.c.h.b16 %v4315
    %v5691 = vunpack.c.l.b16 %v4316
    %v5692 = vunpack.c.h.b16 %v4316
    %v5693 = vunpack.c.l.b16 %v4317
    %v5694 = vunpack.c.h.b16 %v4317
    %v5695 = vunpack.c.l.b16 %v4318
    %v5696 = vunpack.c.h.b16 %v4318
    %v5697 = vunpack.c.l.b16 %v4319
    %v5698 = vunpack.c.h.b16 %v4319
    %v5699 = vunpack.c.l.b16 %v4320
    %v5700 = vunpack.c.h.b16 %v4320
    %v5701 = vunpack.c.l.b16 %v4321
    %v5702 = vunpack.c.h.b16 %v4321
    %v5703 = vunpack.c.l.b16 %v4322
    %v5704 = vunpack.c.h.b16 %v4322
    %v5705 = vunpack.c.l.b16 %v4323
    %v5706 = vunpack.c.h.b16 %v4323
    %v5707 = vunpack.c.l.b16 %v4324
    %v5708 = vunpack.c.h.b16 %v4324
    %v5709 = vunpack.c.l.b16 %v4325
    %v5710 = vunpack.c.h.b16 %v4325
    %v5711 = vunpack.c.l.b16 %v4326
    %v5712 = vunpack.c.h.b16 %v4326
    %v5713 = vunpack.c.l.b16 %v4327
    %v5714 = vunpack.c.h.b16 %v4327
    %v5715 = vunpack.c.l.b16 %v4328
    %v5716 = vunpack.c.h.b16 %v4328
    %v5717 = vunpack.c.l.b16 %v4329
    %v5718 = vunpack.c.h.b16 %v4329
    %v5719 = vunpack.c.l.b16 %v4330
    %v5720 = vunpack.c.h.b16 %v4330
    %v5721 = vunpack.c.l.b16 %v4331
    %v5722 = vunpack.c.h.b16 %v4331
    %v5723 = vunpack.c.l.b16 %v4332
    %v5724 = vunpack.c.h.b16 %v4332
    %v5725 = vunpack.c.l.b16 %v4333
    %v5726 = vunpack.c.h.b16 %v4333
    %v5727 = vunpack.c.l.b16 %v4334
    %v5728 = vunpack.c.h.b16 %v4334
    %v5729 = vunpack.c.l.b16 %v4335
    %v5730 = vunpack.c.h.b16 %v4335
    %v5731 = vunpack.c.l.b16 %v4336
    %v5732 = vunpack.c.h.b16 %v4336
    %v5733 = vunpack.c.l.b16 %v4337
    %v5734 = vunpack.c.h.b16 %v4337
    %v5735 = vunpack.c.l.b16 %v4338
    %v5736 = vunpack.c.h.b16 %v4338
    %v5737 = vunpack.c.l.b16 %v4339
    %v5738 = vunpack.c.h.b16 %v4339
    %v5739 = vunpack.c.l.b16 %v4340
    %v5740 = vunpack.c.h.b16 %v4340
    %v5741 = vunpack.c.l.b16 %v4341
    %v5742 = vunpack.c.h.b16 %v4341
    %v5743 = vunpack.c.l.b16 %v4342
    %v5744 = vunpack.c.h.b16 %v4342
    %v5745 = vunpack.c.l.b16 %v4343
    %v5746 = vunpack.c.h.b16 %v4343
    %v5747 = vunpack.c.l.b16 %v4344
    %v5748 = vunpack.c.h.b16 %v4344
    %v5749 = vunpack.c.l.b16 %v4345
    %v5750 = vunpack.c.h.b16 %v4345
    %v5751 = vunpack.c.l.b16 %v4346
    %v5752 = vunpack.c.h.b16 %v4346
    %v5753 = vunpack.c.l.b16 %v4347
    %v5754 = vunpack.c.h.b16 %v4347
    %v5755 = vunpack.c.l.b16 %v4348
    %v5756 = vunpack.c.h.b16 %v4348
    %v5757 = vunpack.c.l.b16 %v4349
    %v5758 = vunpack.c.h.b16 %v4349
    %v5759 = vunpack.c.l.b16 %v4350
    %v5760 = vunpack.c.h.b16 %v4350
    %v5761 = vunpack.c.l.b16 %v4351
    %v5762 = vunpack.c.h.b16 %v4351
    %v5763 = vunpack.c.l.b16 %v4352
    %v5764 = vunpack.c.h.b16 %v4352
    %v5765 = vunpack.c.l.b16 %v4353
    %v5766 = vunpack.c.h.b16 %v4353
    %v5767 = vunpack.c.l.b16 %v4354
    %v5768 = vunpack.c.h.b16 %v4354
    %v5769 = vunpack.c.l.b16 %v4355
    %v5770 = vunpack.c.h.b16 %v4355
    %v5771 = vunpack.c.l.b16 %v4356
    %v5772 = vunpack.c.h.b16 %v4356
    %v5773 = vunpack.c.l.b16 %v4357
    %v5774 = vunpack.c.h.b16 %v4357
    %v5775 = vunpack.c.l.b16 %v4358
    %v5776 = vunpack.c.h.b16 %v4358
    %v5777 = vunpack.c.l.b16 %v4359
    %v5778 = vunpack.c.h.b16 %v4359
    %v5779 = vunpack.c.l.b16 %v4360
    %v5780 = vunpack.c.h.b16 %v4360
    %v5781 = vunpack.c.l.b16 %v4361
    %v5782 = vunpack.c.h.b16 %v4361
    %v5783 = vunpack.c.l.b16 %v4362
    %v5784 = vunpack.c.h.b16 %v4362
    %v5785 = vunpack.c.l.b16 %v4363
    %v5786 = vunpack.c.h.b16 %v4363
    %v5787 = vunpack.c.l.b16 %v4364
    %v5788 = vunpack.c.h.b16 %v4364
    %v5789 = vunpack.c.l.b16 %v4365
    %v5790 = vunpack.c.h.b16 %v4365
    %v5791 = vunpack.c.l.b16 %v4366
    %v5792 = vunpack.c.h.b16 %v4366
    %v5793 = vunpack.c.l.b16 %v4367
    %v5794 = vunpack.c.h.b16 %v4367
    %v5795 = vunpack.c.l.b16 %v4368
    %v5796 = vunpack.c.h.b16 %v4368
    %v5797 = vunpack.c.l.b16 %v4369
    %v5798 = vunpack.c.h.b16 %v4369
    %v5799 = vunpack.c.l.b16 %v4370
    %v5800 = vunpack.c.h.b16 %v4370
    %v5801 = vunpack.c.l.b16 %v4371
    %v5802 = vunpack.c.h.b16 %v4371
    %v5803 = vunpack.c.l.b16 %v4372
    %v5804 = vunpack.c.h.b16 %v4372
    %v5805 = vunpack.c.l.b16 %v4373
    %v5806 = vunpack.c.h.b16 %v4373
    %v5807 = vunpack.c.l.b16 %v4374
    %v5808 = vunpack.c.h.b16 %v4374
    %v5809 = vunpack.c.l.b16 %v4375
    %v5810 = vunpack.c.h.b16 %v4375
    %v5811 = vunpack.c.l.b16 %v4376
    %v5812 = vunpack.c.h.b16 %v4376
    %v5813 = vunpack.c.l.b16 %v4377
    %v5814 = vunpack.c.h.b16 %v4377
    %v5815 = vunpack.c.l.b16 %v4378
    %v5816 = vunpack.c.h.b16 %v4378
    %v5817 = vunpack.c.l.b16 %v4379
    %v5818 = vunpack.c.h.b16 %v4379
    %v5819 = vunpack.c.l.b16 %v4380
    %v5820 = vunpack.c.h.b16 %v4380
    %v5821 = vunpack.c.l.b16 %v4381
    %v5822 = vunpack.c.h.b16 %v4381
    %v5823 = vunpack.c.l.b16 %v4382
    %v5824 = vunpack.c.h.b16 %v4382
    %v5825 = vunpack.c.l.b16 %v4383
    %v5826 = vunpack.c.h.b16 %v4383
    %v5827 = vunpack.c.l.b16 %v4384
    %v5828 = vunpack.c.h.b16 %v4384
    %v5829 = vunpack.c.l.b16 %v4385
    %v5830 = vunpack.c.h.b16 %v4385
    %v5831 = vunpack.c.l.b16 %v4386
    %v5832 = vunpack.c.h.b16 %v4386
    %v5833 = vunpack.c.l.b16 %v4387
    %v5834 = vunpack.c.h.b16 %v4387
    %v5835 = vunpack.c.l.b16 %v4388
    %v5836 = vunpack.c.h.b16 %v4388
    %v5837 = vunpack.c.l.b16 %v4389
    %v5838 = vunpack.c.h.b16 %v4389
    %v5839 = vunpack.c.l.b16 %v4390
    %v5840 = vunpack.c.h.b16 %v4390
    %v5841 = vunpack.c.l.b16 %v4391
    %v5842 = vunpack.c.h.b16 %v4391
    %v5843 = vunpack.c.l.b16 %v4392
    %v5844 = vunpack.c.h.b16 %v4392
    %v5845 = vunpack.c.l.b16 %v4393
    %v5846 = vunpack.c.h.b16 %v4393
    %v5847 = vunpack.c.l.b16 %v4394
    %v5848 = vunpack.c.h.b16 %v4394
    %v5849 = vunpack.c.l.b16 %v4395
    %v5850 = vunpack.c.h.b16 %v4395
    %v5851 = vunpack.c.l.b16 %v4396
    %v5852 = vunpack.c.h.b16 %v4396
    %v5853 = vunpack.c.l.b16 %v4397
    %v5854 = vunpack.c.h.b16 %v4397
    %v5855 = vunpack.c.l.b16 %v4398
    %v5856 = vunpack.c.h.b16 %v4398
    %v5857 = vunpack.c.l.b16 %v4399
    %v5858 = vunpack.c.h.b16 %v4399
    %v5859 = vunpack.c.l.b16 %v4400
    %v5860 = vunpack.c.h.b16 %v4400
    %v5861 = vunpack.c.l.b16 %v4401
    %v5862 = vunpack.c.h.b16 %v4401
    %v5863 = vunpack.c.l.b16 %v4402
    %v5864 = vunpack.c.h.b16 %v4402
    %v5865 = vunpack.c.l.b16 %v4403
    %v5866 = vunpack.c.h.b16 %v4403
    %v5867 = vunpack.c.l.b16 %v4404
    %v5868 = vunpack.c.h.b16 %v4404
    %v5869 = vunpack.c.l.b16 %v4405
    %v5870 = vunpack.c.h.b16 %v4405
    %v5871 = vunpack.c.l.b16 %v4406
    %v5872 = vunpack.c.h.b16 %v4406
    %v5873 = vunpack.c.l.b16 %v4407
    %v5874 = vunpack.c.h.b16 %v4407
    %v5875 = vunpack.c.l.b16 %v4408
    %v5876 = vunpack.c.h.b16 %v4408
    %v5877 = vunpack.c.l.b16 %v4409
    %v5878 = vunpack.c.h.b16 %v4409
    %v5879 = vunpack.c.l.b16 %v4410
    %v5880 = vunpack.c.h.b16 %v4410
    %v5881 = vunpack.c.l.b16 %v4411
    %v5882 = vunpack.c.h.b16 %v4411
    %v5883 = vunpack.c.l.b16 %v4412
    %v5884 = vunpack.c.h.b16 %v4412
    %v5885 = vunpack.c.l.b16 %v4413
    %v5886 = vunpack.c.h.b16 %v4413
    %v5887 = vunpack.c.l.b16 %v4414
    %v5888 = vunpack.c.h.b16 %v4414
    %v5889 = vunpack.c.l.b16 %v4415
    %v5890 = vunpack.c.h.b16 %v4415
    %v5891 = vunpack.c.l.b16 %v4416
    %v5892 = vunpack.c.h.b16 %v4416
    %v5893 = vunpack.c.l.b16 %v4417
    %v5894 = vunpack.c.h.b16 %v4417
    %v5895 = vunpack.c.l.b16 %v4418
    %v5896 = vunpack.c.h.b16 %v4418
    %v5897 = vunpack.c.l.b16 %v4419
    %v5898 = vunpack.c.h.b16 %v4419
    %v5899 = vunpack.c.l.b16 %v4420
    %v5900 = vunpack.c.h.b16 %v4420
    %v5901 = vunpack.c.l.b16 %v4421
    %v5902 = vunpack.c.h.b16 %v4421
    %v5903 = vunpack.c.l.b16 %v4422
    %v5904 = vunpack.c.h.b16 %v4422
    %v5905 = vunpack.c.l.b16 %v4423
    %v5906 = vunpack.c.h.b16 %v4423
    %v5907 = vunpack.c.l.b16 %v4424
    %v5908 = vunpack.c.h.b16 %v4424
    %v5909 = vunpack.c.l.b16 %v4425
    %v5910 = vunpack.c.h.b16 %v4425
    %v5911 = vunpack.c.l.b16 %v4426
    %v5912 = vunpack.c.h.b16 %v4426
    %v5913 = vunpack.c.l.b16 %v4427
    %v5914 = vunpack.c.h.b16 %v4427
    %v5915 = vunpack.c.l.b16 %v4428
    %v5916 = vunpack.c.h.b16 %v4428
    %v5917 = vunpack.c.l.b16 %v4429
    %v5918 = vunpack.c.h.b16 %v4429
    %v5919 = vunpack.c.l.b16 %v4430
    %v5920 = vunpack.c.h.b16 %v4430
    %v5921 = vunpack.c.l.b16 %v4431
    %v5922 = vunpack.c.h.b16 %v4431
    %v5923 = vunpack.c.l.b16 %v4432
    %v5924 = vunpack.c.h.b16 %v4432
    %v5925 = vunpack.c.l.b16 %v4433
    %v5926 = vunpack.c.h.b16 %v4433
    %v5927 = vunpack.c.l.b16 %v4434
    %v5928 = vunpack.c.h.b16 %v4434
    %v5929 = vunpack.c.l.b16 %v4435
    %v5930 = vunpack.c.h.b16 %v4435
    %v5931 = vunpack.c.l.b16 %v4436
    %v5932 = vunpack.c.h.b16 %v4436
    %v5933 = vunpack.c.l.b16 %v4437
    %v5934 = vunpack.c.h.b16 %v4437
    %v5935 = vunpack.c.l.b16 %v4438
    %v5936 = vunpack.c.h.b16 %v4438
    %v5937 = vunpack.c.l.b16 %v4439
    %v5938 = vunpack.c.h.b16 %v4439
    %v5939 = vunpack.c.l.b16 %v4440
    %v5940 = vunpack.c.h.b16 %v4440
    %v5941 = vunpack.c.l.b16 %v4441
    %v5942 = vunpack.c.h.b16 %v4441
    %v5943 = vunpack.c.l.b16 %v4442
    %v5944 = vunpack.c.h.b16 %v4442
    %v5945 = vunpack.c.l.b16 %v4443
    %v5946 = vunpack.c.h.b16 %v4443
    %v5947 = vunpack.c.l.b16 %v4444
    %v5948 = vunpack.c.h.b16 %v4444
    %v5949 = vunpack.c.l.b16 %v4445
    %v5950 = vunpack.c.h.b16 %v4445
    %v5951 = vunpack.c.l.b16 %v4446
    %v5952 = vunpack.c.h.b16 %v4446
    %v5953 = vunpack.c.l.b16 %v4447
    %v5954 = vunpack.c.h.b16 %v4447
    %v5955 = vunpack.c.l.b16 %v4448
    %v5956 = vunpack.c.h.b16 %v4448
    %v5957 = vunpack.c.l.b16 %v4449
    %v5958 = vunpack.c.h.b16 %v4449
    %v5959 = vunpack.c.l.b16 %v4450
    %v5960 = vunpack.c.h.b16 %v4450
    %v5961 = vunpack.c.l.b16 %v4451
    %v5962 = vunpack.c.h.b16 %v4451
    %v5963 = vunpack.c.l.b16 %v4452
    %v5964 = vunpack.c.h.b16 %v4452
    %v5965 = vunpack.c.l.b16 %v4453
    %v5966 = vunpack.c.h.b16 %v4453
    %v5967 = vunpack.c.l.b16 %v4454
    %v5968 = vunpack.c.h.b16 %v4454
    %v5969 = vunpack.c.l.b16 %v4455
    %v5970 = vunpack.c.h.b16 %v4455
    %v5971 = vunpack.c.l.b16 %v4456
    %v5972 = vunpack.c.h.b16 %v4456
    %v5973 = vunpack.c.l.b16 %v4457
    %v5974 = vunpack.c.h.b16 %v4457
    %v5975 = vunpack.c.l.b16 %v4458
    %v5976 = vunpack.c.h.b16 %v4458
    %v5977 = vunpack.c.l.b16 %v4459
    %v5978 = vunpack.c.h.b16 %v4459
    %v5979 = vunpack.c.l.b16 %v4460
    %v5980 = vunpack.c.h.b16 %v4460
    %v5981 = vunpack.c.l.b16 %v4461
    %v5982 = vunpack.c.h.b16 %v4461
    %v5983 = vunpack.c.l.b16 %v4462
    %v5984 = vunpack.c.h.b16 %v4462
    %v5985 = vunpack.c.l.b16 %v4463
    %v5986 = vunpack.c.h.b16 %v4463
    %v5987 = vunpack.c.l.b16 %v4464
    %v5988 = vunpack.c.h.b16 %v4464
    %v5989 = vunpack.c.l.b16 %v4465
    %v5990 = vunpack.c.h.b16 %v4465
    %v5991 = vunpack.c.l.b16 %v4466
    %v5992 = vunpack.c.h.b16 %v4466
    %v5993 = vunpack.c.l.b16 %v4467
    %v5994 = vunpack.c.h.b16 %v4467
    %v5995 = vunpack.c.l.b16 %v4468
    %v5996 = vunpack.c.h.b16 %v4468
    %v5997 = vunpack.c.l.b16 %v4469
    %v5998 = vunpack.c.h.b16 %v4469
    %v5999 = vunpack.c.l.b16 %v4470
    %v6000 = vunpack.c.h.b16 %v4470
    %v6001 = vunpack.c.l.b16 %v4471
    %v6002 = vunpack.c.h.b16 %v4471
    %v6003 = vunpack.c.l.b16 %v4472
    %v6004 = vunpack.c.h.b16 %v4472
    %v6005 = vunpack.c.l.b16 %v4473
    %v6006 = vunpack.c.h.b16 %v4473
    %v6007 = vunpack.c.l.b16 %v4474
    %v6008 = vunpack.c.h.b16 %v4474
    %v6009 = vunpack.c.l.b16 %v4475
    %v6010 = vunpack.c.h.b16 %v4475
    %v6011 = vunpack.c.l.b16 %v4476
    %v6012 = vunpack.c.h.b16 %v4476
    %v6013 = vpack.c.b16 %v4997, %v4989
    %v6014 = vpack.c.b16 %v4998, %v4990
    %v6015 = vpack.c.b16 %v4999, %v4991
    %v6016 = vpack.c.b16 %v5000, %v4992
    %v6017 = vpack.c.b16 %v5001, %v4993
    %v6018 = vpack.c.b16 %v5002, %v4994
    %v6019 = vpack.c.b16 %v5003, %v4995
    %v6020 = vpack.c.b16 %v5004, %v4996
    %v6021 = vpack.c.b16 %v5013, %v5005
    %v6022 = vpack.c.b16 %v5014, %v5006
    %v6023 = vpack.c.b16 %v5015, %v5007
    %v6024 = vpack.c.b16 %v5016, %v5008
    %v6025 = vpack.c.b16 %v5017, %v5009
    %v6026 = vpack.c.b16 %v5018, %v5010
    %v6027 = vpack.c.b16 %v5019, %v5011
    %v6028 = vpack.c.b16 %v5020, %v5012
    %v6029 = vpack.c.b16 %v5029, %v5021
    %v6030 = vpack.c.b16 %v5030, %v5022
    %v6031 = vpack.c.b16 %v5031, %v5023
    %v6032 = vpack.c.b16 %v5032, %v5024
    %v6033 = vpack.c.b16 %v5033, %v5025
    %v6034 = vpack.c.b16 %v5034, %v5026
    %v6035 = vpack.c.b16 %v5035, %v5027
    %v6036 = vpack.c.b16 %v5036, %v5028
    %v6037 = vpack.c.b16 %v5045, %v5037
    %v6038 = vpack.c.b16 %v5046, %v5038
    %v6039 = vpack.c.b16 %v5047, %v5039
    %v6040 = vpack.c.b16 %v5048, %v5040
    %v6041 = vpack.c.b16 %v5049, %v5041
    %v6042 = vpack.c.b16 %v5050, %v5042
    %v6043 = vpack.c.b16 %v5051, %v5043
    %v6044 = vpack.c.b16 %v5052, %v5044
    %v6045 = vpack.c.b16 %v5061, %v5053
    %v6046 = vpack.c.b16 %v5062, %v5054
    %v6047 = vpack.c.b16 %v5063, %v5055
    %v6048 = vpack.c.b16 %v5064, %v5056
    %v6049 = vpack.c.b16 %v5065, %v5057
    %v6050 = vpack.c.b16 %v5066, %v5058
    %v6051 = vpack.c.b16 %v5067, %v5059
    %v6052 = vpack.c.b16 %v5068, %v5060
    %v6053 = vpack.c.b16 %v5077, %v5069
    %v6054 = vpack.c.b16 %v5078, %v5070
    %v6055 = vpack.c.b16 %v5079, %v5071
    %v6056 = vpack.c.b16 %v5080, %v5072
    %v6057 = vpack.c.b16 %v5081, %v5073
    %v6058 = vpack.c.b16 %v5082, %v5074
    %v6059 = vpack.c.b16 %v5083, %v5075
    %v6060 = vpack.c.b16 %v5084, %v5076
    %v6061 = vpack.c.b16 %v5093, %v5085
    %v6062 = vpack.c.b16 %v5094, %v5086
    %v6063 = vpack.c.b16 %v5095, %v5087
    %v6064 = vpack.c.b16 %v5096, %v5088
    %v6065 = vpack.c.b16 %v5097, %v5089
    %v6066 = vpack.c.b16 %v5098, %v5090
    %v6067 = vpack.c.b16 %v5099, %v5091
    %v6068 = vpack.c.b16 %v5100, %v5092
    %v6069 = vpack.c.b16 %v5109, %v5101
    %v6070 = vpack.c.b16 %v5110, %v5102
    %v6071 = vpack.c.b16 %v5111, %v5103
    %v6072 = vpack.c.b16 %v5112, %v5104
    %v6073 = vpack.c.b16 %v5113, %v5105
    %v6074 = vpack.c.b16 %v5114, %v5106
    %v6075 = vpack.c.b16 %v5115, %v5107
    %v6076 = vpack.c.b16 %v5116, %v5108
    %v6077 = vpack.c.b16 %v5125, %v5117
    %v6078 = vpack.c.b16 %v5126, %v5118
    %v6079 = vpack.c.b16 %v5127, %v5119
    %v6080 = vpack.c.b16 %v5128, %v5120
    %v6081 = vpack.c.b16 %v5129, %v5121
    %v6082 = vpack.c.b16 %v5130, %v5122
    %v6083 = vpack.c.b16 %v5131, %v5123
    %v6084 = vpack.c.b16 %v5132, %v5124
    %v6085 = vpack.c.b16 %v5141, %v5133
    %v6086 = vpack.c.b16 %v5142, %v5134
    %v6087 = vpack.c.b16 %v5143, %v5135
    %v6088 = vpack.c.b16 %v5144, %v5136
    %v6089 = vpack.c.b16 %v5145, %v5137
    %v6090 = vpack.c.b16 %v5146, %v5138
    %v6091 = vpack.c.b16 %v5147, %v5139
    %v6092 = vpack.c.b16 %v5148, %v5140
    %v6093 = vpack.c.b16 %v5157, %v5149
    %v6094 = vpack.c.b16 %v5158, %v5150
    %v6095 = vpack.c.b16 %v5159, %v5151
    %v6096 = vpack.c.b16 %v5160, %v5152
    %v6097 = vpack.c.b16 %v5161, %v5153
    %v6098 = vpack.c.b16 %v5162, %v5154
    %v6099 = vpack.c.b16 %v5163, %v5155
    %v6100 = vpack.c.b16 %v5164, %v5156
    %v6101 = vpack.c.b16 %v5173, %v5165
    %v6102 = vpack.c.b16 %v5174, %v5166
    %v6103 = vpack.c.b16 %v5175, %v5167
    %v6104 = vpack.c.b16 %v5176, %v5168
    %v6105 = vpack.c.b16 %v5177, %v5169
    %v6106 = vpack.c.b16 %v5178, %v5170
    %v6107 = vpack.c.b16 %v5179, %v5171
    %v6108 = vpack.c.b16 %v5180, %v5172
    %v6109 = vpack.c.b16 %v5189, %v5181
    %v6110 = vpack.c.b16 %v5190, %v5182
    %v6111 = vpack.c.b16 %v5191, %v5183
    %v6112 = vpack.c.b16 %v5192, %v5184
    %v6113 = vpack.c.b16 %v5193, %v5185
    %v6114 = vpack.c.b16 %v5194, %v5186
    %v6115 = vpack.c.b16 %v5195, %v5187
    %v6116 = vpack.c.b16 %v5196, %v5188
    %v6117 = vpack.c.b16 %v5205, %v5197
    %v6118 = vpack.c.b16 %v5206, %v5198
    %v6119 = vpack.c.b16 %v5207, %v5199
    %v6120 = vpack.c.b16 %v5208, %v5200
    %v6121 = vpack.c.b16 %v5209, %v5201
    %v6122 = vpack.c.b16 %v5210, %v5202
    %v6123 = vpack.c.b16 %v5211, %v5203
    %v6124 = vpack.c.b16 %v5212, %v5204
    %v6125 = vpack.c.b16 %v5221, %v5213
    %v6126 = vpack.c.b16 %v5222, %v5214
    %v6127 = vpack.c.b16 %v5223, %v5215
    %v6128 = vpack.c.b16 %v5224, %v5216
    %v6129 = vpack.c.b16 %v5225, %v5217
    %v6130 = vpack.c.b16 %v5226, %v5218
    %v6131 = vpack.c.b16 %v5227, %v5219
    %v6132 = vpack.c.b16 %v5228, %v5220
    %v6133 = vpack.c.b16 %v5237, %v5229
    %v6134 = vpack.c.b16 %v5238, %v5230
    %v6135 = vpack.c.b16 %v5239, %v5231
    %v6136 = vpack.c.b16 %v5240, %v5232
    %v6137 = vpack.c.b16 %v5241, %v5233
    %v6138 = vpack.c.b16 %v5242, %v5234
    %v6139 = vpack.c.b16 %v5243, %v5235
    %v6140 = vpack.c.b16 %v5244, %v5236
    %v6141 = vpack.c.b16 %v5253, %v5245
    %v6142 = vpack.c.b16 %v5254, %v5246
    %v6143 = vpack.c.b16 %v5255, %v5247
    %v6144 = vpack.c.b16 %v5256, %v5248
    %v6145 = vpack.c.b16 %v5257, %v5249
    %v6146 = vpack.c.b16 %v5258, %v5250
    %v6147 = vpack.c.b16 %v5259, %v5251
    %v6148 = vpack.c.b16 %v5260, %v5252
    %v6149 = vpack.c.b16 %v5269, %v5261
    %v6150 = vpack.c.b16 %v5270, %v5262
    %v6151 = vpack.c.b16 %v5271, %v5263
    %v6152 = vpack.c.b16 %v5272, %v5264
    %v6153 = vpack.c.b16 %v5273, %v5265
    %v6154 = vpack.c.b16 %v5274, %v5266
    %v6155 = vpack.c.b16 %v5275, %v5267
    %v6156 = vpack.c.b16 %v5276, %v5268
    %v6157 = vpack.c.b16 %v5285, %v5277
    %v6158 = vpack.c.b16 %v5286, %v5278
    %v6159 = vpack.c.b16 %v5287, %v5279
    %v6160 = vpack.c.b16 %v5288, %v5280
    %v6161 = vpack.c.b16 %v5289, %v5281
    %v6162 = vpack.c.b16 %v5290, %v5282
    %v6163 = vpack.c.b16 %v5291, %v5283
    %v6164 = vpack.c.b16 %v5292, %v5284
    %v6165 = vpack.c.b16 %v5301, %v5293
    %v6166 = vpack.c.b16 %v5302, %v5294
    %v6167 = vpack.c.b16 %v5303, %v5295
    %v6168 = vpack.c.b16 %v5304, %v5296
    %v6169 = vpack.c.b16 %v5305, %v5297
    %v6170 = vpack.c.b16 %v5306, %v5298
    %v6171 = vpack.c.b16 %v5307, %v5299
    %v6172 = vpack.c.b16 %v5308, %v5300
    %v6173 = vpack.c.b16 %v5317, %v5309
    %v6174 = vpack.c.b16 %v5318, %v5310
    %v6175 = vpack.c.b16 %v5319, %v5311
    %v6176 = vpack.c.b16 %v5320, %v5312
    %v6177 = vpack.c.b16 %v5321, %v5313
    %v6178 = vpack.c.b16 %v5322, %v5314
    %v6179 = vpack.c.b16 %v5323, %v5315
    %v6180 = vpack.c.b16 %v5324, %v5316
    %v6181 = vpack.c.b16 %v5333, %v5325
    %v6182 = vpack.c.b16 %v5334, %v5326
    %v6183 = vpack.c.b16 %v5335, %v5327
    %v6184 = vpack.c.b16 %v5336, %v5328
    %v6185 = vpack.c.b16 %v5337, %v5329
    %v6186 = vpack.c.b16 %v5338, %v5330
    %v6187 = vpack.c.b16 %v5339, %v5331
    %v6188 = vpack.c.b16 %v5340, %v5332
    %v6189 = vpack.c.b16 %v5349, %v5341
    %v6190 = vpack.c.b16 %v5350, %v5342
    %v6191 = vpack.c.b16 %v5351, %v5343
    %v6192 = vpack.c.b16 %v5352, %v5344
    %v6193 = vpack.c.b16 %v5353, %v5345
    %v6194 = vpack.c.b16 %v5354, %v5346
    %v6195 = vpack.c.b16 %v5355, %v5347
    %v6196 = vpack.c.b16 %v5356, %v5348
    %v6197 = vpack.c.b16 %v5365, %v5357
    %v6198 = vpack.c.b16 %v5366, %v5358
    %v6199 = vpack.c.b16 %v5367, %v5359
    %v6200 = vpack.c.b16 %v5368, %v5360
    %v6201 = vpack.c.b16 %v5369, %v5361
    %v6202 = vpack.c.b16 %v5370, %v5362
    %v6203 = vpack.c.b16 %v5371, %v5363
    %v6204 = vpack.c.b16 %v5372, %v5364
    %v6205 = vpack.c.b16 %v5381, %v5373
    %v6206 = vpack.c.b16 %v5382, %v5374
    %v6207 = vpack.c.b16 %v5383, %v5375
    %v6208 = vpack.c.b16 %v5384, %v5376
    %v6209 = vpack.c.b16 %v5385, %v5377
    %v6210 = vpack.c.b16 %v5386, %v5378
    %v6211 = vpack.c.b16 %v5387, %v5379
    %v6212 = vpack.c.b16 %v5388, %v5380
    %v6213 = vpack.c.b16 %v5397, %v5389
    %v6214 = vpack.c.b16 %v5398, %v5390
    %v6215 = vpack.c.b16 %v5399, %v5391
    %v6216 = vpack.c.b16 %v5400, %v5392
    %v6217 = vpack.c.b16 %v5401, %v5393
    %v6218 = vpack.c.b16 %v5402, %v5394
    %v6219 = vpack.c.b16 %v5403, %v5395
    %v6220 = vpack.c.b16 %v5404, %v5396
    %v6221 = vpack.c.b16 %v5413, %v5405
    %v6222 = vpack.c.b16 %v5414, %v5406
    %v6223 = vpack.c.b16 %v5415, %v5407
    %v6224 = vpack.c.b16 %v5416, %v5408
    %v6225 = vpack.c.b16 %v5417, %v5409
    %v6226 = vpack.c.b16 %v5418, %v5410
    %v6227 = vpack.c.b16 %v5419, %v5411
    %v6228 = vpack.c.b16 %v5420, %v5412
    %v6229 = vpack.c.b16 %v5429, %v5421
    %v6230 = vpack.c.b16 %v5430, %v5422
    %v6231 = vpack.c.b16 %v5431, %v5423
    %v6232 = vpack.c.b16 %v5432, %v5424
    %v6233 = vpack.c.b16 %v5433, %v5425
    %v6234 = vpack.c.b16 %v5434, %v5426
    %v6235 = vpack.c.b16 %v5435, %v5427
    %v6236 = vpack.c.b16 %v5436, %v5428
    %v6237 = vpack.c.b16 %v5445, %v5437
    %v6238 = vpack.c.b16 %v5446, %v5438
    %v6239 = vpack.c.b16 %v5447, %v5439
    %v6240 = vpack.c.b16 %v5448, %v5440
    %v6241 = vpack.c.b16 %v5449, %v5441
    %v6242 = vpack.c.b16 %v5450, %v5442
    %v6243 = vpack.c.b16 %v5451, %v5443
    %v6244 = vpack.c.b16 %v5452, %v5444
    %v6245 = vpack.c.b16 %v5461, %v5453
    %v6246 = vpack.c.b16 %v5462, %v5454
    %v6247 = vpack.c.b16 %v5463, %v5455
    %v6248 = vpack.c.b16 %v5464, %v5456
    %v6249 = vpack.c.b16 %v5465, %v5457
    %v6250 = vpack.c.b16 %v5466, %v5458
    %v6251 = vpack.c.b16 %v5467, %v5459
    %v6252 = vpack.c.b16 %v5468, %v5460
    %v6253 = vpack.c.b16 %v5477, %v5469
    %v6254 = vpack.c.b16 %v5478, %v5470
    %v6255 = vpack.c.b16 %v5479, %v5471
    %v6256 = vpack.c.b16 %v5480, %v5472
    %v6257 = vpack.c.b16 %v5481, %v5473
    %v6258 = vpack.c.b16 %v5482, %v5474
    %v6259 = vpack.c.b16 %v5483, %v5475
    %v6260 = vpack.c.b16 %v5484, %v5476
    %v6261 = vpack.c.b16 %v5493, %v5485
    %v6262 = vpack.c.b16 %v5494, %v5486
    %v6263 = vpack.c.b16 %v5495, %v5487
    %v6264 = vpack.c.b16 %v5496, %v5488
    %v6265 = vpack.c.b16 %v5497, %v5489
    %v6266 = vpack.c.b16 %v5498, %v5490
    %v6267 = vpack.c.b16 %v5499, %v5491
    %v6268 = vpack.c.b16 %v5500, %v5492
    %v6269 = vpack.c.b16 %v5509, %v5501
    %v6270 = vpack.c.b16 %v5510, %v5502
    %v6271 = vpack.c.b16 %v5511, %v5503
    %v6272 = vpack.c.b16 %v5512, %v5504
    %v6273 = vpack.c.b16 %v5513, %v5505
    %v6274 = vpack.c.b16 %v5514, %v5506
    %v6275 = vpack.c.b16 %v5515, %v5507
    %v6276 = vpack.c.b16 %v5516, %v5508
    %v6277 = vpack.c.b16 %v5525, %v5517
    %v6278 = vpack.c.b16 %v5526, %v5518
    %v6279 = vpack.c.b16 %v5527, %v5519
    %v6280 = vpack.c.b16 %v5528, %v5520
    %v6281 = vpack.c.b16 %v5529, %v5521
    %v6282 = vpack.c.b16 %v5530, %v5522
    %v6283 = vpack.c.b16 %v5531, %v5523
    %v6284 = vpack.c.b16 %v5532, %v5524
    %v6285 = vpack.c.b16 %v5541, %v5533
    %v6286 = vpack.c.b16 %v5542, %v5534
    %v6287 = vpack.c.b16 %v5543, %v5535
    %v6288 = vpack.c.b16 %v5544, %v5536
    %v6289 = vpack.c.b16 %v5545, %v5537
    %v6290 = vpack.c.b16 %v5546, %v5538
    %v6291 = vpack.c.b16 %v5547, %v5539
    %v6292 = vpack.c.b16 %v5548, %v5540
    %v6293 = vpack.c.b16 %v5557, %v5549
    %v6294 = vpack.c.b16 %v5558, %v5550
    %v6295 = vpack.c.b16 %v5559, %v5551
    %v6296 = vpack.c.b16 %v5560, %v5552
    %v6297 = vpack.c.b16 %v5561, %v5553
    %v6298 = vpack.c.b16 %v5562, %v5554
    %v6299 = vpack.c.b16 %v5563, %v5555
    %v6300 = vpack.c.b16 %v5564, %v5556
    %v6301 = vpack.c.b16 %v5573, %v5565
    %v6302 = vpack.c.b16 %v5574, %v5566
    %v6303 = vpack.c.b16 %v5575, %v5567
    %v6304 = vpack.c.b16 %v5576, %v5568
    %v6305 = vpack.c.b16 %v5577, %v5569
    %v6306 = vpack.c.b16 %v5578, %v5570
    %v6307 = vpack.c.b16 %v5579, %v5571
    %v6308 = vpack.c.b16 %v5580, %v5572
    %v6309 = vpack.c.b16 %v5589, %v5581
    %v6310 = vpack.c.b16 %v5590, %v5582
    %v6311 = vpack.c.b16 %v5591, %v5583
    %v6312 = vpack.c.b16 %v5592, %v5584
    %v6313 = vpack.c.b16 %v5593, %v5585
    %v6314 = vpack.c.b16 %v5594, %v5586
    %v6315 = vpack.c.b16 %v5595, %v5587
    %v6316 = vpack.c.b16 %v5596, %v5588
    %v6317 = vpack.c.b16 %v5605, %v5597
    %v6318 = vpack.c.b16 %v5606, %v5598
    %v6319 = vpack.c.b16 %v5607, %v5599
    %v6320 = vpack.c.b16 %v5608, %v5600
    %v6321 = vpack.c.b16 %v5609, %v5601
    %v6322 = vpack.c.b16 %v5610, %v5602
    %v6323 = vpack.c.b16 %v5611, %v5603
    %v6324 = vpack.c.b16 %v5612, %v5604
    %v6325 = vpack.c.b16 %v5621, %v5613
    %v6326 = vpack.c.b16 %v5622, %v5614
    %v6327 = vpack.c.b16 %v5623, %v5615
    %v6328 = vpack.c.b16 %v5624, %v5616
    %v6329 = vpack.c.b16 %v5625, %v5617
    %v6330 = vpack.c.b16 %v5626, %v5618
    %v6331 = vpack.c.b16 %v5627, %v5619
    %v6332 = vpack.c.b16 %v5628, %v5620
    %v6333 = vpack.c.b16 %v5637, %v5629
    %v6334 = vpack.c.b16 %v5638, %v5630
    %v6335 = vpack.c.b16 %v5639, %v5631
    %v6336 = vpack.c.b16 %v5640, %v5632
    %v6337 = vpack.c.b16 %v5641, %v5633
    %v6338 = vpack.c.b16 %v5642, %v5634
    %v6339 = vpack.c.b16 %v5643, %v5635
    %v6340 = vpack.c.b16 %v5644, %v5636
    %v6341 = vpack.c.b16 %v5653, %v5645
    %v6342 = vpack.c.b16 %v5654, %v5646
    %v6343 = vpack.c.b16 %v5655, %v5647
    %v6344 = vpack.c.b16 %v5656, %v5648
    %v6345 = vpack.c.b16 %v5657, %v5649
    %v6346 = vpack.c.b16 %v5658, %v5650
    %v6347 = vpack.c.b16 %v5659, %v5651
    %v6348 = vpack.c.b16 %v5660, %v5652
    %v6349 = vpack.c.b16 %v5669, %v5661
    %v6350 = vpack.c.b16 %v5670, %v5662
    %v6351 = vpack.c.b16 %v5671, %v5663
    %v6352 = vpack.c.b16 %v5672, %v5664
    %v6353 = vpack.c.b16 %v5673, %v5665
    %v6354 = vpack.c.b16 %v5674, %v5666
    %v6355 = vpack.c.b16 %v5675, %v5667
    %v6356 = vpack.c.b16 %v5676, %v5668
    %v6357 = vpack.c.b16 %v5685, %v5677
    %v6358 = vpack.c.b16 %v5686, %v5678
    %v6359 = vpack.c.b16 %v5687, %v5679
    %v6360 = vpack.c.b16 %v5688, %v5680
    %v6361 = vpack.c.b16 %v5689, %v5681
    %v6362 = vpack.c.b16 %v5690, %v5682
    %v6363 = vpack.c.b16 %v5691, %v5683
    %v6364 = vpack.c.b16 %v5692, %v5684
    %v6365 = vpack.c.b16 %v5701, %v5693
    %v6366 = vpack.c.b16 %v5702, %v5694
    %v6367 = vpack.c.b16 %v5703, %v5695
    %v6368 = vpack.c.b16 %v5704, %v5696
    %v6369 = vpack.c.b16 %v5705, %v5697
    %v6370 = vpack.c.b16 %v5706, %v5698
    %v6371 = vpack.c.b16 %v5707, %v5699
    %v6372 = vpack.c.b16 %v5708, %v5700
    %v6373 = vpack.c.b16 %v5717, %v5709
    %v6374 = vpack.c.b16 %v5718, %v5710
    %v6375 = vpack.c.b16 %v5719, %v5711
    %v6376 = vpack.c.b16 %v5720, %v5712
    %v6377 = vpack.c.b16 %v5721, %v5713
    %v6378 = vpack.c.b16 %v5722, %v5714
    %v6379 = vpack.c.b16 %v5723, %v5715
    %v6380 = vpack.c.b16 %v5724, %v5716
    %v6381 = vpack.c.b16 %v5733, %v5725
    %v6382 = vpack.c.b16 %v5734, %v5726
    %v6383 = vpack.c.b16 %v5735, %v5727
    %v6384 = vpack.c.b16 %v5736, %v5728
    %v6385 = vpack.c.b16 %v5737, %v5729
    %v6386 = vpack.c.b16 %v5738, %v5730
    %v6387 = vpack.c.b16 %v5739, %v5731
    %v6388 = vpack.c.b16 %v5740, %v5732
    %v6389 = vpack.c.b16 %v5749, %v5741
    %v6390 = vpack.c.b16 %v5750, %v5742
    %v6391 = vpack.c.b16 %v5751, %v5743
    %v6392 = vpack.c.b16 %v5752, %v5744
    %v6393 = vpack.c.b16 %v5753, %v5745
    %v6394 = vpack.c.b16 %v5754, %v5746
    %v6395 = vpack.c.b16 %v5755, %v5747
    %v6396 = vpack.c.b16 %v5756, %v5748
    %v6397 = vpack.c.b16 %v5765, %v5757
    %v6398 = vpack.c.b16 %v5766, %v5758
    %v6399 = vpack.c.b16 %v5767, %v5759
    %v6400 = vpack.c.b16 %v5768, %v5760
    %v6401 = vpack.c.b16 %v5769, %v5761
    %v6402 = vpack.c.b16 %v5770, %v5762
    %v6403 = vpack.c.b16 %v5771, %v5763
    %v6404 = vpack.c.b16 %v5772, %v5764
    %v6405 = vpack.c.b16 %v5781, %v5773
    %v6406 = vpack.c.b16 %v5782, %v5774
    %v6407 = vpack.c.b16 %v5783, %v5775
    %v6408 = vpack.c.b16 %v5784, %v5776
    %v6409 = vpack.c.b16 %v5785, %v5777
    %v6410 = vpack.c.b16 %v5786, %v5778
    %v6411 = vpack.c.b16 %v5787, %v5779
    %v6412 = vpack.c.b16 %v5788, %v5780
    %v6413 = vpack.c.b16 %v5797, %v5789
    %v6414 = vpack.c.b16 %v5798, %v5790
    %v6415 = vpack.c.b16 %v5799, %v5791
    %v6416 = vpack.c.b16 %v5800, %v5792
    %v6417 = vpack.c.b16 %v5801, %v5793
    %v6418 = vpack.c.b16 %v5802, %v5794
    %v6419 = vpack.c.b16 %v5803, %v5795
    %v6420 = vpack.c.b16 %v5804, %v5796
    %v6421 = vpack.c.b16 %v5813, %v5805
    %v6422 = vpack.c.b16 %v5814, %v5806
    %v6423 = vpack.c.b16 %v5815, %v5807
    %v6424 = vpack.c.b16 %v5816, %v5808
    %v6425 = vpack.c.b16 %v5817, %v5809
    %v6426 = vpack.c.b16 %v5818, %v5810
    %v6427 = vpack.c.b16 %v5819, %v5811
    %v6428 = vpack.c.b16 %v5820, %v5812
    %v6429 = vpack.c.b16 %v5829, %v5821
    %v6430 = vpack.c.b16 %v5830, %v5822
    %v6431 = vpack.c.b16 %v5831, %v5823
    %v6432 = vpack.c.b16 %v5832, %v5824
    %v6433 = vpack.c.b16 %v5833, %v5825
    %v6434 = vpack.c.b16 %v5834, %v5826
    %v6435 = vpack.c.b16 %v5835, %v5827
    %v6436 = vpack.c.b16 %v5836, %v5828
    %v6437 = vpack.c.b16 %v5845, %v5837
    %v6438 = vpack.c.b16 %v5846, %v5838
    %v6439 = vpack.c.b16 %v5847, %v5839
    %v6440 = vpack.c.b16 %v5848, %v5840
    %v6441 = vpack.c.b16 %v5849, %v5841
    %v6442 = vpack.c.b16 %v5850, %v5842
    %v6443 = vpack.c.b16 %v5851, %v5843
    %v6444 = vpack.c.b16 %v5852, %v5844
    %v6445 = vpack.c.b16 %v5861, %v5853
    %v6446 = vpack.c.b16 %v5862, %v5854
    %v6447 = vpack.c.b16 %v5863, %v5855
    %v6448 = vpack.c.b16 %v5864, %v5856
    %v6449 = vpack.c.b16 %v5865, %v5857
    %v6450 = vpack.c.b16 %v5866, %v5858
    %v6451 = vpack.c.b16 %v5867, %v5859
    %v6452 = vpack.c.b16 %v5868, %v5860
    %v6453 = vpack.c.b16 %v5877, %v5869
    %v6454 = vpack.c.b16 %v5878, %v5870
    %v6455 = vpack.c.b16 %v5879, %v5871
    %v6456 = vpack.c.b16 %v5880, %v5872
    %v6457 = vpack.c.b16 %v5881, %v5873
    %v6458 = vpack.c.b16 %v5882, %v5874
    %v6459 = vpack.c.b16 %v5883, %v5875
    %v6460 = vpack.c.b16 %v5884, %v5876
    %v6461 = vpack.c.b16 %v5893, %v5885
    %v6462 = vpack.c.b16 %v5894, %v5886
    %v6463 = vpack.c.b16 %v5895, %v5887
    %v6464 = vpack.c.b16 %v5896, %v5888
    %v6465 = vpack.c.b16 %v5897, %v5889
    %v6466 = vpack.c.b16 %v5898, %v5890
    %v6467 = vpack.c.b16 %v5899, %v5891
    %v6468 = vpack.c.b16 %v5900, %v5892
    %v6469 = vpack.c.b16 %v5909, %v5901
    %v6470 = vpack.c.b16 %v5910, %v5902
    %v6471 = vpack.c.b16 %v5911, %v5903
    %v6472 = vpack.c.b16 %v5912, %v5904
    %v6473 = vpack.c.b16 %v5913, %v5905
    %v6474 = vpack.c.b16 %v5914, %v5906
    %v6475 = vpack.c.b16 %v5915, %v5907
    %v6476 = vpack.c.b16 %v5916, %v5908
    %v6477 = vpack.c.b16 %v5925, %v5917
    %v6478 = vpack.c.b16 %v5926, %v5918
    %v6479 = vpack.c.b16 %v5927, %v5919
    %v6480 = vpack.c.b16 %v5928, %v5920
    %v6481 = vpack.c.b16 %v5929, %v5921
    %v6482 = vpack.c.b16 %v5930, %v5922
    %v6483 = vpack.c.b16 %v5931, %v5923
    %v6484 = vpack.c.b16 %v5932, %v5924
    %v6485 = vpack.c.b16 %v5941, %v5933
    %v6486 = vpack.c.b16 %v5942, %v5934
    %v6487 = vpack.c.b16 %v5943, %v5935
    %v6488 = vpack.c.b16 %v5944, %v5936
    %v6489 = vpack.c.b16 %v5945, %v5937
    %v6490 = vpack.c.b16 %v5946, %v5938
    %v6491 = vpack.c.b16 %v5947, %v5939
    %v6492 = vpack.c.b16 %v5948, %v5940
    %v6493 = vpack.c.b16 %v5957, %v5949
    %v6494 = vpack.c.b16 %v5958, %v5950
    %v6495 = vpack.c.b16 %v5959, %v5951
    %v6496 = vpack.c.b16 %v5960, %v5952
    %v6497 = vpack.c.b16 %v5961, %v5953
    %v6498 = vpack.c.b16 %v5962, %v5954
    %v6499 = vpack.c.b16 %v5963, %v5955
    %v6500 = vpack.c.b16 %v5964, %v5956
    %v6501 = vpack.c.b16 %v5973, %v5965
    %v6502 = vpack.c.b16 %v5974, %v5966
    %v6503 = vpack.c.b16 %v5975, %v5967
    %v6504 = vpack.c.b16 %v5976, %v5968
    %v6505 = vpack.c.b16 %v5977, %v5969
    %v6506 = vpack.c.b16 %v5978, %v5970
    %v6507 = vpack.c.b16 %v5979, %v5971
    %v6508 = vpack.c.b16 %v5980, %v5972
    %v6509 = vpack.c.b16 %v5989, %v5981
    %v6510 = vpack.c.b16 %v5990, %v5982
    %v6511 = vpack.c.b16 %v5991, %v5983
    %v6512 = vpack.c.b16 %v5992, %v5984
    %v6513 = vpack.c.b16 %v5993, %v5985
    %v6514 = vpack.c.b16 %v5994, %v5986
    %v6515 = vpack.c.b16 %v5995, %v5987
    %v6516 = vpack.c.b16 %v5996, %v5988
    %v6517 = vpack.c.b16 %v6005, %v5997
    %v6518 = vpack.c.b16 %v6006, %v5998
    %v6519 = vpack.c.b16 %v6007, %v5999
    %v6520 = vpack.c.b16 %v6008, %v6000
    %v6521 = vpack.c.b16 %v6009, %v6001
    %v6522 = vpack.c.b16 %v6010, %v6002
    %v6523 = vpack.c.b16 %v6011, %v6003
    %v6524 = vpack.c.b16 %v6012, %v6004
    %7037 = vmatprep.subr.bf16.mxu0 %v6070
    %7038 = vmatpush1.bf16.msra.mxu0 %v6069
    %7039 = vmatprep.subr.bf16.mxu0 %v6062
    %7040 = vmatpush1.bf16.msra.mxu0 %v6061
    %7041 = vmatprep.subr.bf16.mxu0 %v6054
    %7042 = vmatpush1.bf16.msra.mxu0 %v6053
    %7043 = vmatprep.subr.bf16.mxu0 %v6046
    %7044 = vmatpush1.bf16.msra.mxu0 %v6045
    %7045 = vmatprep.subr.bf16.mxu0 %v6038
    %7046 = vmatpush1.bf16.msra.mxu0 %v6037
    %7047 = vmatprep.subr.bf16.mxu0 %v6030
    %7048 = vmatpush1.bf16.msra.mxu0 %v6029
    %7049 = vmatprep.subr.bf16.mxu0 %v6022
    %7050 = vmatpush1.bf16.msra.mxu0 %v6021
    %7051 = vmatprep.subr.bf16.mxu0 %v6014
    %7052 = vmatpush1.bf16.msra.mxu0 %v6013
    %7053 = vmatprep.subr.bf16.mxu0 %v6134
    %7054 = vmatpush2.bf16.msra.mxu0 %v6133
    %7055 = vmatprep.subr.bf16.mxu0 %v6126
    %7056 = vmatpush2.bf16.msra.mxu0 %v6125
    %7057 = vmatprep.subr.bf16.mxu0 %v6118
    %7058 = vmatpush2.bf16.msra.mxu0 %v6117
    %7059 = vmatprep.subr.bf16.mxu0 %v6110
    %7060 = vmatpush2.bf16.msra.mxu0 %v6109
    %7061 = vmatprep.subr.bf16.mxu0 %v6102
    %7062 = vmatpush2.bf16.msra.mxu0 %v6101
    %7063 = vmatprep.subr.bf16.mxu0 %v6094
    %7064 = vmatpush2.bf16.msra.mxu0 %v6093
    %7065 = vmatprep.subr.bf16.mxu0 %v6086
    %7066 = vmatpush2.bf16.msra.mxu0 %v6085
    %7067 = vmatprep.subr.bf16.mxu0 %v6078
    %7068 = vmatpush2.bf16.msra.mxu0 %v6077
    %7069 = vmatprep.mubr.bf16.mxu0 %v3958
    %7070 = vmatmul.mubr.bf16.gmra.mxu0 %v3957
    %v7071 = vpop.f32.mrf.mxu0
    %v7072 = vadd.f32 0.0, %v7071
    %v7073 = vpop.f32.mrf.mxu0
    %v7074 = vadd.f32 0.0, %v7073
    %v7075 = vpop.f32.mrf.mxu0
    %v7076 = vpop.f32.mrf.mxu0
    %7077 = vdwg.mxu0
    %7078 = vmatprep.subr.bf16.mxu0 %v6198
    %7079 = vmatpush1.bf16.msra.mxu0 %v6197
    %7080 = vmatprep.subr.bf16.mxu0 %v6190
    %7081 = vmatpush1.bf16.msra.mxu0 %v6189
    %7082 = vmatprep.subr.bf16.mxu0 %v6182
    %7083 = vmatpush1.bf16.msra.mxu0 %v6181
    %7084 = vmatprep.subr.bf16.mxu0 %v6174
    %7085 = vmatpush1.bf16.msra.mxu0 %v6173
    %7086 = vmatprep.subr.bf16.mxu0 %v6166
    %7087 = vmatpush1.bf16.msra.mxu0 %v6165
    %7088 = vmatprep.subr.bf16.mxu0 %v6158
    %7089 = vmatpush1.bf16.msra.mxu0 %v6157
    %7090 = vmatprep.subr.bf16.mxu0 %v6150
    %7091 = vmatpush1.bf16.msra.mxu0 %v6149
    %7092 = vmatprep.subr.bf16.mxu0 %v6142
    %7093 = vmatpush1.bf16.msra.mxu0 %v6141
    %7094 = vmatprep.subr.bf16.mxu0 %v6262
    %7095 = vmatpush2.bf16.msra.mxu0 %v6261
    %7096 = vmatprep.subr.bf16.mxu0 %v6254
    %7097 = vmatpush2.bf16.msra.mxu0 %v6253
    %7098 = vmatprep.subr.bf16.mxu0 %v6246
    %7099 = vmatpush2.bf16.msra.mxu0 %v6245
    %7100 = vmatprep.subr.bf16.mxu0 %v6238
    %7101 = vmatpush2.bf16.msra.mxu0 %v6237
    %7102 = vmatprep.subr.bf16.mxu0 %v6230
    %7103 = vmatpush2.bf16.msra.mxu0 %v6229
    %7104 = vmatprep.subr.bf16.mxu0 %v6222
    %7105 = vmatpush2.bf16.msra.mxu0 %v6221
    %7106 = vmatprep.subr.bf16.mxu0 %v6214
    %7107 = vmatpush2.bf16.msra.mxu0 %v6213
    %7108 = vmatprep.subr.bf16.mxu0 %v6206
    %7109 = vmatpush2.bf16.msra.mxu0 %v6205
    %7110 = vmatprep.mubr.bf16.mxu0 %v3960
    %7111 = vmatmul.mubr.bf16.gmra.mxu0 %v3959
    %v7112 = vpop.f32.mrf.mxu0
    %v7113 = vadd.f32 %v7072, %v7112
    %v7114 = vpop.f32.mrf.mxu0
    %v7115 = vadd.f32 %v7074, %v7114
    %v7116 = vpop.f32.mrf.mxu0
    %v7117 = vpop.f32.mrf.mxu0
    %7118 = vdwg.mxu0
    %7119 = vmatprep.subr.bf16.mxu0 %v6326
    %7120 = vmatpush1.bf16.msra.mxu0 %v6325
    %7121 = vmatprep.subr.bf16.mxu0 %v6318
    %7122 = vmatpush1.bf16.msra.mxu0 %v6317
    %7123 = vmatprep.subr.bf16.mxu0 %v6310
    %7124 = vmatpush1.bf16.msra.mxu0 %v6309
    %7125 = vmatprep.subr.bf16.mxu0 %v6302
    %7126 = vmatpush1.bf16.msra.mxu0 %v6301
    %7127 = vmatprep.subr.bf16.mxu0 %v6294
    %7128 = vmatpush1.bf16.msra.mxu0 %v6293
    %7129 = vmatprep.subr.bf16.mxu0 %v6286
    %7130 = vmatpush1.bf16.msra.mxu0 %v6285
    %7131 = vmatprep.subr.bf16.mxu0 %v6278
    %7132 = vmatpush1.bf16.msra.mxu0 %v6277
    %7133 = vmatprep.subr.bf16.mxu0 %v6270
    %7134 = vmatpush1.bf16.msra.mxu0 %v6269
    %7135 = vmatprep.subr.bf16.mxu0 %v6390
    %7136 = vmatpush2.bf16.msra.mxu0 %v6389
    %7137 = vmatprep.subr.bf16.mxu0 %v6382
    %7138 = vmatpush2.bf16.msra.mxu0 %v6381
    %7139 = vmatprep.subr.bf16.mxu0 %v6374
    %7140 = vmatpush2.bf16.msra.mxu0 %v6373
    %7141 = vmatprep.subr.bf16.mxu0 %v6366
    %7142 = vmatpush2.bf16.msra.mxu0 %v6365
    %7143 = vmatprep.subr.bf16.mxu0 %v6358
    %7144 = vmatpush2.bf16.msra.mxu0 %v6357
    %7145 = vmatprep.subr.bf16.mxu0 %v6350
    %7146 = vmatpush2.bf16.msra.mxu0 %v6349
    %7147 = vmatprep.subr.bf16.mxu0 %v6342
    %7148 = vmatpush2.bf16.msra.mxu0 %v6341
    %7149 = vmatprep.subr.bf16.mxu0 %v6334
    %7150 = vmatpush2.bf16.msra.mxu0 %v6333
    %7151 = vmatprep.mubr.bf16.mxu0 %v3962
    %7152 = vmatmul.mubr.bf16.gmra.mxu0 %v3961
    %v7153 = vpop.f32.mrf.mxu0
    %v7154 = vadd.f32 %v7113, %v7153
    %v7155 = vpop.f32.mrf.mxu0
    %v7156 = vadd.f32 %v7115, %v7155
    %v7157 = vpop.f32.mrf.mxu0
    %v7158 = vpop.f32.mrf.mxu0
    %7159 = vdwg.mxu0
    %7160 = vmatprep.subr.bf16.mxu0 %v6454
    %7161 = vmatpush1.bf16.msra.mxu0 %v6453
    %7162 = vmatprep.subr.bf16.mxu0 %v6446
    %7163 = vmatpush1.bf16.msra.mxu0 %v6445
    %7164 = vmatprep.subr.bf16.mxu0 %v6438
    %7165 = vmatpush1.bf16.msra.mxu0 %v6437
    %7166 = vmatprep.subr.bf16.mxu0 %v6430
    %7167 = vmatpush1.bf16.msra.mxu0 %v6429
    %7168 = vmatprep.subr.bf16.mxu0 %v6422
    %7169 = vmatpush1.bf16.msra.mxu0 %v6421
    %7170 = vmatprep.subr.bf16.mxu0 %v6414
    %7171 = vmatpush1.bf16.msra.mxu0 %v6413
    %7172 = vmatprep.subr.bf16.mxu0 %v6406
    %7173 = vmatpush1.bf16.msra.mxu0 %v6405
    %7174 = vmatprep.subr.bf16.mxu0 %v6398
    %7175 = vmatpush1.bf16.msra.mxu0 %v6397
    %7176 = vmatprep.subr.bf16.mxu0 %v6518
    %7177 = vmatpush2.bf16.msra.mxu0 %v6517
    %7178 = vmatprep.subr.bf16.mxu0 %v6510
    %7179 = vmatpush2.bf16.msra.mxu0 %v6509
    %7180 = vmatprep.subr.bf16.mxu0 %v6502
    %7181 = vmatpush2.bf16.msra.mxu0 %v6501
    %7182 = vmatprep.subr.bf16.mxu0 %v6494
    %7183 = vmatpush2.bf16.msra.mxu0 %v6493
    %7184 = vmatprep.subr.bf16.mxu0 %v6486
    %7185 = vmatpush2.bf16.msra.mxu0 %v6485
    %7186 = vmatprep.subr.bf16.mxu0 %v6478
    %7187 = vmatpush2.bf16.msra.mxu0 %v6477
    %7188 = vmatprep.subr.bf16.mxu0 %v6470
    %7189 = vmatpush2.bf16.msra.mxu0 %v6469
    %7190 = vmatprep.subr.bf16.mxu0 %v6462
    %7191 = vmatpush2.bf16.msra.mxu0 %v6461
    %7192 = vmatprep.mubr.bf16.mxu0 %v3964
    %7193 = vmatmul.mubr.bf16.gmra.mxu0 %v3963
    %v7194 = vpop.f32.mrf.mxu0
    %v7195 = vadd.f32 %v7154, %v7194
    %v7196 = vpop.f32.mrf.mxu0
    %v7197 = vadd.f32 %v7156, %v7196
    %v7198 = vpop.f32.mrf.mxu0
    %v7199 = vpop.f32.mrf.mxu0
    %7200 = vdwg.mxu0
    %7201 = vmatprep.subr.bf16.mxu0 %v6072
    %7202 = vmatpush1.bf16.msra.mxu0 %v6071
    %7203 = vmatprep.subr.bf16.mxu0 %v6064
    %7204 = vmatpush1.bf16.msra.mxu0 %v6063
    %7205 = vmatprep.subr.bf16.mxu0 %v6056
    %7206 = vmatpush1.bf16.msra.mxu0 %v6055
    %7207 = vmatprep.subr.bf16.mxu0 %v6048
    %7208 = vmatpush1.bf16.msra.mxu0 %v6047
    %7209 = vmatprep.subr.bf16.mxu0 %v6040
    %7210 = vmatpush1.bf16.msra.mxu0 %v6039
    %7211 = vmatprep.subr.bf16.mxu0 %v6032
    %7212 = vmatpush1.bf16.msra.mxu0 %v6031
    %7213 = vmatprep.subr.bf16.mxu0 %v6024
    %7214 = vmatpush1.bf16.msra.mxu0 %v6023
    %7215 = vmatprep.subr.bf16.mxu0 %v6016
    %7216 = vmatpush1.bf16.msra.mxu0 %v6015
    %7217 = vmatprep.subr.bf16.mxu0 %v6136
    %7218 = vmatpush2.bf16.msra.mxu0 %v6135
    %7219 = vmatprep.subr.bf16.mxu0 %v6128
    %7220 = vmatpush2.bf16.msra.mxu0 %v6127
    %7221 = vmatprep.subr.bf16.mxu0 %v6120
    %7222 = vmatpush2.bf16.msra.mxu0 %v6119
    %7223 = vmatprep.subr.bf16.mxu0 %v6112
    %7224 = vmatpush2.bf16.msra.mxu0 %v6111
    %7225 = vmatprep.subr.bf16.mxu0 %v6104
    %7226 = vmatpush2.bf16.msra.mxu0 %v6103
    %7227 = vmatprep.subr.bf16.mxu0 %v6096
    %7228 = vmatpush2.bf16.msra.mxu0 %v6095
    %7229 = vmatprep.subr.bf16.mxu0 %v6088
    %7230 = vmatpush2.bf16.msra.mxu0 %v6087
    %7231 = vmatprep.subr.bf16.mxu0 %v6080
    %7232 = vmatpush2.bf16.msra.mxu0 %v6079
    %7233 = vmatprep.mubr.bf16.mxu0 %v3958
    %7234 = vmatmul.mubr.bf16.gmra.mxu0 %v3957
    %v7235 = vpop.f32.mrf.mxu0
    %v7236 = vadd.f32 0.0, %v7235
    %v7237 = vpop.f32.mrf.mxu0
    %v7238 = vadd.f32 0.0, %v7237
    %v7239 = vpop.f32.mrf.mxu0
    %v7240 = vpop.f32.mrf.mxu0
    %7241 = vdwg.mxu0
    %7242 = vmatprep.subr.bf16.mxu0 %v6200
    %7243 = vmatpush1.bf16.msra.mxu0 %v6199
    %7244 = vmatprep.subr.bf16.mxu0 %v6192
    %7245 = vmatpush1.bf16.msra.mxu0 %v6191
    %7246 = vmatprep.subr.bf16.mxu0 %v6184
    %7247 = vmatpush1.bf16.msra.mxu0 %v6183
    %7248 = vmatprep.subr.bf16.mxu0 %v6176
    %7249 = vmatpush1.bf16.msra.mxu0 %v6175
    %7250 = vmatprep.subr.bf16.mxu0 %v6168
    %7251 = vmatpush1.bf16.msra.mxu0 %v6167
    %7252 = vmatprep.subr.bf16.mxu0 %v6160
    %7253 = vmatpush1.bf16.msra.mxu0 %v6159
    %7254 = vmatprep.subr.bf16.mxu0 %v6152
    %7255 = vmatpush1.bf16.msra.mxu0 %v6151
    %7256 = vmatprep.subr.bf16.mxu0 %v6144
    %7257 = vmatpush1.bf16.msra.mxu0 %v6143
    %7258 = vmatprep.subr.bf16.mxu0 %v6264
    %7259 = vmatpush2.bf16.msra.mxu0 %v6263
    %7260 = vmatprep.subr.bf16.mxu0 %v6256
    %7261 = vmatpush2.bf16.msra.mxu0 %v6255
    %7262 = vmatprep.subr.bf16.mxu0 %v6248
    %7263 = vmatpush2.bf16.msra.mxu0 %v6247
    %7264 = vmatprep.subr.bf16.mxu0 %v6240
    %7265 = vmatpush2.bf16.msra.mxu0 %v6239
    %7266 = vmatprep.subr.bf16.mxu0 %v6232
    %7267 = vmatpush2.bf16.msra.mxu0 %v6231
    %7268 = vmatprep.subr.bf16.mxu0 %v6224
    %7269 = vmatpush2.bf16.msra.mxu0 %v6223
    %7270 = vmatprep.subr.bf16.mxu0 %v6216
    %7271 = vmatpush2.bf16.msra.mxu0 %v6215
    %7272 = vmatprep.subr.bf16.mxu0 %v6208
    %7273 = vmatpush2.bf16.msra.mxu0 %v6207
    %7274 = vmatprep.mubr.bf16.mxu0 %v3960
    %7275 = vmatmul.mubr.bf16.gmra.mxu0 %v3959
    %v7276 = vpop.f32.mrf.mxu0
    %v7277 = vadd.f32 %v7236, %v7276
    %v7278 = vpop.f32.mrf.mxu0
    %v7279 = vadd.f32 %v7238, %v7278
    %v7280 = vpop.f32.mrf.mxu0
    %v7281 = vpop.f32.mrf.mxu0
    %7282 = vdwg.mxu0
    %7283 = vmatprep.subr.bf16.mxu0 %v6328
    %7284 = vmatpush1.bf16.msra.mxu0 %v6327
    %7285 = vmatprep.subr.bf16.mxu0 %v6320
    %7286 = vmatpush1.bf16.msra.mxu0 %v6319
    %7287 = vmatprep.subr.bf16.mxu0 %v6312
    %7288 = vmatpush1.bf16.msra.mxu0 %v6311
    %7289 = vmatprep.subr.bf16.mxu0 %v6304
    %7290 = vmatpush1.bf16.msra.mxu0 %v6303
    %7291 = vmatprep.subr.bf16.mxu0 %v6296
    %7292 = vmatpush1.bf16.msra.mxu0 %v6295
    %7293 = vmatprep.subr.bf16.mxu0 %v6288
    %7294 = vmatpush1.bf16.msra.mxu0 %v6287
    %7295 = vmatprep.subr.bf16.mxu0 %v6280
    %7296 = vmatpush1.bf16.msra.mxu0 %v6279
    %7297 = vmatprep.subr.bf16.mxu0 %v6272
    %7298 = vmatpush1.bf16.msra.mxu0 %v6271
    %7299 = vmatprep.subr.bf16.mxu0 %v6392
    %7300 = vmatpush2.bf16.msra.mxu0 %v6391
    %7301 = vmatprep.subr.bf16.mxu0 %v6384
    %7302 = vmatpush2.bf16.msra.mxu0 %v6383
    %7303 = vmatprep.subr.bf16.mxu0 %v6376
    %7304 = vmatpush2.bf16.msra.mxu0 %v6375
    %7305 = vmatprep.subr.bf16.mxu0 %v6368
    %7306 = vmatpush2.bf16.msra.mxu0 %v6367
    %7307 = vmatprep.subr.bf16.mxu0 %v6360
    %7308 = vmatpush2.bf16.msra.mxu0 %v6359
    %7309 = vmatprep.subr.bf16.mxu0 %v6352
    %7310 = vmatpush2.bf16.msra.mxu0 %v6351
    %7311 = vmatprep.subr.bf16.mxu0 %v6344
    %7312 = vmatpush2.bf16.msra.mxu0 %v6343
    %7313 = vmatprep.subr.bf16.mxu0 %v6336
    %7314 = vmatpush2.bf16.msra.mxu0 %v6335
    %7315 = vmatprep.mubr.bf16.mxu0 %v3962
    %7316 = vmatmul.mubr.bf16.gmra.mxu0 %v3961
    %v7317 = vpop.f32.mrf.mxu0
    %v7318 = vadd.f32 %v7277, %v7317
    %v7319 = vpop.f32.mrf.mxu0
    %v7320 = vadd.f32 %v7279, %v7319
    %v7321 = vpop.f32.mrf.mxu0
    %v7322 = vpop.f32.mrf.mxu0
    %7323 = vdwg.mxu0
    %7324 = vmatprep.subr.bf16.mxu0 %v6456
    %7325 = vmatpush1.bf16.msra.mxu0 %v6455
    %7326 = vmatprep.subr.bf16.mxu0 %v6448
    %7327 = vmatpush1.bf16.msra.mxu0 %v6447
    %7328 = vmatprep.subr.bf16.mxu0 %v6440
    %7329 = vmatpush1.bf16.msra.mxu0 %v6439
    %7330 = vmatprep.subr.bf16.mxu0 %v6432
    %7331 = vmatpush1.bf16.msra.mxu0 %v6431
    %7332 = vmatprep.subr.bf16.mxu0 %v6424
    %7333 = vmatpush1.bf16.msra.mxu0 %v6423
    %7334 = vmatprep.subr.bf16.mxu0 %v6416
    %7335 = vmatpush1.bf16.msra.mxu0 %v6415
    %7336 = vmatprep.subr.bf16.mxu0 %v6408
    %7337 = vmatpush1.bf16.msra.mxu0 %v6407
    %7338 = vmatprep.subr.bf16.mxu0 %v6400
    %7339 = vmatpush1.bf16.msra.mxu0 %v6399
    %7340 = vmatprep.subr.bf16.mxu0 %v6520
    %7341 = vmatpush2.bf16.msra.mxu0 %v6519
    %7342 = vmatprep.subr.bf16.mxu0 %v6512
    %7343 = vmatpush2.bf16.msra.mxu0 %v6511
    %7344 = vmatprep.subr.bf16.mxu0 %v6504
    %7345 = vmatpush2.bf16.msra.mxu0 %v6503
    %7346 = vmatprep.subr.bf16.mxu0 %v6496
    %7347 = vmatpush2.bf16.msra.mxu0 %v6495
    %7348 = vmatprep.subr.bf16.mxu0 %v6488
    %7349 = vmatpush2.bf16.msra.mxu0 %v6487
    %7350 = vmatprep.subr.bf16.mxu0 %v6480
    %7351 = vmatpush2.bf16.msra.mxu0 %v6479
    %7352 = vmatprep.subr.bf16.mxu0 %v6472
    %7353 = vmatpush2.bf16.msra.mxu0 %v6471
    %7354 = vmatprep.subr.bf16.mxu0 %v6464
    %7355 = vmatpush2.bf16.msra.mxu0 %v6463
    %7356 = vmatprep.mubr.bf16.mxu0 %v3964
    %7357 = vmatmul.mubr.bf16.gmra.mxu0 %v3963
    %v7358 = vpop.f32.mrf.mxu0
    %v7359 = vadd.f32 %v7318, %v7358
    %v7360 = vpop.f32.mrf.mxu0
    %v7361 = vadd.f32 %v7320, %v7360
    %v7362 = vpop.f32.mrf.mxu0
    %v7363 = vpop.f32.mrf.mxu0
    %7364 = vdwg.mxu0
    %7365 = vmatprep.subr.bf16.mxu0 %v6074
    %7366 = vmatpush1.bf16.msra.mxu0 %v6073
    %7367 = vmatprep.subr.bf16.mxu0 %v6066
    %7368 = vmatpush1.bf16.msra.mxu0 %v6065
    %7369 = vmatprep.subr.bf16.mxu0 %v6058
    %7370 = vmatpush1.bf16.msra.mxu0 %v6057
    %7371 = vmatprep.subr.bf16.mxu0 %v6050
    %7372 = vmatpush1.bf16.msra.mxu0 %v6049
    %7373 = vmatprep.subr.bf16.mxu0 %v6042
    %7374 = vmatpush1.bf16.msra.mxu0 %v6041
    %7375 = vmatprep.subr.bf16.mxu0 %v6034
    %7376 = vmatpush1.bf16.msra.mxu0 %v6033
    %7377 = vmatprep.subr.bf16.mxu0 %v6026
    %7378 = vmatpush1.bf16.msra.mxu0 %v6025
    %7379 = vmatprep.subr.bf16.mxu0 %v6018
    %7380 = vmatpush1.bf16.msra.mxu0 %v6017
    %7381 = vmatprep.subr.bf16.mxu0 %v6138
    %7382 = vmatpush2.bf16.msra.mxu0 %v6137
    %7383 = vmatprep.subr.bf16.mxu0 %v6130
    %7384 = vmatpush2.bf16.msra.mxu0 %v6129
    %7385 = vmatprep.subr.bf16.mxu0 %v6122
    %7386 = vmatpush2.bf16.msra.mxu0 %v6121
    %7387 = vmatprep.subr.bf16.mxu0 %v6114
    %7388 = vmatpush2.bf16.msra.mxu0 %v6113
    %7389 = vmatprep.subr.bf16.mxu0 %v6106
    %7390 = vmatpush2.bf16.msra.mxu0 %v6105
    %7391 = vmatprep.subr.bf16.mxu0 %v6098
    %7392 = vmatpush2.bf16.msra.mxu0 %v6097
    %7393 = vmatprep.subr.bf16.mxu0 %v6090
    %7394 = vmatpush2.bf16.msra.mxu0 %v6089
    %7395 = vmatprep.subr.bf16.mxu0 %v6082
    %7396 = vmatpush2.bf16.msra.mxu0 %v6081
    %7397 = vmatprep.mubr.bf16.mxu0 %v3958
    %7398 = vmatmul.mubr.bf16.gmra.mxu0 %v3957
    %v7399 = vpop.f32.mrf.mxu0
    %v7400 = vadd.f32 0.0, %v7399
    %v7401 = vpop.f32.mrf.mxu0
    %v7402 = vadd.f32 0.0, %v7401
    %v7403 = vpop.f32.mrf.mxu0
    %v7404 = vpop.f32.mrf.mxu0
    %7405 = vdwg.mxu0
    %7406 = vmatprep.subr.bf16.mxu0 %v6202
    %7407 = vmatpush1.bf16.msra.mxu0 %v6201
    %7408 = vmatprep.subr.bf16.mxu0 %v6194
    %7409 = vmatpush1.bf16.msra.mxu0 %v6193
    %7410 = vmatprep.subr.bf16.mxu0 %v6186
    %7411 = vmatpush1.bf16.msra.mxu0 %v6185
    %7412 = vmatprep.subr.bf16.mxu0 %v6178
    %7413 = vmatpush1.bf16.msra.mxu0 %v6177
    %7414 = vmatprep.subr.bf16.mxu0 %v6170
    %7415 = vmatpush1.bf16.msra.mxu0 %v6169
    %7416 = vmatprep.subr.bf16.mxu0 %v6162
    %7417 = vmatpush1.bf16.msra.mxu0 %v6161
    %7418 = vmatprep.subr.bf16.mxu0 %v6154
    %7419 = vmatpush1.bf16.msra.mxu0 %v6153
    %7420 = vmatprep.subr.bf16.mxu0 %v6146
    %7421 = vmatpush1.bf16.msra.mxu0 %v6145
    %7422 = vmatprep.subr.bf16.mxu0 %v6266
    %7423 = vmatpush2.bf16.msra.mxu0 %v6265
    %7424 = vmatprep.subr.bf16.mxu0 %v6258
    %7425 = vmatpush2.bf16.msra.mxu0 %v6257
    %7426 = vmatprep.subr.bf16.mxu0 %v6250
    %7427 = vmatpush2.bf16.msra.mxu0 %v6249
    %7428 = vmatprep.subr.bf16.mxu0 %v6242
    %7429 = vmatpush2.bf16.msra.mxu0 %v6241
    %7430 = vmatprep.subr.bf16.mxu0 %v6234
    %7431 = vmatpush2.bf16.msra.mxu0 %v6233
    %7432 = vmatprep.subr.bf16.mxu0 %v6226
    %7433 = vmatpush2.bf16.msra.mxu0 %v6225
    %7434 = vmatprep.subr.bf16.mxu0 %v6218
    %7435 = vmatpush2.bf16.msra.mxu0 %v6217
    %7436 = vmatprep.subr.bf16.mxu0 %v6210
    %7437 = vmatpush2.bf16.msra.mxu0 %v6209
    %7438 = vmatprep.mubr.bf16.mxu0 %v3960
    %7439 = vmatmul.mubr.bf16.gmra.mxu0 %v3959
    %v7440 = vpop.f32.mrf.mxu0
    %v7441 = vadd.f32 %v7400, %v7440
    %v7442 = vpop.f32.mrf.mxu0
    %v7443 = vadd.f32 %v7402, %v7442
    %v7444 = vpop.f32.mrf.mxu0
    %v7445 = vpop.f32.mrf.mxu0
    %7446 = vdwg.mxu0
    %7447 = vmatprep.subr.bf16.mxu0 %v6330
    %7448 = vmatpush1.bf16.msra.mxu0 %v6329
    %7449 = vmatprep.subr.bf16.mxu0 %v6322
    %7450 = vmatpush1.bf16.msra.mxu0 %v6321
    %7451 = vmatprep.subr.bf16.mxu0 %v6314
    %7452 = vmatpush1.bf16.msra.mxu0 %v6313
    %7453 = vmatprep.subr.bf16.mxu0 %v6306
    %7454 = vmatpush1.bf16.msra.mxu0 %v6305
    %7455 = vmatprep.subr.bf16.mxu0 %v6298
    %7456 = vmatpush1.bf16.msra.mxu0 %v6297
    %7457 = vmatprep.subr.bf16.mxu0 %v6290
    %7458 = vmatpush1.bf16.msra.mxu0 %v6289
    %7459 = vmatprep.subr.bf16.mxu0 %v6282
    %7460 = vmatpush1.bf16.msra.mxu0 %v6281
    %7461 = vmatprep.subr.bf16.mxu0 %v6274
    %7462 = vmatpush1.bf16.msra.mxu0 %v6273
    %7463 = vmatprep.subr.bf16.mxu0 %v6394
    %7464 = vmatpush2.bf16.msra.mxu0 %v6393
    %7465 = vmatprep.subr.bf16.mxu0 %v6386
    %7466 = vmatpush2.bf16.msra.mxu0 %v6385
    %7467 = vmatprep.subr.bf16.mxu0 %v6378
    %7468 = vmatpush2.bf16.msra.mxu0 %v6377
    %7469 = vmatprep.subr.bf16.mxu0 %v6370
    %7470 = vmatpush2.bf16.msra.mxu0 %v6369
    %7471 = vmatprep.subr.bf16.mxu0 %v6362
    %7472 = vmatpush2.bf16.msra.mxu0 %v6361
    %7473 = vmatprep.subr.bf16.mxu0 %v6354
    %7474 = vmatpush2.bf16.msra.mxu0 %v6353
    %7475 = vmatprep.subr.bf16.mxu0 %v6346
    %7476 = vmatpush2.bf16.msra.mxu0 %v6345
    %7477 = vmatprep.subr.bf16.mxu0 %v6338
    %7478 = vmatpush2.bf16.msra.mxu0 %v6337
    %7479 = vmatprep.mubr.bf16.mxu0 %v3962
    %7480 = vmatmul.mubr.bf16.gmra.mxu0 %v3961
    %v7481 = vpop.f32.mrf.mxu0
    %v7482 = vadd.f32 %v7441, %v7481
    %v7483 = vpop.f32.mrf.mxu0
    %v7484 = vadd.f32 %v7443, %v7483
    %v7485 = vpop.f32.mrf.mxu0
    %v7486 = vpop.f32.mrf.mxu0
    %7487 = vdwg.mxu0
    %7488 = vmatprep.subr.bf16.mxu0 %v6458
    %7489 = vmatpush1.bf16.msra.mxu0 %v6457
    %7490 = vmatprep.subr.bf16.mxu0 %v6450
    %7491 = vmatpush1.bf16.msra.mxu0 %v6449
    %7492 = vmatprep.subr.bf16.mxu0 %v6442
    %7493 = vmatpush1.bf16.msra.mxu0 %v6441
    %7494 = vmatprep.subr.bf16.mxu0 %v6434
    %7495 = vmatpush1.bf16.msra.mxu0 %v6433
    %7496 = vmatprep.subr.bf16.mxu0 %v6426
    %7497 = vmatpush1.bf16.msra.mxu0 %v6425
    %7498 = vmatprep.subr.bf16.mxu0 %v6418
    %7499 = vmatpush1.bf16.msra.mxu0 %v6417
    %7500 = vmatprep.subr.bf16.mxu0 %v6410
    %7501 = vmatpush1.bf16.msra.mxu0 %v6409
    %7502 = vmatprep.subr.bf16.mxu0 %v6402
    %7503 = vmatpush1.bf16.msra.mxu0 %v6401
    %7504 = vmatprep.subr.bf16.mxu0 %v6522
    %7505 = vmatpush2.bf16.msra.mxu0 %v6521
    %7506 = vmatprep.subr.bf16.mxu0 %v6514
    %7507 = vmatpush2.bf16.msra.mxu0 %v6513
    %7508 = vmatprep.subr.bf16.mxu0 %v6506
    %7509 = vmatpush2.bf16.msra.mxu0 %v6505
    %7510 = vmatprep.subr.bf16.mxu0 %v6498
    %7511 = vmatpush2.bf16.msra.mxu0 %v6497
    %7512 = vmatprep.subr.bf16.mxu0 %v6490
    %7513 = vmatpush2.bf16.msra.mxu0 %v6489
    %7514 = vmatprep.subr.bf16.mxu0 %v6482
    %7515 = vmatpush2.bf16.msra.mxu0 %v6481
    %7516 = vmatprep.subr.bf16.mxu0 %v6474
    %7517 = vmatpush2.bf16.msra.mxu0 %v6473
    %7518 = vmatprep.subr.bf16.mxu0 %v6466
    %7519 = vmatpush2.bf16.msra.mxu0 %v6465
    %7520 = vmatprep.mubr.bf16.mxu0 %v3964
    %7521 = vmatmul.mubr.bf16.gmra.mxu0 %v3963
    %v7522 = vpop.f32.mrf.mxu0
    %v7523 = vadd.f32 %v7482, %v7522
    %v7524 = vpop.f32.mrf.mxu0
    %v7525 = vadd.f32 %v7484, %v7524
    %v7526 = vpop.f32.mrf.mxu0
    %v7527 = vpop.f32.mrf.mxu0
    %7528 = vdwg.mxu0
    %7529 = vmatprep.subr.bf16.mxu0 %v6076
    %7530 = vmatpush1.bf16.msra.mxu0 %v6075
    %7531 = vmatprep.subr.bf16.mxu0 %v6068
    %7532 = vmatpush1.bf16.msra.mxu0 %v6067
    %7533 = vmatprep.subr.bf16.mxu0 %v6060
    %7534 = vmatpush1.bf16.msra.mxu0 %v6059
    %7535 = vmatprep.subr.bf16.mxu0 %v6052
    %7536 = vmatpush1.bf16.msra.mxu0 %v6051
    %7537 = vmatprep.subr.bf16.mxu0 %v6044
    %7538 = vmatpush1.bf16.msra.mxu0 %v6043
    %7539 = vmatprep.subr.bf16.mxu0 %v6036
    %7540 = vmatpush1.bf16.msra.mxu0 %v6035
    %7541 = vmatprep.subr.bf16.mxu0 %v6028
    %7542 = vmatpush1.bf16.msra.mxu0 %v6027
    %7543 = vmatprep.subr.bf16.mxu0 %v6020
    %7544 = vmatpush1.bf16.msra.mxu0 %v6019
    %7545 = vmatprep.subr.bf16.mxu0 %v6140
    %7546 = vmatpush2.bf16.msra.mxu0 %v6139
    %7547 = vmatprep.subr.bf16.mxu0 %v6132
    %7548 = vmatpush2.bf16.msra.mxu0 %v6131
    %7549 = vmatprep.subr.bf16.mxu0 %v6124
    %7550 = vmatpush2.bf16.msra.mxu0 %v6123
    %7551 = vmatprep.subr.bf16.mxu0 %v6116
    %7552 = vmatpush2.bf16.msra.mxu0 %v6115
    %7553 = vmatprep.subr.bf16.mxu0 %v6108
    %7554 = vmatpush2.bf16.msra.mxu0 %v6107
    %7555 = vmatprep.subr.bf16.mxu0 %v6100
    %7556 = vmatpush2.bf16.msra.mxu0 %v6099
    %7557 = vmatprep.subr.bf16.mxu0 %v6092
    %7558 = vmatpush2.bf16.msra.mxu0 %v6091
    %7559 = vmatprep.subr.bf16.mxu0 %v6084
    %7560 = vmatpush2.bf16.msra.mxu0 %v6083
    %7561 = vmatprep.mubr.bf16.mxu0 %v3958
    %7562 = vmatmul.mubr.bf16.gmra.mxu0 %v3957
    %v7563 = vpop.f32.mrf.mxu0
    %v7564 = vadd.f32 0.0, %v7563
    %v7565 = vpop.f32.mrf.mxu0
    %v7566 = vadd.f32 0.0, %v7565
    %v7567 = vpop.f32.mrf.mxu0
    %v7568 = vpop.f32.mrf.mxu0
    %7569 = vdwg.mxu0
    %7570 = vmatprep.subr.bf16.mxu0 %v6204
    %7571 = vmatpush1.bf16.msra.mxu0 %v6203
    %7572 = vmatprep.subr.bf16.mxu0 %v6196
    %7573 = vmatpush1.bf16.msra.mxu0 %v6195
    %7574 = vmatprep.subr.bf16.mxu0 %v6188
    %7575 = vmatpush1.bf16.msra.mxu0 %v6187
    %7576 = vmatprep.subr.bf16.mxu0 %v6180
    %7577 = vmatpush1.bf16.msra.mxu0 %v6179
    %7578 = vmatprep.subr.bf16.mxu0 %v6172
    %7579 = vmatpush1.bf16.msra.mxu0 %v6171
    %7580 = vmatprep.subr.bf16.mxu0 %v6164
    %7581 = vmatpush1.bf16.msra.mxu0 %v6163
    %7582 = vmatprep.subr.bf16.mxu0 %v6156
    %7583 = vmatpush1.bf16.msra.mxu0 %v6155
    %7584 = vmatprep.subr.bf16.mxu0 %v6148
    %7585 = vmatpush1.bf16.msra.mxu0 %v6147
    %7586 = vmatprep.subr.bf16.mxu0 %v6268
    %7587 = vmatpush2.bf16.msra.mxu0 %v6267
    %7588 = vmatprep.subr.bf16.mxu0 %v6260
    %7589 = vmatpush2.bf16.msra.mxu0 %v6259
    %7590 = vmatprep.subr.bf16.mxu0 %v6252
    %7591 = vmatpush2.bf16.msra.mxu0 %v6251
    %7592 = vmatprep.subr.bf16.mxu0 %v6244
    %7593 = vmatpush2.bf16.msra.mxu0 %v6243
    %7594 = vmatprep.subr.bf16.mxu0 %v6236
    %7595 = vmatpush2.bf16.msra.mxu0 %v6235
    %7596 = vmatprep.subr.bf16.mxu0 %v6228
    %7597 = vmatpush2.bf16.msra.mxu0 %v6227
    %7598 = vmatprep.subr.bf16.mxu0 %v6220
    %7599 = vmatpush2.bf16.msra.mxu0 %v6219
    %7600 = vmatprep.subr.bf16.mxu0 %v6212
    %7601 = vmatpush2.bf16.msra.mxu0 %v6211
    %7602 = vmatprep.mubr.bf16.mxu0 %v3960
    %7603 = vmatmul.mubr.bf16.gmra.mxu0 %v3959
    %v7604 = vpop.f32.mrf.mxu0
    %v7605 = vadd.f32 %v7564, %v7604
    %v7606 = vpop.f32.mrf.mxu0
    %v7607 = vadd.f32 %v7566, %v7606
    %v7608 = vpop.f32.mrf.mxu0
    %v7609 = vpop.f32.mrf.mxu0
    %7610 = vdwg.mxu0
    %7611 = vmatprep.subr.bf16.mxu0 %v6332
    %7612 = vmatpush1.bf16.msra.mxu0 %v6331
    %7613 = vmatprep.subr.bf16.mxu0 %v6324
    %7614 = vmatpush1.bf16.msra.mxu0 %v6323
    %7615 = vmatprep.subr.bf16.mxu0 %v6316
    %7616 = vmatpush1.bf16.msra.mxu0 %v6315
    %7617 = vmatprep.subr.bf16.mxu0 %v6308
    %7618 = vmatpush1.bf16.msra.mxu0 %v6307
    %7619 = vmatprep.subr.bf16.mxu0 %v6300
    %7620 = vmatpush1.bf16.msra.mxu0 %v6299
    %7621 = vmatprep.subr.bf16.mxu0 %v6292
    %7622 = vmatpush1.bf16.msra.mxu0 %v6291
    %7623 = vmatprep.subr.bf16.mxu0 %v6284
    %7624 = vmatpush1.bf16.msra.mxu0 %v6283
    %7625 = vmatprep.subr.bf16.mxu0 %v6276
    %7626 = vmatpush1.bf16.msra.mxu0 %v6275
    %7627 = vmatprep.subr.bf16.mxu0 %v6396
    %7628 = vmatpush2.bf16.msra.mxu0 %v6395
    %7629 = vmatprep.subr.bf16.mxu0 %v6388
    %7630 = vmatpush2.bf16.msra.mxu0 %v6387
    %7631 = vmatprep.subr.bf16.mxu0 %v6380
    %7632 = vmatpush2.bf16.msra.mxu0 %v6379
    %7633 = vmatprep.subr.bf16.mxu0 %v6372
    %7634 = vmatpush2.bf16.msra.mxu0 %v6371
    %7635 = vmatprep.subr.bf16.mxu0 %v6364
    %7636 = vmatpush2.bf16.msra.mxu0 %v6363
    %7637 = vmatprep.subr.bf16.mxu0 %v6356
    %7638 = vmatpush2.bf16.msra.mxu0 %v6355
    %7639 = vmatprep.subr.bf16.mxu0 %v6348
    %7640 = vmatpush2.bf16.msra.mxu0 %v6347
    %7641 = vmatprep.subr.bf16.mxu0 %v6340
    %7642 = vmatpush2.bf16.msra.mxu0 %v6339
    %7643 = vmatprep.mubr.bf16.mxu0 %v3962
    %7644 = vmatmul.mubr.bf16.gmra.mxu0 %v3961
    %v7645 = vpop.f32.mrf.mxu0
    %v7646 = vadd.f32 %v7605, %v7645
    %v7647 = vpop.f32.mrf.mxu0
    %v7648 = vadd.f32 %v7607, %v7647
    %v7649 = vpop.f32.mrf.mxu0
    %v7650 = vpop.f32.mrf.mxu0
    %7651 = vdwg.mxu0
    %7652 = vmatprep.subr.bf16.mxu0 %v6460
    %7653 = vmatpush1.bf16.msra.mxu0 %v6459
    %7654 = vmatprep.subr.bf16.mxu0 %v6452
    %7655 = vmatpush1.bf16.msra.mxu0 %v6451
    %7656 = vmatprep.subr.bf16.mxu0 %v6444
    %7657 = vmatpush1.bf16.msra.mxu0 %v6443
    %7658 = vmatprep.subr.bf16.mxu0 %v6436
    %7659 = vmatpush1.bf16.msra.mxu0 %v6435
    %7660 = vmatprep.subr.bf16.mxu0 %v6428
    %7661 = vmatpush1.bf16.msra.mxu0 %v6427
    %7662 = vmatprep.subr.bf16.mxu0 %v6420
    %7663 = vmatpush1.bf16.msra.mxu0 %v6419
    %7664 = vmatprep.subr.bf16.mxu0 %v6412
    %7665 = vmatpush1.bf16.msra.mxu0 %v6411
    %7666 = vmatprep.subr.bf16.mxu0 %v6404
    %7667 = vmatpush1.bf16.msra.mxu0 %v6403
    %7668 = vmatprep.subr.bf16.mxu0 %v6524
    %7669 = vmatpush2.bf16.msra.mxu0 %v6523
    %7670 = vmatprep.subr.bf16.mxu0 %v6516
    %7671 = vmatpush2.bf16.msra.mxu0 %v6515
    %7672 = vmatprep.subr.bf16.mxu0 %v6508
    %7673 = vmatpush2.bf16.msra.mxu0 %v6507
    %7674 = vmatprep.subr.bf16.mxu0 %v6500
    %7675 = vmatpush2.bf16.msra.mxu0 %v6499
    %7676 = vmatprep.subr.bf16.mxu0 %v6492
    %7677 = vmatpush2.bf16.msra.mxu0 %v6491
    %7678 = vmatprep.subr.bf16.mxu0 %v6484
    %7679 = vmatpush2.bf16.msra.mxu0 %v6483
    %7680 = vmatprep.subr.bf16.mxu0 %v6476
    %7681 = vmatpush2.bf16.msra.mxu0 %v6475
    %7682 = vmatprep.subr.bf16.mxu0 %v6468
    %7683 = vmatpush2.bf16.msra.mxu0 %v6467
    %7684 = vmatprep.mubr.bf16.mxu0 %v3964
    %7685 = vmatmul.mubr.bf16.gmra.mxu0 %v3963
    %v7686 = vpop.f32.mrf.mxu0
    %v7687 = vadd.f32 %v7646, %v7686
    %v7688 = vpop.f32.mrf.mxu0
    %v7689 = vadd.f32 %v7648, %v7688
    %v7690 = vpop.f32.mrf.mxu0
    %v7691 = vpop.f32.mrf.mxu0
    %7692 = vdwg.mxu0
    %v7693 = vrcp.pop %v3956
    %v7694 = vmul.f32 %v7195, %v7693
    %v7695 = vmul.f32 %v7197, %v7693
    %v7696 = vmul.f32 %v7359, %v7693
    %v7697 = vmul.f32 %v7361, %v7693
    %v7698 = vmul.f32 %v7523, %v7693
    %v7699 = vmul.f32 %v7525, %v7693
    %v7700 = vmul.f32 %v7687, %v7693
    %v7701 = vmul.f32 %v7689, %v7693
    %v7710 = vcombine.low %v7694, %v7695
    %v7711 = vcombine.low %v7696, %v7697
    %v7712 = vcombine.low %v7698, %v7699
    %v7713 = vcombine.low %v7700, %v7701
    %v7715 = vunpack.c.l.s4 1966171168
    %v7716 = vunpack.c.0.s8 %v7715
    %v7717 = vlaneseq
    %v7718 = vshrl.u32 %v7717, 7
    %v7719 = vsub.s32 %v7716, %v7718
    %v7720 = vrot.slane %v7710, %v7719
    %v7722 = vunpack.c.l.s4 1966171168
    %v7723 = vunpack.c.0.s8 %v7722
    %v7724 = vlaneseq
    %v7725 = vshrl.u32 %v7724, 7
    %v7726 = vsub.s32 %v7723, %v7725
    %v7727 = vrot.slane %v7711, %v7726
    %v7729 = vunpack.c.l.s4 1966171168
    %v7730 = vunpack.c.0.s8 %v7729
    %v7731 = vlaneseq
    %v7732 = vshrl.u32 %v7731, 7
    %v7733 = vsub.s32 %v7730, %v7732
    %v7734 = vrot.slane %v7712, %v7733
    %v7736 = vunpack.c.l.s4 1966171168
    %v7737 = vunpack.c.0.s8 %v7736
    %v7738 = vlaneseq
    %v7739 = vshrl.u32 %v7738, 7
    %v7740 = vsub.s32 %v7737, %v7739
    %v7741 = vrot.slane %v7713, %v7740
    %v7742 = vcombine.low %v7720, %v7727
    %v7743 = vcombine.low %v7734, %v7741
    %v7745 = vunpack.c.l.s4 1966171168
    %v7746 = vunpack.c.0.s8 %v7745
    %v7747 = vlaneseq
    %v7748 = vshrl.u32 %v7747, 7
    %v7749 = vsub.s32 %v7746, %v7748
    %v7750 = vrot.slane %v7742, %v7749
    %v7752 = vunpack.c.l.s4 1966171168
    %v7753 = vunpack.c.0.s8 %v7752
    %v7754 = vlaneseq
    %v7755 = vshrl.u32 %v7754, 7
    %v7756 = vsub.s32 %v7753, %v7755
    %v7757 = vrot.slane %v7743, %v7756
    %v7758 = vcombine.low %v7750, %v7757
    %7760 = vst [vmem:[#allocation10] sm:$0xff] %v7758
    // Predicated region
    $region34: #{tpu_custom_call.1} parent=1 // pred_check
      _
    $region35: #{tpu_custom_call.1} parent=1 // pred_check_branch
      %7762 = sbr.rel (0) target = $region37
    $region36: #{tpu_custom_call.1} parent=1 // pred_region
      %s7764 = ssub.s32 128, 128
      %7765 = vsyncadd [#allocation4], %s7764
      %s7767 = sshll.u32 [#allocation10], 4
      %s7768 = int_to_ptr.vmem [resolvable:$true] %s7767
      %7770 = dma.vmem_to_hbm [thread:$0]  %s7768, 128, %s4, [#allocation4]
    $region37: #{tpu_custom_call.1} parent=1 // pred_fallthru
      _
    // Predicated region
    $region38: #{tpu_custom_call.1} parent=1 // pred_check
      _
    $region39: #{tpu_custom_call.1} parent=1 // pred_check_branch
      %7772 = sbr.rel (0) target = $region41
    $region40: #{tpu_custom_call.1} parent=1 // pred_region
      %7773 = dma.done [#allocation4], 128
    $region41: #{tpu_custom_call.1} parent=1 // pred_fallthru
      _
    %7774 = vsyncpa [#allocation3], 1
    %7775 = vsyncpa [#allocation6], 1
    %7776 = vsyncpa [#allocation9], 1
    %7777 = vsyncpa [#allocation4], 1

</llo_original>
